<compile_context>
chip_gen: v7x
topology: tpu7x:2x2x1
jax: 0.10.0
libtpu: 0.0.40
codegen_flags: <defaults>
</compile_context>

<pallas_src>
import functools
import math

import jax
import jax.numpy as jnp
from jax.experimental import pallas as pl
from jax.experimental.pallas import tpu as pltpu

NEG_INF = -10000000000.0


# ----------------------------------------------------------------------------
# Fully fused decoder kernel: one grid step = one (batch element, layer).
# ----------------------------------------------------------------------------
def _decoder_kernel(
    trg_ref, src_ref, qm_ref, km_ref,
    ft_w_ref, ft_b_ref,
    sa_wqkv_ref, sa_bqkv_ref, sa_wo_ref, sa_bo_ref,
    ea_wq_ref, ea_bq_ref, ea_wkv_ref, ea_bkv_ref, ea_wo_ref, ea_bo_ref,
    ln1_g_ref, ln1_b_ref, ln2_g_ref, ln2_b_ref, ln3_g_ref, ln3_b_ref,
    pf_w1_ref, pf_b1_ref, pf_w2_ref, pf_b2_ref,
    ow1_ref, ob1_ref, ow2_ref, ob2_ref, ow3_ref, ob3_ref, ow4_ref, ob4_ref,
    out_ref,
    x_scr,
    *, n_heads, eps,
):
    layer = pl.program_id(1)
    n_layers = pl.num_programs(1)
    T, H = x_scr.shape
    Dh = H // n_heads
    inv_scale = 1.0 / math.sqrt(Dh)

    # ---- first layer step for this batch element: initial `ft` projection ----
    @pl.when(layer == 0)
    def _():
        x0 = jnp.dot(trg_ref[...], ft_w_ref[...],
                     preferred_element_type=jnp.float32) + ft_b_ref[...]
        x_scr[...] = x0

    x = x_scr[...]          # (T, H)  VMEM-resident activation carried across layers
    src = src_ref[...]      # (S, H)
    qmask = qm_ref[...]     # (T, 1)  query-position mask (== trg_mask[b, 0, :, :])
    kmask = km_ref[...]     # (1, S)  key-position mask   (== cross_mask[b, 0, 0, :])
    # Hoisted boolean masks (computed once, reused by every head).
    q_dead = qmask == 0.0   # (T, 1)
    k_dead = kmask == 0.0   # (1, S)

    def _softmax_rows(e):
        m = jnp.max(e, axis=-1, keepdims=True)
        p = jnp.exp(e - m)
        return p * pl.reciprocal(jnp.sum(p, axis=-1, keepdims=True), approx=True)

    def _mha(q, k, v, dead_mask, wo_ref_, bo_ref_):
        # q: (Tq, H), k/v: (Tk, H); per-head attention, concat heads, out proj.
        outs = []
        for h in range(n_heads):
            sl = slice(h * Dh, (h + 1) * Dh)
            e = jnp.einsum("qd,kd->qk", q[:, sl], k[:, sl],
                           preferred_element_type=jnp.float32) * inv_scale
            e = jnp.where(dead_mask, NEG_INF, e)   # == torch masked_fill
            a = _softmax_rows(e)
            outs.append(jnp.einsum("qk,kd->qd", a, v[:, sl],
                                   preferred_element_type=jnp.float32))
        o = jnp.concatenate(outs, axis=-1)                       # (Tq, H)
        return jnp.dot(o, wo_ref_[...],
                       preferred_element_type=jnp.float32) + bo_ref_[...]

    def _ln_res(xa, ya, g_ref, b_ref):
        z = xa + ya
        mean = jnp.mean(z, axis=-1, keepdims=True)
        d = z - mean
        var = jnp.sum(d * d, axis=-1, keepdims=True) / (H - 1)   # unbiased (torch.std)
        return g_ref[...] * (d / (jnp.sqrt(var) + eps)) + b_ref[...]

    # ---- self attention (fused QKV projection: one [H, 3H] matmul) ----
    qkv = jnp.dot(x, sa_wqkv_ref[...],
                  preferred_element_type=jnp.float32) + sa_bqkv_ref[...]
    sa = _mha(qkv[:, :H], qkv[:, H:2 * H], qkv[:, 2 * H:],
              q_dead, sa_wo_ref, sa_bo_ref)
    x = _ln_res(x, sa, ln1_g_ref, ln1_b_ref)

    # ---- cross attention (Q from trg, fused KV projection from src) ----
    q = jnp.dot(x, ea_wq_ref[...],
                preferred_element_type=jnp.float32) + ea_bq_ref[...]
    kv = jnp.dot(src, ea_wkv_ref[...],
                 preferred_element_type=jnp.float32) + ea_bkv_ref[...]
    ea = _mha(q, kv[:, :H], kv[:, H:], k_dead, ea_wo_ref, ea_bo_ref)
    x = _ln_res(x, ea, ln2_g_ref, ln2_b_ref)

    # ---- position-wise feed-forward (Conv1d k=1 == dense) ----
    h1 = jnp.maximum(
        jnp.dot(x, pf_w1_ref[...],
                preferred_element_type=jnp.float32) + pf_b1_ref[...], 0.0)
    ff = jnp.dot(h1, pf_w2_ref[...],
                 preferred_element_type=jnp.float32) + pf_b2_ref[...]
    x = _ln_res(x, ff, ln3_g_ref, ln3_b_ref)

    x_scr[...] = x

    # ---- last layer step: masked mean pooling + fused 4-layer MLP head ----
    @pl.when(layer == n_layers - 1)
    def _():
        num = jnp.sum(x * qmask, axis=0, keepdims=True)          # (1, H)
        den = jnp.sum(qmask, axis=0, keepdims=True)              # (1, 1)
        pooled = num / den
        y = jnp.maximum(jnp.dot(pooled, ow1_ref[...],
                                preferred_element_type=jnp.float32) + ob1_ref[...], 0.0)
        y = jnp.maximum(jnp.dot(y, ow2_ref[...],
                                preferred_element_type=jnp.float32) + ob2_ref[...], 0.0)
        y = jnp.maximum(jnp.dot(y, ow3_ref[...],
                                preferred_element_type=jnp.float32) + ob3_ref[...], 0.0)
        y = jnp.dot(y, ow4_ref[...],
                    preferred_element_type=jnp.float32) + ob4_ref[...]       # (1, 1)
        out_ref[...] = y


# ----------------------------------------------------------------------------
# Wrapper: single pallas_call for the whole forward pass.
# ----------------------------------------------------------------------------
def decoder_forward(params, trg, src, trg_mask, cross_attn_mask, n_heads):
    B, T, H = trg.shape
    S = src.shape[1]
    L = params["sa_wqkv"].shape[0]
    PF = params["pf_w1"].shape[-1]
    H3 = 3 * H

    # Per-position masks only; broadcasting to [T,T]/[T,S] happens in-kernel.
    qmask = trg_mask[:, 0].astype(jnp.float32)          # [B, T, 1] (query rows)
    kmask = cross_attn_mask[:, 0].astype(jnp.float32)   # [B, 1, S] (key cols)

    b_map = lambda b, l: (b, 0, 0)   # per-batch blocked (batch dim squeezed)
    l_map = lambda b, l: (l, 0, 0)   # per-layer blocked (layer dim squeezed)
    g_map = lambda b, l: (0, 0)      # whole (small) array, fetched once

    def bspec(tail):
        return pl.BlockSpec((None,) + tail, b_map)

    def lspec(tail):
        return pl.BlockSpec((None,) + tail, l_map)

    def gspec(shape):
        return pl.BlockSpec(shape, g_map)

    in_specs = [
        bspec((T, H)), bspec((S, H)), bspec((T, 1)), bspec((1, S)),
        gspec((H, H)), gspec((1, H)),
        lspec((H, H3)), lspec((1, H3)), lspec((H, H)), lspec((1, H)),
        lspec((H, H)), lspec((1, H)), lspec((H, 2 * H)), lspec((1, 2 * H)),
        lspec((H, H)), lspec((1, H)),
        lspec((1, H)), lspec((1, H)), lspec((1, H)),
        lspec((1, H)), lspec((1, H)), lspec((1, H)),
        lspec((H, PF)), lspec((1, PF)), lspec((PF, H)), lspec((1, H)),
        gspec((H, 256)), gspec((1, 256)), gspec((256, 64)), gspec((1, 64)),
        gspec((64, 32)), gspec((1, 32)), gspec((32, 1)), gspec((1, 1)),
    ]

    # Advisory cost estimate so XLA schedules the custom call sensibly.
    flops = int(
        B * L * (2 * T * H * H3 + 6 * T * H * H + 4 * S * H * H
                 + 4 * T * T * H + 4 * T * S * H + 4 * T * H * PF)
        + B * (2 * T * H * H + 2 * (H * 256 + 256 * 64 + 64 * 32 + 32)))
    transcendentals = int(B * L * n_heads * (T * T + T * S))
    bytes_accessed = int(sum(int(v.size) for v in params.values()) * 4 * B
                         + (trg.size + src.size) * 4 + B * 4)

    return pl.pallas_call(
        functools.partial(_decoder_kernel, n_heads=n_heads, eps=1e-12),
        out_shape=jax.ShapeDtypeStruct((B, 1, 1), jnp.float32),
        grid=(B, L),
        in_specs=in_specs,
        out_specs=pl.BlockSpec((None, 1, 1), b_map),
        scratch_shapes=[pltpu.VMEM((T, H), jnp.float32)],
        compiler_params=pltpu.CompilerParams(
            dimension_semantics=("parallel", "arbitrary")),
        cost_estimate=pl.CostEstimate(flops=flops,
                                      transcendentals=transcendentals,
                                      bytes_accessed=bytes_accessed),
    )(
        trg, src, qmask, kmask,
        params["ft_w"], params["ft_b"],
        params["sa_wqkv"], params["sa_bqkv"], params["sa_wo"], params["sa_bo"],
        params["ea_wq"], params["ea_bq"], params["ea_wkv"], params["ea_bkv"],
        params["ea_wo"], params["ea_bo"],
        params["ln1_g"], params["ln1_b"], params["ln2_g"], params["ln2_b"],
        params["ln3_g"], params["ln3_b"],
        params["pf_w1"], params["pf_b1"], params["pf_w2"], params["pf_b2"],
        params["out_w1"], params["out_b1"], params["out_w2"], params["out_b2"],
        params["out_w3"], params["out_b3"], params["out_w4"], params["out_b4"],
    )


# ----------------------------------------------------------------------------
# Pure-JAX reference (same math, no Pallas) for a correctness check.
# ----------------------------------------------------------------------------
def decoder_reference(params, trg, src, trg_mask, cross_mask, n_heads):
    B, T, H = trg.shape
    L = params["sa_wqkv"].shape[0]
    Dh = H // n_heads
    scale = math.sqrt(Dh)
    eps = 1e-12

    def ln(z, g, b):
        mean = z.mean(-1, keepdims=True)
        d = z - mean
        var = (d * d).sum(-1, keepdims=True) / (H - 1)
        return g * (d / (jnp.sqrt(var) + eps)) + b

    def mha(q, k, v, mask, wo, bo):
        qh = q.reshape(B, -1, n_heads, Dh).transpose(0, 2, 1, 3)
        kh = k.reshape(B, -1, n_heads, Dh).transpose(0, 2, 1, 3)
        vh = v.reshape(B, -1, n_heads, Dh).transpose(0, 2, 1, 3)
        e = jnp.einsum("bhqd,bhkd->bhqk", qh, kh) / scale
        e = jnp.where(mask == 0, NEG_INF, e)
        a = jax.nn.softmax(e, axis=-1)
        o = jnp.einsum("bhqk,bhkd->bhqd", a, vh).transpose(0, 2, 1, 3)
        o = o.reshape(B, -1, H)
        return o @ wo + bo

    x = trg @ params["ft_w"] + params["ft_b"]
    for l in range(L):
        qkv = x @ params["sa_wqkv"][l] + params["sa_bqkv"][l]
        sa = mha(qkv[..., :H], qkv[..., H:2 * H], qkv[..., 2 * H:], trg_mask,
                 params["sa_wo"][l], params["sa_bo"][l])
        x = ln(x + sa, params["ln1_g"][l], params["ln1_b"][l])
        q = x @ params["ea_wq"][l] + params["ea_bq"][l]
        kv = src @ params["ea_wkv"][l] + params["ea_bkv"][l]
        ea = mha(q, kv[..., :H], kv[..., H:], cross_mask,
                 params["ea_wo"][l], params["ea_bo"][l])
        x = ln(x + ea, params["ln2_g"][l], params["ln2_b"][l])
        h1 = jnp.maximum(x @ params["pf_w1"][l] + params["pf_b1"][l], 0.0)
        ff = h1 @ params["pf_w2"][l] + params["pf_b2"][l]
        x = ln(x + ff, params["ln3_g"][l], params["ln3_b"][l])
    m2 = trg_mask[:, 0, :, 0]                                       # (B, T)
    pooled = (x * m2[:, :, None]).sum(1) / m2.sum(1, keepdims=True)  # (B, H)
    y = pooled[:, None, :]
    y = jnp.maximum(y @ params["out_w1"] + params["out_b1"], 0.0)
    y = jnp.maximum(y @ params["out_w2"] + params["out_b2"], 0.0)
    y = jnp.maximum(y @ params["out_w3"] + params["out_b3"], 0.0)
    y = y @ params["out_w4"] + params["out_b4"]
    return y                                                         # (B, 1, 1)


# ----------------------------------------------------------------------------
# Deterministic synthetic parameters (shapes follow Decoder.__init__), with
# per-layer weights stacked along a leading layer axis and QKV / KV fused.
# ----------------------------------------------------------------------------
def init_params(key, hid_dim, n_layers, n_heads, pf_dim):
    keys = iter(jax.random.split(key, 128))
    H = hid_dim

    def dense(din, dout):
        w = jax.random.normal(next(keys), (din, dout), jnp.float32) * 0.05
        b = jax.random.normal(next(keys), (1, dout), jnp.float32) * 0.01
        return w, b

    def stack_dense(din, dout):
        ws, bs = zip(*[dense(din, dout) for _ in range(n_layers)])
        return jnp.stack(ws), jnp.stack(bs)      # [L,din,dout], [L,1,dout]

    sa_wqkv, sa_bqkv = stack_dense(H, 3 * H)     # fused w_q|w_k|w_v
    sa_wo, sa_bo = stack_dense(H, H)
    ea_wq, ea_bq = stack_dense(H, H)
    ea_wkv, ea_bkv = stack_dense(H, 2 * H)       # fused w_k|w_v
    ea_wo, ea_bo = stack_dense(H, H)
    pf_w1, pf_b1 = stack_dense(H, pf_dim)
    pf_w2, pf_b2 = stack_dense(pf_dim, H)

    ones = jnp.ones((n_layers, 1, H), jnp.float32)
    zeros = jnp.zeros((n_layers, 1, H), jnp.float32)

    ft_w, ft_b = dense(H, H)
    out_w1, out_b1 = dense(H, 256)
    out_w2, out_b2 = dense(256, 64)
    out_w3, out_b3 = dense(64, 32)
    out_w4, out_b4 = dense(32, 1)

    # TODO(synk): Decoder.__init__ also creates self.ln and self.sa which are
    # never used in forward(); they are intentionally not instantiated here.
    return dict(
        ft_w=ft_w, ft_b=ft_b,
        sa_wqkv=sa_wqkv, sa_bqkv=sa_bqkv, sa_wo=sa_wo, sa_bo=sa_bo,
        ea_wq=ea_wq, ea_bq=ea_bq, ea_wkv=ea_wkv, ea_bkv=ea_bkv,
        ea_wo=ea_wo, ea_bo=ea_bo,
        ln1_g=ones, ln1_b=zeros, ln2_g=ones, ln2_b=zeros,
        ln3_g=ones, ln3_b=zeros,
        pf_w1=pf_w1, pf_b1=pf_b1, pf_w2=pf_w2, pf_b2=pf_b2,
        out_w1=out_w1, out_b1=out_b1, out_w2=out_w2, out_b2=out_b2,
        out_w3=out_w3, out_b3=out_b3, out_w4=out_w4, out_b4=out_b4,
    )


# ----------------------------------------------------------------------------
if __name__ == "__main__":
    B, T, S = 2, 8, 8            # batch, trg seq, src seq
    H, NH, PF, L = 32, 4, 64, 2  # hidden, heads, pf_dim, n_layers

    key = jax.random.PRNGKey(0)
    kp, kt, ks = jax.random.split(key, 3)
    params = init_params(kp, H, L, NH, PF)

    trg = jax.random.normal(kt, (B, T, H), jnp.float32)
    src = jax.random.normal(ks, (B, S, H), jnp.float32)

    # trg_mask: [B, 1, T, 1]  (as consumed by trg_mask[:, 0, :, 0] in forward)
    trg_lens = jnp.array([T, 5])
    trg_mask = (jnp.arange(T)[None, :] < trg_lens[:, None]).astype(jnp.float32)
    trg_mask = trg_mask[:, None, :, None]
    # cross_attn_mask: [B, 1, 1, S]  (key mask for cross attention)
    src_lens = jnp.array([S, 6])
    cross_mask = (jnp.arange(S)[None, :] < src_lens[:, None]).astype(jnp.float32)
    cross_mask = cross_mask[:, None, None, :]

    out = decoder_forward(params, trg, src, trg_mask, cross_mask, NH)
    out = jax.block_until_ready(out)
    assert out.shape == (B, 1, 1), out.shape

    ref = decoder_reference(params, trg, src, trg_mask, cross_mask, NH)
    ref = jax.block_until_ready(ref)
    if not bool(jnp.allclose(out, ref, atol=2e-2, rtol=2e-2)):
        raise AssertionError(
            f"kernel/reference mismatch: max abs err "
            f"{float(jnp.max(jnp.abs(out - ref)))}")
    print("KERNEL_OK")
</pallas_src>

<mosaic_0001>
module attributes {stable_mosaic.version = 11 : i64} {
  func.func @_decoder_kernel(%arg0: i32, %arg1: i32, %arg2: memref<1x8x32xf32, #tpu.memory_space<vmem>>, %arg3: memref<1x8x32xf32, #tpu.memory_space<vmem>>, %arg4: memref<1x8x1xf32, #tpu.memory_space<vmem>>, %arg5: memref<1x1x8xf32, #tpu.memory_space<vmem>>, %arg6: memref<32x32xf32, #tpu.memory_space<vmem>>, %arg7: memref<1x32xf32, #tpu.memory_space<vmem>>, %arg8: memref<1x32x96xf32, #tpu.memory_space<vmem>>, %arg9: memref<1x1x96xf32, #tpu.memory_space<vmem>>, %arg10: memref<1x32x32xf32, #tpu.memory_space<vmem>>, %arg11: memref<1x1x32xf32, #tpu.memory_space<vmem>>, %arg12: memref<1x32x32xf32, #tpu.memory_space<vmem>>, %arg13: memref<1x1x32xf32, #tpu.memory_space<vmem>>, %arg14: memref<1x32x64xf32, #tpu.memory_space<vmem>>, %arg15: memref<1x1x64xf32, #tpu.memory_space<vmem>>, %arg16: memref<1x32x32xf32, #tpu.memory_space<vmem>>, %arg17: memref<1x1x32xf32, #tpu.memory_space<vmem>>, %arg18: memref<1x1x32xf32, #tpu.memory_space<vmem>>, %arg19: memref<1x1x32xf32, #tpu.memory_space<vmem>>, %arg20: memref<1x1x32xf32, #tpu.memory_space<vmem>>, %arg21: memref<1x1x32xf32, #tpu.memory_space<vmem>>, %arg22: memref<1x1x32xf32, #tpu.memory_space<vmem>>, %arg23: memref<1x1x32xf32, #tpu.memory_space<vmem>>, %arg24: memref<1x32x64xf32, #tpu.memory_space<vmem>>, %arg25: memref<1x1x64xf32, #tpu.memory_space<vmem>>, %arg26: memref<1x64x32xf32, #tpu.memory_space<vmem>>, %arg27: memref<1x1x32xf32, #tpu.memory_space<vmem>>, %arg28: memref<32x256xf32, #tpu.memory_space<vmem>>, %arg29: memref<1x256xf32, #tpu.memory_space<vmem>>, %arg30: memref<256x64xf32, #tpu.memory_space<vmem>>, %arg31: memref<1x64xf32, #tpu.memory_space<vmem>>, %arg32: memref<64x32xf32, #tpu.memory_space<vmem>>, %arg33: memref<1x32xf32, #tpu.memory_space<vmem>>, %arg34: memref<32x1xf32, #tpu.memory_space<vmem>>, %arg35: memref<1x1xf32, #tpu.memory_space<vmem>>, %arg36: memref<1x1x1xf32, #tpu.memory_space<vmem>>, %arg37: memref<8x32xf32, #tpu.memory_space<vmem>>) attributes {dimension_semantics = [#tpu.dimension_semantics<parallel>, #tpu.dimension_semantics<arbitrary>], iteration_bounds = array<i64: 2, 2>, scalar_prefetch = 0 : i64, scratch_operands = 1 : i64, tpu.core_type = #tpu.core_type<tc>, window_params = [{transform_indices = @transform_0, window_bounds = array<i64: 1, 8, 32>}, {transform_indices = @transform_1, window_bounds = array<i64: 1, 8, 32>}, {transform_indices = @transform_2, window_bounds = array<i64: 1, 8, 1>}, {transform_indices = @transform_3, window_bounds = array<i64: 1, 1, 8>}, {pipeline_mode = #tpu.pipeline_mode<synchronous>, transform_indices = @transform_4, window_bounds = array<i64: 32, 32>}, {pipeline_mode = #tpu.pipeline_mode<synchronous>, transform_indices = @transform_5, window_bounds = array<i64: 1, 32>}, {transform_indices = @transform_6, window_bounds = array<i64: 1, 32, 96>}, {transform_indices = @transform_7, window_bounds = array<i64: 1, 1, 96>}, {transform_indices = @transform_8, window_bounds = array<i64: 1, 32, 32>}, {transform_indices = @transform_9, window_bounds = array<i64: 1, 1, 32>}, {transform_indices = @transform_10, window_bounds = array<i64: 1, 32, 32>}, {transform_indices = @transform_11, window_bounds = array<i64: 1, 1, 32>}, {transform_indices = @transform_12, window_bounds = array<i64: 1, 32, 64>}, {transform_indices = @transform_13, window_bounds = array<i64: 1, 1, 64>}, {transform_indices = @transform_14, window_bounds = array<i64: 1, 32, 32>}, {transform_indices = @transform_15, window_bounds = array<i64: 1, 1, 32>}, {transform_indices = @transform_16, window_bounds = array<i64: 1, 1, 32>}, {transform_indices = @transform_17, window_bounds = array<i64: 1, 1, 32>}, {transform_indices = @transform_18, window_bounds = array<i64: 1, 1, 32>}, {transform_indices = @transform_19, window_bounds = array<i64: 1, 1, 32>}, {transform_indices = @transform_20, window_bounds = array<i64: 1, 1, 32>}, {transform_indices = @transform_21, window_bounds = array<i64: 1, 1, 32>}, {transform_indices = @transform_22, window_bounds = array<i64: 1, 32, 64>}, {transform_indices = @transform_23, window_bounds = array<i64: 1, 1, 64>}, {transform_indices = @transform_24, window_bounds = array<i64: 1, 64, 32>}, {transform_indices = @transform_25, window_bounds = array<i64: 1, 1, 32>}, {pipeline_mode = #tpu.pipeline_mode<synchronous>, transform_indices = @transform_26, window_bounds = array<i64: 32, 256>}, {pipeline_mode = #tpu.pipeline_mode<synchronous>, transform_indices = @transform_27, window_bounds = array<i64: 1, 256>}, {pipeline_mode = #tpu.pipeline_mode<synchronous>, transform_indices = @transform_28, window_bounds = array<i64: 256, 64>}, {pipeline_mode = #tpu.pipeline_mode<synchronous>, transform_indices = @transform_29, window_bounds = array<i64: 1, 64>}, {pipeline_mode = #tpu.pipeline_mode<synchronous>, transform_indices = @transform_30, window_bounds = array<i64: 64, 32>}, {pipeline_mode = #tpu.pipeline_mode<synchronous>, transform_indices = @transform_31, window_bounds = array<i64: 1, 32>}, {pipeline_mode = #tpu.pipeline_mode<synchronous>, transform_indices = @transform_32, window_bounds = array<i64: 32, 1>}, {pipeline_mode = #tpu.pipeline_mode<synchronous>, transform_indices = @transform_33, window_bounds = array<i64: 1, 1>}, {transform_indices = @transform_34, window_bounds = array<i64: 1, 1, 1>}]} {
    %c0_i32 = arith.constant 0 : i32
    %0 = arith.cmpi eq, %arg1, %c0_i32 : i32
    %1 = arith.extui %0 : i1 to i32
    %c0_i32_0 = arith.constant 0 : i32
    %2 = arith.cmpi ne, %1, %c0_i32_0 : i32
    scf.if %2 {
      %c0_146 = arith.constant 0 : index
      %c0_147 = arith.constant 0 : index
      %c0_148 = arith.constant 0 : index
      %319 = vector.load %arg2[%c0_146, %c0_147, %c0_148] : memref<1x8x32xf32, #tpu.memory_space<vmem>>, vector<1x8x32xf32>
      %320 = vector.shape_cast %319 : vector<1x8x32xf32> to vector<8x32xf32>
      %c0_149 = arith.constant 0 : index
      %c0_150 = arith.constant 0 : index
      %321 = vector.load %arg6[%c0_149, %c0_150] : memref<32x32xf32, #tpu.memory_space<vmem>>, vector<32x32xf32>
      %cst_151 = arith.constant dense<0.000000e+00> : vector<8x32xf32>
      %322 = tpu.matmul %320, %321, %cst_151 {dimension_numbers = #tpu.dot_dimension_numbers<[1], [0], [0], [1], [0, 0, 1, 1], [], []>} : vector<8x32xf32>, vector<32x32xf32>, vector<8x32xf32> -> vector<8x32xf32>
      %c0_152 = arith.constant 0 : index
      %c0_153 = arith.constant 0 : index
      %323 = vector.load %arg7[%c0_152, %c0_153] : memref<1x32xf32, #tpu.memory_space<vmem>>, vector<1x32xf32>
      %324 = vector.broadcast %323 : vector<1x32xf32> to vector<8x32xf32>
      %325 = arith.addf %322, %324 : vector<8x32xf32>
      %c0_154 = arith.constant 0 : index
      %c0_155 = arith.constant 0 : index
      %326 = vector.load %arg37[%c0_154, %c0_155] : memref<8x32xf32, #tpu.memory_space<vmem>>, vector<8x32xf32>
      tpu.vector_store %arg37[%c0_154, %c0_155], %325 {strides = array<i32>} : memref<8x32xf32, #tpu.memory_space<vmem>>, vector<8x32xf32>,
    } else {
    }
    %c0 = arith.constant 0 : index
    %c0_1 = arith.constant 0 : index
    %3 = vector.load %arg37[%c0, %c0_1] : memref<8x32xf32, #tpu.memory_space<vmem>>, vector<8x32xf32>
    %c0_2 = arith.constant 0 : index
    %c0_3 = arith.constant 0 : index
    %c0_4 = arith.constant 0 : index
    %4 = vector.load %arg3[%c0_2, %c0_3, %c0_4] : memref<1x8x32xf32, #tpu.memory_space<vmem>>, vector<1x8x32xf32>
    %5 = vector.shape_cast %4 : vector<1x8x32xf32> to vector<8x32xf32>
    %c0_5 = arith.constant 0 : index
    %c0_6 = arith.constant 0 : index
    %c0_7 = arith.constant 0 : index
    %6 = vector.load %arg4[%c0_5, %c0_6, %c0_7] : memref<1x8x1xf32, #tpu.memory_space<vmem>>, vector<1x8x1xf32>
    %7 = vector.shape_cast %6 : vector<1x8x1xf32> to vector<8x1xf32>
    %c0_8 = arith.constant 0 : index
    %c0_9 = arith.constant 0 : index
    %c0_10 = arith.constant 0 : index
    %8 = vector.load %arg5[%c0_8, %c0_9, %c0_10] : memref<1x1x8xf32, #tpu.memory_space<vmem>>, vector<1x1x8xf32>
    %9 = vector.shape_cast %8 : vector<1x1x8xf32> to vector<1x8xf32>
    %cst = arith.constant 0.000000e+00 : f32
    %10 = vector.broadcast %cst : f32 to vector<8x1xf32>
    %11 = arith.cmpf oeq, %7, %10 : vector<8x1xf32>
    %cst_11 = arith.constant 0.000000e+00 : f32
    %12 = vector.broadcast %cst_11 : f32 to vector<1x8xf32>
    %13 = arith.cmpf oeq, %9, %12 : vector<1x8xf32>
    %c0_12 = arith.constant 0 : index
    %c0_13 = arith.constant 0 : index
    %c0_14 = arith.constant 0 : index
    %14 = vector.load %arg8[%c0_12, %c0_13, %c0_14] : memref<1x32x96xf32, #tpu.memory_space<vmem>>, vector<1x32x96xf32>
    %15 = vector.shape_cast %14 : vector<1x32x96xf32> to vector<32x96xf32>
    %cst_15 = arith.constant dense<0.000000e+00> : vector<8x96xf32>
    %16 = tpu.matmul %3, %15, %cst_15 {dimension_numbers = #tpu.dot_dimension_numbers<[1], [0], [0], [1], [0, 0, 1, 1], [], []>} : vector<8x32xf32>, vector<32x96xf32>, vector<8x96xf32> -> vector<8x96xf32>
    %c0_16 = arith.constant 0 : index
    %c0_17 = arith.constant 0 : index
    %c0_18 = arith.constant 0 : index
    %17 = vector.load %arg9[%c0_16, %c0_17, %c0_18] : memref<1x1x96xf32, #tpu.memory_space<vmem>>, vector<1x1x96xf32>
    %18 = vector.shape_cast %17 : vector<1x1x96xf32> to vector<1x96xf32>
    %19 = vector.broadcast %18 : vector<1x96xf32> to vector<8x96xf32>
    %20 = arith.addf %16, %19 : vector<8x96xf32>
    %21 = vector.extract_strided_slice %20 {offsets = [0, 0], sizes = [8, 32], strides = [1, 1]} : vector<8x96xf32> to vector<8x32xf32>
    %22 = vector.extract_strided_slice %20 {offsets = [0, 32], sizes = [8, 32], strides = [1, 1]} : vector<8x96xf32> to vector<8x32xf32>
    %23 = vector.extract_strided_slice %20 {offsets = [0, 64], sizes = [8, 32], strides = [1, 1]} : vector<8x96xf32> to vector<8x32xf32>
    %24 = vector.extract_strided_slice %21 {offsets = [0, 0], sizes = [8, 8], strides = [1, 1]} : vector<8x32xf32> to vector<8x8xf32>
    %25 = vector.extract_strided_slice %22 {offsets = [0, 0], sizes = [8, 8], strides = [1, 1]} : vector<8x32xf32> to vector<8x8xf32>
    "tpu.trace_start"() <{level = 10 : i32, message = "qd,kd->qk"}> : () -> ()
    %cst_19 = arith.constant dense<0.000000e+00> : vector<8x8xf32>
    %26 = tpu.matmul %24, %25, %cst_19 {dimension_numbers = #tpu.dot_dimension_numbers<[1], [1], [0], [0], [0, 0, 1, 0], [], []>} : vector<8x8xf32>, vector<8x8xf32>, vector<8x8xf32> -> vector<8x8xf32>
    "tpu.trace_stop"() : () -> ()
    %cst_20 = arith.constant 0.353553385 : f32
    %27 = vector.broadcast %cst_20 : f32 to vector<8x8xf32>
    %28 = arith.mulf %26, %27 : vector<8x8xf32>
    %cst_21 = arith.constant -1.000000e+10 : f32
    %29 = vector.shape_cast %11 : vector<8x1xi1> to vector<8x1xi1>
    %30 = vector.broadcast %29 : vector<8x1xi1> to vector<8x8xi1>
    %31 = vector.broadcast %cst_21 : f32 to vector<8x8xf32>
    %32 = arith.select %30, %31, %28 : vector<8x8xi1>, vector<8x8xf32>
    %cst_22 = arith.constant dense<0xFF800000> : vector<8xf32>
    %33 = vector.multi_reduction <maximumf>, %32, %cst_22 [1] : vector<8x8xf32> to vector<8xf32>
    %34 = vector.shape_cast %33 : vector<8xf32> to vector<8x1xf32>
    %35 = vector.broadcast %34 : vector<8x1xf32> to vector<8x8xf32>
    %36 = arith.subf %32, %35 : vector<8x8xf32>
    %37 = math.exp %36 : vector<8x8xf32>
    %cst_23 = arith.constant dense<0.000000e+00> : vector<8xf32>
    %38 = vector.multi_reduction <add>, %37, %cst_23 [1] : vector<8x8xf32> to vector<8xf32>
    %39 = vector.shape_cast %38 : vector<8xf32> to vector<8x1xf32>
    %40 = tpu.reciprocal %39 {approx = true} : vector<8x1xf32> -> vector<8x1xf32>
    %41 = vector.broadcast %40 : vector<8x1xf32> to vector<8x8xf32>
    %42 = arith.mulf %37, %41 : vector<8x8xf32>
    %43 = vector.extract_strided_slice %23 {offsets = [0, 0], sizes = [8, 8], strides = [1, 1]} : vector<8x32xf32> to vector<8x8xf32>
    "tpu.trace_start"() <{level = 10 : i32, message = "qk,kd->qd"}> : () -> ()
    %cst_24 = arith.constant dense<0.000000e+00> : vector<8x8xf32>
    %44 = tpu.matmul %42, %43, %cst_24 {dimension_numbers = #tpu.dot_dimension_numbers<[1], [0], [0], [1], [0, 0, 1, 1], [], []>} : vector<8x8xf32>, vector<8x8xf32>, vector<8x8xf32> -> vector<8x8xf32>
    "tpu.trace_stop"() : () -> ()
    %45 = vector.extract_strided_slice %21 {offsets = [0, 8], sizes = [8, 8], strides = [1, 1]} : vector<8x32xf32> to vector<8x8xf32>
    %46 = vector.extract_strided_slice %22 {offsets = [0, 8], sizes = [8, 8], strides = [1, 1]} : vector<8x32xf32> to vector<8x8xf32>
    "tpu.trace_start"() <{level = 10 : i32, message = "qd,kd->qk"}> : () -> ()
    %cst_25 = arith.constant dense<0.000000e+00> : vector<8x8xf32>
    %47 = tpu.matmul %45, %46, %cst_25 {dimension_numbers = #tpu.dot_dimension_numbers<[1], [1], [0], [0], [0, 0, 1, 0], [], []>} : vector<8x8xf32>, vector<8x8xf32>, vector<8x8xf32> -> vector<8x8xf32>
    "tpu.trace_stop"() : () -> ()
    %cst_26 = arith.constant 0.353553385 : f32
    %48 = vector.broadcast %cst_26 : f32 to vector<8x8xf32>
    %49 = arith.mulf %47, %48 : vector<8x8xf32>
    %cst_27 = arith.constant -1.000000e+10 : f32
    %50 = vector.shape_cast %11 : vector<8x1xi1> to vector<8x1xi1>
    %51 = vector.broadcast %50 : vector<8x1xi1> to vector<8x8xi1>
    %52 = vector.broadcast %cst_27 : f32 to vector<8x8xf32>
    %53 = arith.select %51, %52, %49 : vector<8x8xi1>, vector<8x8xf32>
    %cst_28 = arith.constant dense<0xFF800000> : vector<8xf32>
    %54 = vector.multi_reduction <maximumf>, %53, %cst_28 [1] : vector<8x8xf32> to vector<8xf32>
    %55 = vector.shape_cast %54 : vector<8xf32> to vector<8x1xf32>
    %56 = vector.broadcast %55 : vector<8x1xf32> to vector<8x8xf32>
    %57 = arith.subf %53, %56 : vector<8x8xf32>
    %58 = math.exp %57 : vector<8x8xf32>
    %cst_29 = arith.constant dense<0.000000e+00> : vector<8xf32>
    %59 = vector.multi_reduction <add>, %58, %cst_29 [1] : vector<8x8xf32> to vector<8xf32>
    %60 = vector.shape_cast %59 : vector<8xf32> to vector<8x1xf32>
    %61 = tpu.reciprocal %60 {approx = true} : vector<8x1xf32> -> vector<8x1xf32>
    %62 = vector.broadcast %61 : vector<8x1xf32> to vector<8x8xf32>
    %63 = arith.mulf %58, %62 : vector<8x8xf32>
    %64 = vector.extract_strided_slice %23 {offsets = [0, 8], sizes = [8, 8], strides = [1, 1]} : vector<8x32xf32> to vector<8x8xf32>
    "tpu.trace_start"() <{level = 10 : i32, message = "qk,kd->qd"}> : () -> ()
    %cst_30 = arith.constant dense<0.000000e+00> : vector<8x8xf32>
    %65 = tpu.matmul %63, %64, %cst_30 {dimension_numbers = #tpu.dot_dimension_numbers<[1], [0], [0], [1], [0, 0, 1, 1], [], []>} : vector<8x8xf32>, vector<8x8xf32>, vector<8x8xf32> -> vector<8x8xf32>
    "tpu.trace_stop"() : () -> ()
    %66 = vector.extract_strided_slice %21 {offsets = [0, 16], sizes = [8, 8], strides = [1, 1]} : vector<8x32xf32> to vector<8x8xf32>
    %67 = vector.extract_strided_slice %22 {offsets = [0, 16], sizes = [8, 8], strides = [1, 1]} : vector<8x32xf32> to vector<8x8xf32>
    "tpu.trace_start"() <{level = 10 : i32, message = "qd,kd->qk"}> : () -> ()
    %cst_31 = arith.constant dense<0.000000e+00> : vector<8x8xf32>
    %68 = tpu.matmul %66, %67, %cst_31 {dimension_numbers = #tpu.dot_dimension_numbers<[1], [1], [0], [0], [0, 0, 1, 0], [], []>} : vector<8x8xf32>, vector<8x8xf32>, vector<8x8xf32> -> vector<8x8xf32>
    "tpu.trace_stop"() : () -> ()
    %cst_32 = arith.constant 0.353553385 : f32
    %69 = vector.broadcast %cst_32 : f32 to vector<8x8xf32>
    %70 = arith.mulf %68, %69 : vector<8x8xf32>
    %cst_33 = arith.constant -1.000000e+10 : f32
    %71 = vector.shape_cast %11 : vector<8x1xi1> to vector<8x1xi1>
    %72 = vector.broadcast %71 : vector<8x1xi1> to vector<8x8xi1>
    %73 = vector.broadcast %cst_33 : f32 to vector<8x8xf32>
    %74 = arith.select %72, %73, %70 : vector<8x8xi1>, vector<8x8xf32>
    %cst_34 = arith.constant dense<0xFF800000> : vector<8xf32>
    %75 = vector.multi_reduction <maximumf>, %74, %cst_34 [1] : vector<8x8xf32> to vector<8xf32>
    %76 = vector.shape_cast %75 : vector<8xf32> to vector<8x1xf32>
    %77 = vector.broadcast %76 : vector<8x1xf32> to vector<8x8xf32>
    %78 = arith.subf %74, %77 : vector<8x8xf32>
    %79 = math.exp %78 : vector<8x8xf32>
    %cst_35 = arith.constant dense<0.000000e+00> : vector<8xf32>
    %80 = vector.multi_reduction <add>, %79, %cst_35 [1] : vector<8x8xf32> to vector<8xf32>
    %81 = vector.shape_cast %80 : vector<8xf32> to vector<8x1xf32>
    %82 = tpu.reciprocal %81 {approx = true} : vector<8x1xf32> -> vector<8x1xf32>
    %83 = vector.broadcast %82 : vector<8x1xf32> to vector<8x8xf32>
    %84 = arith.mulf %79, %83 : vector<8x8xf32>
    %85 = vector.extract_strided_slice %23 {offsets = [0, 16], sizes = [8, 8], strides = [1, 1]} : vector<8x32xf32> to vector<8x8xf32>
    "tpu.trace_start"() <{level = 10 : i32, message = "qk,kd->qd"}> : () -> ()
    %cst_36 = arith.constant dense<0.000000e+00> : vector<8x8xf32>
    %86 = tpu.matmul %84, %85, %cst_36 {dimension_numbers = #tpu.dot_dimension_numbers<[1], [0], [0], [1], [0, 0, 1, 1], [], []>} : vector<8x8xf32>, vector<8x8xf32>, vector<8x8xf32> -> vector<8x8xf32>
    "tpu.trace_stop"() : () -> ()
    %87 = vector.extract_strided_slice %21 {offsets = [0, 24], sizes = [8, 8], strides = [1, 1]} : vector<8x32xf32> to vector<8x8xf32>
    %88 = vector.extract_strided_slice %22 {offsets = [0, 24], sizes = [8, 8], strides = [1, 1]} : vector<8x32xf32> to vector<8x8xf32>
    "tpu.trace_start"() <{level = 10 : i32, message = "qd,kd->qk"}> : () -> ()
    %cst_37 = arith.constant dense<0.000000e+00> : vector<8x8xf32>
    %89 = tpu.matmul %87, %88, %cst_37 {dimension_numbers = #tpu.dot_dimension_numbers<[1], [1], [0], [0], [0, 0, 1, 0], [], []>} : vector<8x8xf32>, vector<8x8xf32>, vector<8x8xf32> -> vector<8x8xf32>
    "tpu.trace_stop"() : () -> ()
    %cst_38 = arith.constant 0.353553385 : f32
    %90 = vector.broadcast %cst_38 : f32 to vector<8x8xf32>
    %91 = arith.mulf %89, %90 : vector<8x8xf32>
    %cst_39 = arith.constant -1.000000e+10 : f32
    %92 = vector.shape_cast %11 : vector<8x1xi1> to vector<8x1xi1>
    %93 = vector.broadcast %92 : vector<8x1xi1> to vector<8x8xi1>
    %94 = vector.broadcast %cst_39 : f32 to vector<8x8xf32>
    %95 = arith.select %93, %94, %91 : vector<8x8xi1>, vector<8x8xf32>
    %cst_40 = arith.constant dense<0xFF800000> : vector<8xf32>
    %96 = vector.multi_reduction <maximumf>, %95, %cst_40 [1] : vector<8x8xf32> to vector<8xf32>
    %97 = vector.shape_cast %96 : vector<8xf32> to vector<8x1xf32>
    %98 = vector.broadcast %97 : vector<8x1xf32> to vector<8x8xf32>
    %99 = arith.subf %95, %98 : vector<8x8xf32>
    %100 = math.exp %99 : vector<8x8xf32>
    %cst_41 = arith.constant dense<0.000000e+00> : vector<8xf32>
    %101 = vector.multi_reduction <add>, %100, %cst_41 [1] : vector<8x8xf32> to vector<8xf32>
    %102 = vector.shape_cast %101 : vector<8xf32> to vector<8x1xf32>
    %103 = tpu.reciprocal %102 {approx = true} : vector<8x1xf32> -> vector<8x1xf32>
    %104 = vector.broadcast %103 : vector<8x1xf32> to vector<8x8xf32>
    %105 = arith.mulf %100, %104 : vector<8x8xf32>
    %106 = vector.extract_strided_slice %23 {offsets = [0, 24], sizes = [8, 8], strides = [1, 1]} : vector<8x32xf32> to vector<8x8xf32>
    "tpu.trace_start"() <{level = 10 : i32, message = "qk,kd->qd"}> : () -> ()
    %cst_42 = arith.constant dense<0.000000e+00> : vector<8x8xf32>
    %107 = tpu.matmul %105, %106, %cst_42 {dimension_numbers = #tpu.dot_dimension_numbers<[1], [0], [0], [1], [0, 0, 1, 1], [], []>} : vector<8x8xf32>, vector<8x8xf32>, vector<8x8xf32> -> vector<8x8xf32>
    "tpu.trace_stop"() : () -> ()
    %108 = tpu.concatenate %44, %65, %86, %107 in 1 : vector<8x8xf32>, vector<8x8xf32>, vector<8x8xf32>, vector<8x8xf32> -> vector<8x32xf32>
    %c0_43 = arith.constant 0 : index
    %c0_44 = arith.constant 0 : index
    %c0_45 = arith.constant 0 : index
    %109 = vector.load %arg10[%c0_43, %c0_44, %c0_45] : memref<1x32x32xf32, #tpu.memory_space<vmem>>, vector<1x32x32xf32>
    %110 = vector.shape_cast %109 : vector<1x32x32xf32> to vector<32x32xf32>
    %cst_46 = arith.constant dense<0.000000e+00> : vector<8x32xf32>
    %111 = tpu.matmul %108, %110, %cst_46 {dimension_numbers = #tpu.dot_dimension_numbers<[1], [0], [0], [1], [0, 0, 1, 1], [], []>} : vector<8x32xf32>, vector<32x32xf32>, vector<8x32xf32> -> vector<8x32xf32>
    %c0_47 = arith.constant 0 : index
    %c0_48 = arith.constant 0 : index
    %c0_49 = arith.constant 0 : index
    %112 = vector.load %arg11[%c0_47, %c0_48, %c0_49] : memref<1x1x32xf32, #tpu.memory_space<vmem>>, vector<1x1x32xf32>
    %113 = vector.shape_cast %112 : vector<1x1x32xf32> to vector<1x32xf32>
    %114 = vector.broadcast %113 : vector<1x32xf32> to vector<8x32xf32>
    %115 = arith.addf %111, %114 : vector<8x32xf32>
    %116 = arith.addf %3, %115 : vector<8x32xf32>
    %cst_50 = arith.constant dense<0.000000e+00> : vector<8xf32>
    %117 = vector.multi_reduction <add>, %116, %cst_50 [1] : vector<8x32xf32> to vector<8xf32>
    %118 = vector.shape_cast %117 : vector<8xf32> to vector<8x1xf32>
    %cst_51 = arith.constant 3.200000e+01 : f32
    %119 = vector.broadcast %cst_51 : f32 to vector<8x1xf32>
    %120 = arith.divf %118, %119 : vector<8x1xf32>
    %121 = vector.broadcast %120 : vector<8x1xf32> to vector<8x32xf32>
    %122 = arith.subf %116, %121 : vector<8x32xf32>
    %123 = arith.mulf %122, %122 : vector<8x32xf32>
    %cst_52 = arith.constant dense<0.000000e+00> : vector<8xf32>
    %124 = vector.multi_reduction <add>, %123, %cst_52 [1] : vector<8x32xf32> to vector<8xf32>
    %125 = vector.shape_cast %124 : vector<8xf32> to vector<8x1xf32>
    %cst_53 = arith.constant 3.100000e+01 : f32
    %126 = vector.broadcast %cst_53 : f32 to vector<8x1xf32>
    %127 = arith.divf %125, %126 : vector<8x1xf32>
    %c0_54 = arith.constant 0 : index
    %c0_55 = arith.constant 0 : index
    %c0_56 = arith.constant 0 : index
    %128 = vector.load %arg18[%c0_54, %c0_55, %c0_56] : memref<1x1x32xf32, #tpu.memory_space<vmem>>, vector<1x1x32xf32>
    %129 = vector.shape_cast %128 : vector<1x1x32xf32> to vector<1x32xf32>
    %130 = math.sqrt %127 : vector<8x1xf32>
    %cst_57 = arith.constant 9.99999996E-13 : f32
    %131 = vector.broadcast %cst_57 : f32 to vector<8x1xf32>
    %132 = arith.addf %130, %131 : vector<8x1xf32>
    %133 = vector.broadcast %132 : vector<8x1xf32> to vector<8x32xf32>
    %134 = arith.divf %122, %133 : vector<8x32xf32>
    %135 = vector.broadcast %129 : vector<1x32xf32> to vector<8x32xf32>
    %136 = arith.mulf %135, %134 : vector<8x32xf32>
    %c0_58 = arith.constant 0 : index
    %c0_59 = arith.constant 0 : index
    %c0_60 = arith.constant 0 : index
    %137 = vector.load %arg19[%c0_58, %c0_59, %c0_60] : memref<1x1x32xf32, #tpu.memory_space<vmem>>, vector<1x1x32xf32>
    %138 = vector.shape_cast %137 : vector<1x1x32xf32> to vector<1x32xf32>
    %139 = vector.broadcast %138 : vector<1x32xf32> to vector<8x32xf32>
    %140 = arith.addf %136, %139 : vector<8x32xf32>
    %c0_61 = arith.constant 0 : index
    %c0_62 = arith.constant 0 : index
    %c0_63 = arith.constant 0 : index
    %141 = vector.load %arg12[%c0_61, %c0_62, %c0_63] : memref<1x32x32xf32, #tpu.memory_space<vmem>>, vector<1x32x32xf32>
    %142 = vector.shape_cast %141 : vector<1x32x32xf32> to vector<32x32xf32>
    %cst_64 = arith.constant dense<0.000000e+00> : vector<8x32xf32>
    %143 = tpu.matmul %140, %142, %cst_64 {dimension_numbers = #tpu.dot_dimension_numbers<[1], [0], [0], [1], [0, 0, 1, 1], [], []>} : vector<8x32xf32>, vector<32x32xf32>, vector<8x32xf32> -> vector<8x32xf32>
    %c0_65 = arith.constant 0 : index
    %c0_66 = arith.constant 0 : index
    %c0_67 = arith.constant 0 : index
    %144 = vector.load %arg13[%c0_65, %c0_66, %c0_67] : memref<1x1x32xf32, #tpu.memory_space<vmem>>, vector<1x1x32xf32>
    %145 = vector.shape_cast %144 : vector<1x1x32xf32> to vector<1x32xf32>
    %146 = vector.broadcast %145 : vector<1x32xf32> to vector<8x32xf32>
    %147 = arith.addf %143, %146 : vector<8x32xf32>
    %c0_68 = arith.constant 0 : index
    %c0_69 = arith.constant 0 : index
    %c0_70 = arith.constant 0 : index
    %148 = vector.load %arg14[%c0_68, %c0_69, %c0_70] : memref<1x32x64xf32, #tpu.memory_space<vmem>>, vector<1x32x64xf32>
    %149 = vector.shape_cast %148 : vector<1x32x64xf32> to vector<32x64xf32>
    %cst_71 = arith.constant dense<0.000000e+00> : vector<8x64xf32>
    %150 = tpu.matmul %5, %149, %cst_71 {dimension_numbers = #tpu.dot_dimension_numbers<[1], [0], [0], [1], [0, 0, 1, 1], [], []>} : vector<8x32xf32>, vector<32x64xf32>, vector<8x64xf32> -> vector<8x64xf32>
    %c0_72 = arith.constant 0 : index
    %c0_73 = arith.constant 0 : index
    %c0_74 = arith.constant 0 : index
    %151 = vector.load %arg15[%c0_72, %c0_73, %c0_74] : memref<1x1x64xf32, #tpu.memory_space<vmem>>, vector<1x1x64xf32>
    %152 = vector.shape_cast %151 : vector<1x1x64xf32> to vector<1x64xf32>
    %153 = vector.broadcast %152 : vector<1x64xf32> to vector<8x64xf32>
    %154 = arith.addf %150, %153 : vector<8x64xf32>
    %155 = vector.extract_strided_slice %154 {offsets = [0, 0], sizes = [8, 32], strides = [1, 1]} : vector<8x64xf32> to vector<8x32xf32>
    %156 = vector.extract_strided_slice %154 {offsets = [0, 32], sizes = [8, 32], strides = [1, 1]} : vector<8x64xf32> to vector<8x32xf32>
    %157 = vector.extract_strided_slice %147 {offsets = [0, 0], sizes = [8, 8], strides = [1, 1]} : vector<8x32xf32> to vector<8x8xf32>
    %158 = vector.extract_strided_slice %155 {offsets = [0, 0], sizes = [8, 8], strides = [1, 1]} : vector<8x32xf32> to vector<8x8xf32>
    "tpu.trace_start"() <{level = 10 : i32, message = "qd,kd->qk"}> : () -> ()
    %cst_75 = arith.constant dense<0.000000e+00> : vector<8x8xf32>
    %159 = tpu.matmul %157, %158, %cst_75 {dimension_numbers = #tpu.dot_dimension_numbers<[1], [1], [0], [0], [0, 0, 1, 0], [], []>} : vector<8x8xf32>, vector<8x8xf32>, vector<8x8xf32> -> vector<8x8xf32>
    "tpu.trace_stop"() : () -> ()
    %cst_76 = arith.constant 0.353553385 : f32
    %160 = vector.broadcast %cst_76 : f32 to vector<8x8xf32>
    %161 = arith.mulf %159, %160 : vector<8x8xf32>
    %cst_77 = arith.constant -1.000000e+10 : f32
    %162 = vector.shape_cast %13 : vector<1x8xi1> to vector<1x8xi1>
    %163 = vector.broadcast %162 : vector<1x8xi1> to vector<8x8xi1>
    %164 = vector.broadcast %cst_77 : f32 to vector<8x8xf32>
    %165 = arith.select %163, %164, %161 : vector<8x8xi1>, vector<8x8xf32>
    %cst_78 = arith.constant dense<0xFF800000> : vector<8xf32>
    %166 = vector.multi_reduction <maximumf>, %165, %cst_78 [1] : vector<8x8xf32> to vector<8xf32>
    %167 = vector.shape_cast %166 : vector<8xf32> to vector<8x1xf32>
    %168 = vector.broadcast %167 : vector<8x1xf32> to vector<8x8xf32>
    %169 = arith.subf %165, %168 : vector<8x8xf32>
    %170 = math.exp %169 : vector<8x8xf32>
    %cst_79 = arith.constant dense<0.000000e+00> : vector<8xf32>
    %171 = vector.multi_reduction <add>, %170, %cst_79 [1] : vector<8x8xf32> to vector<8xf32>
    %172 = vector.shape_cast %171 : vector<8xf32> to vector<8x1xf32>
    %173 = tpu.reciprocal %172 {approx = true} : vector<8x1xf32> -> vector<8x1xf32>
    %174 = vector.broadcast %173 : vector<8x1xf32> to vector<8x8xf32>
    %175 = arith.mulf %170, %174 : vector<8x8xf32>
    %176 = vector.extract_strided_slice %156 {offsets = [0, 0], sizes = [8, 8], strides = [1, 1]} : vector<8x32xf32> to vector<8x8xf32>
    "tpu.trace_start"() <{level = 10 : i32, message = "qk,kd->qd"}> : () -> ()
    %cst_80 = arith.constant dense<0.000000e+00> : vector<8x8xf32>
    %177 = tpu.matmul %175, %176, %cst_80 {dimension_numbers = #tpu.dot_dimension_numbers<[1], [0], [0], [1], [0, 0, 1, 1], [], []>} : vector<8x8xf32>, vector<8x8xf32>, vector<8x8xf32> -> vector<8x8xf32>
    "tpu.trace_stop"() : () -> ()
    %178 = vector.extract_strided_slice %147 {offsets = [0, 8], sizes = [8, 8], strides = [1, 1]} : vector<8x32xf32> to vector<8x8xf32>
    %179 = vector.extract_strided_slice %155 {offsets = [0, 8], sizes = [8, 8], strides = [1, 1]} : vector<8x32xf32> to vector<8x8xf32>
    "tpu.trace_start"() <{level = 10 : i32, message = "qd,kd->qk"}> : () -> ()
    %cst_81 = arith.constant dense<0.000000e+00> : vector<8x8xf32>
    %180 = tpu.matmul %178, %179, %cst_81 {dimension_numbers = #tpu.dot_dimension_numbers<[1], [1], [0], [0], [0, 0, 1, 0], [], []>} : vector<8x8xf32>, vector<8x8xf32>, vector<8x8xf32> -> vector<8x8xf32>
    "tpu.trace_stop"() : () -> ()
    %cst_82 = arith.constant 0.353553385 : f32
    %181 = vector.broadcast %cst_82 : f32 to vector<8x8xf32>
    %182 = arith.mulf %180, %181 : vector<8x8xf32>
    %cst_83 = arith.constant -1.000000e+10 : f32
    %183 = vector.shape_cast %13 : vector<1x8xi1> to vector<1x8xi1>
    %184 = vector.broadcast %183 : vector<1x8xi1> to vector<8x8xi1>
    %185 = vector.broadcast %cst_83 : f32 to vector<8x8xf32>
    %186 = arith.select %184, %185, %182 : vector<8x8xi1>, vector<8x8xf32>
    %cst_84 = arith.constant dense<0xFF800000> : vector<8xf32>
    %187 = vector.multi_reduction <maximumf>, %186, %cst_84 [1] : vector<8x8xf32> to vector<8xf32>
    %188 = vector.shape_cast %187 : vector<8xf32> to vector<8x1xf32>
    %189 = vector.broadcast %188 : vector<8x1xf32> to vector<8x8xf32>
    %190 = arith.subf %186, %189 : vector<8x8xf32>
    %191 = math.exp %190 : vector<8x8xf32>
    %cst_85 = arith.constant dense<0.000000e+00> : vector<8xf32>
    %192 = vector.multi_reduction <add>, %191, %cst_85 [1] : vector<8x8xf32> to vector<8xf32>
    %193 = vector.shape_cast %192 : vector<8xf32> to vector<8x1xf32>
    %194 = tpu.reciprocal %193 {approx = true} : vector<8x1xf32> -> vector<8x1xf32>
    %195 = vector.broadcast %194 : vector<8x1xf32> to vector<8x8xf32>
    %196 = arith.mulf %191, %195 : vector<8x8xf32>
    %197 = vector.extract_strided_slice %156 {offsets = [0, 8], sizes = [8, 8], strides = [1, 1]} : vector<8x32xf32> to vector<8x8xf32>
    "tpu.trace_start"() <{level = 10 : i32, message = "qk,kd->qd"}> : () -> ()
    %cst_86 = arith.constant dense<0.000000e+00> : vector<8x8xf32>
    %198 = tpu.matmul %196, %197, %cst_86 {dimension_numbers = #tpu.dot_dimension_numbers<[1], [0], [0], [1], [0, 0, 1, 1], [], []>} : vector<8x8xf32>, vector<8x8xf32>, vector<8x8xf32> -> vector<8x8xf32>
    "tpu.trace_stop"() : () -> ()
    %199 = vector.extract_strided_slice %147 {offsets = [0, 16], sizes = [8, 8], strides = [1, 1]} : vector<8x32xf32> to vector<8x8xf32>
    %200 = vector.extract_strided_slice %155 {offsets = [0, 16], sizes = [8, 8], strides = [1, 1]} : vector<8x32xf32> to vector<8x8xf32>
    "tpu.trace_start"() <{level = 10 : i32, message = "qd,kd->qk"}> : () -> ()
    %cst_87 = arith.constant dense<0.000000e+00> : vector<8x8xf32>
    %201 = tpu.matmul %199, %200, %cst_87 {dimension_numbers = #tpu.dot_dimension_numbers<[1], [1], [0], [0], [0, 0, 1, 0], [], []>} : vector<8x8xf32>, vector<8x8xf32>, vector<8x8xf32> -> vector<8x8xf32>
    "tpu.trace_stop"() : () -> ()
    %cst_88 = arith.constant 0.353553385 : f32
    %202 = vector.broadcast %cst_88 : f32 to vector<8x8xf32>
    %203 = arith.mulf %201, %202 : vector<8x8xf32>
    %cst_89 = arith.constant -1.000000e+10 : f32
    %204 = vector.shape_cast %13 : vector<1x8xi1> to vector<1x8xi1>
    %205 = vector.broadcast %204 : vector<1x8xi1> to vector<8x8xi1>
    %206 = vector.broadcast %cst_89 : f32 to vector<8x8xf32>
    %207 = arith.select %205, %206, %203 : vector<8x8xi1>, vector<8x8xf32>
    %cst_90 = arith.constant dense<0xFF800000> : vector<8xf32>
    %208 = vector.multi_reduction <maximumf>, %207, %cst_90 [1] : vector<8x8xf32> to vector<8xf32>
    %209 = vector.shape_cast %208 : vector<8xf32> to vector<8x1xf32>
    %210 = vector.broadcast %209 : vector<8x1xf32> to vector<8x8xf32>
    %211 = arith.subf %207, %210 : vector<8x8xf32>
    %212 = math.exp %211 : vector<8x8xf32>
    %cst_91 = arith.constant dense<0.000000e+00> : vector<8xf32>
    %213 = vector.multi_reduction <add>, %212, %cst_91 [1] : vector<8x8xf32> to vector<8xf32>
    %214 = vector.shape_cast %213 : vector<8xf32> to vector<8x1xf32>
    %215 = tpu.reciprocal %214 {approx = true} : vector<8x1xf32> -> vector<8x1xf32>
    %216 = vector.broadcast %215 : vector<8x1xf32> to vector<8x8xf32>
    %217 = arith.mulf %212, %216 : vector<8x8xf32>
    %218 = vector.extract_strided_slice %156 {offsets = [0, 16], sizes = [8, 8], strides = [1, 1]} : vector<8x32xf32> to vector<8x8xf32>
    "tpu.trace_start"() <{level = 10 : i32, message = "qk,kd->qd"}> : () -> ()
    %cst_92 = arith.constant dense<0.000000e+00> : vector<8x8xf32>
    %219 = tpu.matmul %217, %218, %cst_92 {dimension_numbers = #tpu.dot_dimension_numbers<[1], [0], [0], [1], [0, 0, 1, 1], [], []>} : vector<8x8xf32>, vector<8x8xf32>, vector<8x8xf32> -> vector<8x8xf32>
    "tpu.trace_stop"() : () -> ()
    %220 = vector.extract_strided_slice %147 {offsets = [0, 24], sizes = [8, 8], strides = [1, 1]} : vector<8x32xf32> to vector<8x8xf32>
    %221 = vector.extract_strided_slice %155 {offsets = [0, 24], sizes = [8, 8], strides = [1, 1]} : vector<8x32xf32> to vector<8x8xf32>
    "tpu.trace_start"() <{level = 10 : i32, message = "qd,kd->qk"}> : () -> ()
    %cst_93 = arith.constant dense<0.000000e+00> : vector<8x8xf32>
    %222 = tpu.matmul %220, %221, %cst_93 {dimension_numbers = #tpu.dot_dimension_numbers<[1], [1], [0], [0], [0, 0, 1, 0], [], []>} : vector<8x8xf32>, vector<8x8xf32>, vector<8x8xf32> -> vector<8x8xf32>
    "tpu.trace_stop"() : () -> ()
    %cst_94 = arith.constant 0.353553385 : f32
    %223 = vector.broadcast %cst_94 : f32 to vector<8x8xf32>
    %224 = arith.mulf %222, %223 : vector<8x8xf32>
    %cst_95 = arith.constant -1.000000e+10 : f32
    %225 = vector.shape_cast %13 : vector<1x8xi1> to vector<1x8xi1>
    %226 = vector.broadcast %225 : vector<1x8xi1> to vector<8x8xi1>
    %227 = vector.broadcast %cst_95 : f32 to vector<8x8xf32>
    %228 = arith.select %226, %227, %224 : vector<8x8xi1>, vector<8x8xf32>
    %cst_96 = arith.constant dense<0xFF800000> : vector<8xf32>
    %229 = vector.multi_reduction <maximumf>, %228, %cst_96 [1] : vector<8x8xf32> to vector<8xf32>
    %230 = vector.shape_cast %229 : vector<8xf32> to vector<8x1xf32>
    %231 = vector.broadcast %230 : vector<8x1xf32> to vector<8x8xf32>
    %232 = arith.subf %228, %231 : vector<8x8xf32>
    %233 = math.exp %232 : vector<8x8xf32>
    %cst_97 = arith.constant dense<0.000000e+00> : vector<8xf32>
    %234 = vector.multi_reduction <add>, %233, %cst_97 [1] : vector<8x8xf32> to vector<8xf32>
    %235 = vector.shape_cast %234 : vector<8xf32> to vector<8x1xf32>
    %236 = tpu.reciprocal %235 {approx = true} : vector<8x1xf32> -> vector<8x1xf32>
    %237 = vector.broadcast %236 : vector<8x1xf32> to vector<8x8xf32>
    %238 = arith.mulf %233, %237 : vector<8x8xf32>
    %239 = vector.extract_strided_slice %156 {offsets = [0, 24], sizes = [8, 8], strides = [1, 1]} : vector<8x32xf32> to vector<8x8xf32>
    "tpu.trace_start"() <{level = 10 : i32, message = "qk,kd->qd"}> : () -> ()
    %cst_98 = arith.constant dense<0.000000e+00> : vector<8x8xf32>
    %240 = tpu.matmul %238, %239, %cst_98 {dimension_numbers = #tpu.dot_dimension_numbers<[1], [0], [0], [1], [0, 0, 1, 1], [], []>} : vector<8x8xf32>, vector<8x8xf32>, vector<8x8xf32> -> vector<8x8xf32>
    "tpu.trace_stop"() : () -> ()
    %241 = tpu.concatenate %177, %198, %219, %240 in 1 : vector<8x8xf32>, vector<8x8xf32>, vector<8x8xf32>, vector<8x8xf32> -> vector<8x32xf32>
    %c0_99 = arith.constant 0 : index
    %c0_100 = arith.constant 0 : index
    %c0_101 = arith.constant 0 : index
    %242 = vector.load %arg16[%c0_99, %c0_100, %c0_101] : memref<1x32x32xf32, #tpu.memory_space<vmem>>, vector<1x32x32xf32>
    %243 = vector.shape_cast %242 : vector<1x32x32xf32> to vector<32x32xf32>
    %cst_102 = arith.constant dense<0.000000e+00> : vector<8x32xf32>
    %244 = tpu.matmul %241, %243, %cst_102 {dimension_numbers = #tpu.dot_dimension_numbers<[1], [0], [0], [1], [0, 0, 1, 1], [], []>} : vector<8x32xf32>, vector<32x32xf32>, vector<8x32xf32> -> vector<8x32xf32>
    %c0_103 = arith.constant 0 : index
    %c0_104 = arith.constant 0 : index
    %c0_105 = arith.constant 0 : index
    %245 = vector.load %arg17[%c0_103, %c0_104, %c0_105] : memref<1x1x32xf32, #tpu.memory_space<vmem>>, vector<1x1x32xf32>
    %246 = vector.shape_cast %245 : vector<1x1x32xf32> to vector<1x32xf32>
    %247 = vector.broadcast %246 : vector<1x32xf32> to vector<8x32xf32>
    %248 = arith.addf %244, %247 : vector<8x32xf32>
    %249 = arith.addf %140, %248 : vector<8x32xf32>
    %cst_106 = arith.constant dense<0.000000e+00> : vector<8xf32>
    %250 = vector.multi_reduction <add>, %249, %cst_106 [1] : vector<8x32xf32> to vector<8xf32>
    %251 = vector.shape_cast %250 : vector<8xf32> to vector<8x1xf32>
    %cst_107 = arith.constant 3.200000e+01 : f32
    %252 = vector.broadcast %cst_107 : f32 to vector<8x1xf32>
    %253 = arith.divf %251, %252 : vector<8x1xf32>
    %254 = vector.broadcast %253 : vector<8x1xf32> to vector<8x32xf32>
    %255 = arith.subf %249, %254 : vector<8x32xf32>
    %256 = arith.mulf %255, %255 : vector<8x32xf32>
    %cst_108 = arith.constant dense<0.000000e+00> : vector<8xf32>
    %257 = vector.multi_reduction <add>, %256, %cst_108 [1] : vector<8x32xf32> to vector<8xf32>
    %258 = vector.shape_cast %257 : vector<8xf32> to vector<8x1xf32>
    %cst_109 = arith.constant 3.100000e+01 : f32
    %259 = vector.broadcast %cst_109 : f32 to vector<8x1xf32>
    %260 = arith.divf %258, %259 : vector<8x1xf32>
    %c0_110 = arith.constant 0 : index
    %c0_111 = arith.constant 0 : index
    %c0_112 = arith.constant 0 : index
    %261 = vector.load %arg20[%c0_110, %c0_111, %c0_112] : memref<1x1x32xf32, #tpu.memory_space<vmem>>, vector<1x1x32xf32>
    %262 = vector.shape_cast %261 : vector<1x1x32xf32> to vector<1x32xf32>
    %263 = math.sqrt %260 : vector<8x1xf32>
    %cst_113 = arith.constant 9.99999996E-13 : f32
    %264 = vector.broadcast %cst_113 : f32 to vector<8x1xf32>
    %265 = arith.addf %263, %264 : vector<8x1xf32>
    %266 = vector.broadcast %265 : vector<8x1xf32> to vector<8x32xf32>
    %267 = arith.divf %255, %266 : vector<8x32xf32>
    %268 = vector.broadcast %262 : vector<1x32xf32> to vector<8x32xf32>
    %269 = arith.mulf %268, %267 : vector<8x32xf32>
    %c0_114 = arith.constant 0 : index
    %c0_115 = arith.constant 0 : index
    %c0_116 = arith.constant 0 : index
    %270 = vector.load %arg21[%c0_114, %c0_115, %c0_116] : memref<1x1x32xf32, #tpu.memory_space<vmem>>, vector<1x1x32xf32>
    %271 = vector.shape_cast %270 : vector<1x1x32xf32> to vector<1x32xf32>
    %272 = vector.broadcast %271 : vector<1x32xf32> to vector<8x32xf32>
    %273 = arith.addf %269, %272 : vector<8x32xf32>
    %c0_117 = arith.constant 0 : index
    %c0_118 = arith.constant 0 : index
    %c0_119 = arith.constant 0 : index
    %274 = vector.load %arg24[%c0_117, %c0_118, %c0_119] : memref<1x32x64xf32, #tpu.memory_space<vmem>>, vector<1x32x64xf32>
    %275 = vector.shape_cast %274 : vector<1x32x64xf32> to vector<32x64xf32>
    %cst_120 = arith.constant dense<0.000000e+00> : vector<8x64xf32>
    %276 = tpu.matmul %273, %275, %cst_120 {dimension_numbers = #tpu.dot_dimension_numbers<[1], [0], [0], [1], [0, 0, 1, 1], [], []>} : vector<8x32xf32>, vector<32x64xf32>, vector<8x64xf32> -> vector<8x64xf32>
    %c0_121 = arith.constant 0 : index
    %c0_122 = arith.constant 0 : index
    %c0_123 = arith.constant 0 : index
    %277 = vector.load %arg25[%c0_121, %c0_122, %c0_123] : memref<1x1x64xf32, #tpu.memory_space<vmem>>, vector<1x1x64xf32>
    %278 = vector.shape_cast %277 : vector<1x1x64xf32> to vector<1x64xf32>
    %279 = vector.broadcast %278 : vector<1x64xf32> to vector<8x64xf32>
    %280 = arith.addf %276, %279 : vector<8x64xf32>
    %cst_124 = arith.constant 0.000000e+00 : f32
    %281 = vector.broadcast %cst_124 : f32 to vector<8x64xf32>
    %282 = arith.maximumf %280, %281 : vector<8x64xf32>
    %c0_125 = arith.constant 0 : index
    %c0_126 = arith.constant 0 : index
    %c0_127 = arith.constant 0 : index
    %283 = vector.load %arg26[%c0_125, %c0_126, %c0_127] : memref<1x64x32xf32, #tpu.memory_space<vmem>>, vector<1x64x32xf32>
    %284 = vector.shape_cast %283 : vector<1x64x32xf32> to vector<64x32xf32>
    %cst_128 = arith.constant dense<0.000000e+00> : vector<8x32xf32>
    %285 = tpu.matmul %282, %284, %cst_128 {dimension_numbers = #tpu.dot_dimension_numbers<[1], [0], [0], [1], [0, 0, 1, 1], [], []>} : vector<8x64xf32>, vector<64x32xf32>, vector<8x32xf32> -> vector<8x32xf32>
    %c0_129 = arith.constant 0 : index
    %c0_130 = arith.constant 0 : index
    %c0_131 = arith.constant 0 : index
    %286 = vector.load %arg27[%c0_129, %c0_130, %c0_131] : memref<1x1x32xf32, #tpu.memory_space<vmem>>, vector<1x1x32xf32>
    %287 = vector.shape_cast %286 : vector<1x1x32xf32> to vector<1x32xf32>
    %288 = vector.broadcast %287 : vector<1x32xf32> to vector<8x32xf32>
    %289 = arith.addf %285, %288 : vector<8x32xf32>
    %290 = arith.addf %273, %289 : vector<8x32xf32>
    %cst_132 = arith.constant dense<0.000000e+00> : vector<8xf32>
    %291 = vector.multi_reduction <add>, %290, %cst_132 [1] : vector<8x32xf32> to vector<8xf32>
    %292 = vector.shape_cast %291 : vector<8xf32> to vector<8x1xf32>
    %cst_133 = arith.constant 3.200000e+01 : f32
    %293 = vector.broadcast %cst_133 : f32 to vector<8x1xf32>
    %294 = arith.divf %292, %293 : vector<8x1xf32>
    %295 = vector.broadcast %294 : vector<8x1xf32> to vector<8x32xf32>
    %296 = arith.subf %290, %295 : vector<8x32xf32>
    %297 = arith.mulf %296, %296 : vector<8x32xf32>
    %cst_134 = arith.constant dense<0.000000e+00> : vector<8xf32>
    %298 = vector.multi_reduction <add>, %297, %cst_134 [1] : vector<8x32xf32> to vector<8xf32>
    %299 = vector.shape_cast %298 : vector<8xf32> to vector<8x1xf32>
    %cst_135 = arith.constant 3.100000e+01 : f32
    %300 = vector.broadcast %cst_135 : f32 to vector<8x1xf32>
    %301 = arith.divf %299, %300 : vector<8x1xf32>
    %c0_136 = arith.constant 0 : index
    %c0_137 = arith.constant 0 : index
    %c0_138 = arith.constant 0 : index
    %302 = vector.load %arg22[%c0_136, %c0_137, %c0_138] : memref<1x1x32xf32, #tpu.memory_space<vmem>>, vector<1x1x32xf32>
    %303 = vector.shape_cast %302 : vector<1x1x32xf32> to vector<1x32xf32>
    %304 = math.sqrt %301 : vector<8x1xf32>
    %cst_139 = arith.constant 9.99999996E-13 : f32
    %305 = vector.broadcast %cst_139 : f32 to vector<8x1xf32>
    %306 = arith.addf %304, %305 : vector<8x1xf32>
    %307 = vector.broadcast %306 : vector<8x1xf32> to vector<8x32xf32>
    %308 = arith.divf %296, %307 : vector<8x32xf32>
    %309 = vector.broadcast %303 : vector<1x32xf32> to vector<8x32xf32>
    %310 = arith.mulf %309, %308 : vector<8x32xf32>
    %c0_140 = arith.constant 0 : index
    %c0_141 = arith.constant 0 : index
    %c0_142 = arith.constant 0 : index
    %311 = vector.load %arg23[%c0_140, %c0_141, %c0_142] : memref<1x1x32xf32, #tpu.memory_space<vmem>>, vector<1x1x32xf32>
    %312 = vector.shape_cast %311 : vector<1x1x32xf32> to vector<1x32xf32>
    %313 = vector.broadcast %312 : vector<1x32xf32> to vector<8x32xf32>
    %314 = arith.addf %310, %313 : vector<8x32xf32>
    %c0_143 = arith.constant 0 : index
    %c0_144 = arith.constant 0 : index
    %315 = vector.load %arg37[%c0_143, %c0_144] : memref<8x32xf32, #tpu.memory_space<vmem>>, vector<8x32xf32>
    tpu.vector_store %arg37[%c0_143, %c0_144], %314 {strides = array<i32>} : memref<8x32xf32, #tpu.memory_space<vmem>>, vector<8x32xf32>,
    %c1_i32 = arith.constant 1 : i32
    %316 = arith.cmpi eq, %arg1, %c1_i32 : i32
    %317 = arith.extui %316 : i1 to i32
    %c0_i32_145 = arith.constant 0 : i32
    %318 = arith.cmpi ne, %317, %c0_i32_145 : i32
    scf.if %318 {
      %319 = vector.broadcast %7 : vector<8x1xf32> to vector<8x32xf32>
      %320 = arith.mulf %314, %319 : vector<8x32xf32>
      %cst_146 = arith.constant dense<0.000000e+00> : vector<32xf32>
      %321 = vector.multi_reduction <add>, %320, %cst_146 [0] : vector<8x32xf32> to vector<32xf32>
      %322 = vector.shape_cast %321 : vector<32xf32> to vector<1x32xf32>
      %cst_147 = arith.constant dense<0.000000e+00> : vector<1xf32>
      %323 = vector.multi_reduction <add>, %7, %cst_147 [0] : vector<8x1xf32> to vector<1xf32>
      %324 = vector.shape_cast %323 : vector<1xf32> to vector<1x1xf32>
      %325 = vector.broadcast %324 : vector<1x1xf32> to vector<1x32xf32>
      %326 = arith.divf %322, %325 : vector<1x32xf32>
      %c0_148 = arith.constant 0 : index
      %c0_149 = arith.constant 0 : index
      %327 = vector.load %arg28[%c0_148, %c0_149] : memref<32x256xf32, #tpu.memory_space<vmem>>, vector<32x256xf32>
      %cst_150 = arith.constant dense<0.000000e+00> : vector<1x256xf32>
      %328 = tpu.matmul %326, %327, %cst_150 {dimension_numbers = #tpu.dot_dimension_numbers<[1], [0], [0], [1], [0, 0, 1, 1], [], []>} : vector<1x32xf32>, vector<32x256xf32>, vector<1x256xf32> -> vector<1x256xf32>
      %c0_151 = arith.constant 0 : index
      %c0_152 = arith.constant 0 : index
      %329 = vector.load %arg29[%c0_151, %c0_152] : memref<1x256xf32, #tpu.memory_space<vmem>>, vector<1x256xf32>
      %330 = arith.addf %328, %329 : vector<1x256xf32>
      %cst_153 = arith.constant 0.000000e+00 : f32
      %331 = vector.broadcast %cst_153 : f32 to vector<1x256xf32>
      %332 = arith.maximumf %330, %331 : vector<1x256xf32>
      %c0_154 = arith.constant 0 : index
      %c0_155 = arith.constant 0 : index
      %333 = vector.load %arg30[%c0_154, %c0_155] : memref<256x64xf32, #tpu.memory_space<vmem>>, vector<256x64xf32>
      %cst_156 = arith.constant dense<0.000000e+00> : vector<1x64xf32>
      %334 = tpu.matmul %332, %333, %cst_156 {dimension_numbers = #tpu.dot_dimension_numbers<[1], [0], [0], [1], [0, 0, 1, 1], [], []>} : vector<1x256xf32>, vector<256x64xf32>, vector<1x64xf32> -> vector<1x64xf32>
      %c0_157 = arith.constant 0 : index
      %c0_158 = arith.constant 0 : index
      %335 = vector.load %arg31[%c0_157, %c0_158] : memref<1x64xf32, #tpu.memory_space<vmem>>, vector<1x64xf32>
      %336 = arith.addf %334, %335 : vector<1x64xf32>
      %cst_159 = arith.constant 0.000000e+00 : f32
      %337 = vector.broadcast %cst_159 : f32 to vector<1x64xf32>
      %338 = arith.maximumf %336, %337 : vector<1x64xf32>
      %c0_160 = arith.constant 0 : index
      %c0_161 = arith.constant 0 : index
      %339 = vector.load %arg32[%c0_160, %c0_161] : memref<64x32xf32, #tpu.memory_space<vmem>>, vector<64x32xf32>
      %cst_162 = arith.constant dense<0.000000e+00> : vector<1x32xf32>
      %340 = tpu.matmul %338, %339, %cst_162 {dimension_numbers = #tpu.dot_dimension_numbers<[1], [0], [0], [1], [0, 0, 1, 1], [], []>} : vector<1x64xf32>, vector<64x32xf32>, vector<1x32xf32> -> vector<1x32xf32>
      %c0_163 = arith.constant 0 : index
      %c0_164 = arith.constant 0 : index
      %341 = vector.load %arg33[%c0_163, %c0_164] : memref<1x32xf32, #tpu.memory_space<vmem>>, vector<1x32xf32>
      %342 = arith.addf %340, %341 : vector<1x32xf32>
      %cst_165 = arith.constant 0.000000e+00 : f32
      %343 = vector.broadcast %cst_165 : f32 to vector<1x32xf32>
      %344 = arith.maximumf %342, %343 : vector<1x32xf32>
      %c0_166 = arith.constant 0 : index
      %c0_167 = arith.constant 0 : index
      %345 = vector.load %arg34[%c0_166, %c0_167] : memref<32x1xf32, #tpu.memory_space<vmem>>, vector<32x1xf32>
      %cst_168 = arith.constant dense<0.000000e+00> : vector<1x1xf32>
      %346 = tpu.matmul %344, %345, %cst_168 {dimension_numbers = #tpu.dot_dimension_numbers<[1], [0], [0], [1], [0, 0, 1, 1], [], []>} : vector<1x32xf32>, vector<32x1xf32>, vector<1x1xf32> -> vector<1x1xf32>
      %c0_169 = arith.constant 0 : index
      %c0_170 = arith.constant 0 : index
      %347 = vector.load %arg35[%c0_169, %c0_170] : memref<1x1xf32, #tpu.memory_space<vmem>>, vector<1x1xf32>
      %348 = arith.addf %346, %347 : vector<1x1xf32>
      %c0_171 = arith.constant 0 : index
      %c0_172 = arith.constant 0 : index
      %c0_173 = arith.constant 0 : index
      %349 = vector.load %arg36[%c0_171, %c0_172, %c0_173] : memref<1x1x1xf32, #tpu.memory_space<vmem>>, vector<1x1x1xf32>
      %350 = vector.shape_cast %349 : vector<1x1x1xf32> to vector<1x1xf32>
      %351 = vector.shape_cast %348 : vector<1x1xf32> to vector<1x1x1xf32>
      tpu.vector_store %arg36[%c0_171, %c0_172, %c0_173], %351 {strides = array<i32>} : memref<1x1x1xf32, #tpu.memory_space<vmem>>, vector<1x1x1xf32>,
    } else {
    }
    return
  }
  func.func @transform_0(%arg0: i32, %arg1: i32) -> (i32, i32, i32) {
    %c0_i32 = arith.constant 0 : i32
    %c0_i32_0 = arith.constant 0 : i32
    %c0_i32_1 = arith.constant 0 : i32
    return %arg0, %c0_i32, %c0_i32_0 : i32, i32, i32
  }
  func.func @transform_1(%arg0: i32, %arg1: i32) -> (i32, i32, i32) {
    %c0_i32 = arith.constant 0 : i32
    %c0_i32_0 = arith.constant 0 : i32
    %c0_i32_1 = arith.constant 0 : i32
    return %arg0, %c0_i32, %c0_i32_0 : i32, i32, i32
  }
  func.func @transform_2(%arg0: i32, %arg1: i32) -> (i32, i32, i32) {
    %c0_i32 = arith.constant 0 : i32
    %c0_i32_0 = arith.constant 0 : i32
    %c0_i32_1 = arith.constant 0 : i32
    return %arg0, %c0_i32, %c0_i32_0 : i32, i32, i32
  }
  func.func @transform_3(%arg0: i32, %arg1: i32) -> (i32, i32, i32) {
    %c0_i32 = arith.constant 0 : i32
    %c0_i32_0 = arith.constant 0 : i32
    %c0_i32_1 = arith.constant 0 : i32
    return %arg0, %c0_i32, %c0_i32_0 : i32, i32, i32
  }
  func.func @transform_4(%arg0: i32, %arg1: i32) -> (i32, i32) {
    %c0_i32 = arith.constant 0 : i32
    %c0_i32_0 = arith.constant 0 : i32
    %c0_i32_1 = arith.constant 0 : i32
    return %c0_i32, %c0_i32_0 : i32, i32
  }
  func.func @transform_5(%arg0: i32, %arg1: i32) -> (i32, i32) {
    %c0_i32 = arith.constant 0 : i32
    %c0_i32_0 = arith.constant 0 : i32
    %c0_i32_1 = arith.constant 0 : i32
    return %c0_i32, %c0_i32_0 : i32, i32
  }
  func.func @transform_6(%arg0: i32, %arg1: i32) -> (i32, i32, i32) {
    %c0_i32 = arith.constant 0 : i32
    %c0_i32_0 = arith.constant 0 : i32
    %c0_i32_1 = arith.constant 0 : i32
    return %arg1, %c0_i32, %c0_i32_0 : i32, i32, i32
  }
  func.func @transform_7(%arg0: i32, %arg1: i32) -> (i32, i32, i32) {
    %c0_i32 = arith.constant 0 : i32
    %c0_i32_0 = arith.constant 0 : i32
    %c0_i32_1 = arith.constant 0 : i32
    return %arg1, %c0_i32, %c0_i32_0 : i32, i32, i32
  }
  func.func @transform_8(%arg0: i32, %arg1: i32) -> (i32, i32, i32) {
    %c0_i32 = arith.constant 0 : i32
    %c0_i32_0 = arith.constant 0 : i32
    %c0_i32_1 = arith.constant 0 : i32
    return %arg1, %c0_i32, %c0_i32_0 : i32, i32, i32
  }
  func.func @transform_9(%arg0: i32, %arg1: i32) -> (i32, i32, i32) {
    %c0_i32 = arith.constant 0 : i32
    %c0_i32_0 = arith.constant 0 : i32
    %c0_i32_1 = arith.constant 0 : i32
    return %arg1, %c0_i32, %c0_i32_0 : i32, i32, i32
  }
  func.func @transform_10(%arg0: i32, %arg1: i32) -> (i32, i32, i32) {
    %c0_i32 = arith.constant 0 : i32
    %c0_i32_0 = arith.constant 0 : i32
    %c0_i32_1 = arith.constant 0 : i32
    return %arg1, %c0_i32, %c0_i32_0 : i32, i32, i32
  }
  func.func @transform_11(%arg0: i32, %arg1: i32) -> (i32, i32, i32) {
    %c0_i32 = arith.constant 0 : i32
    %c0_i32_0 = arith.constant 0 : i32
    %c0_i32_1 = arith.constant 0 : i32
    return %arg1, %c0_i32, %c0_i32_0 : i32, i32, i32
  }
  func.func @transform_12(%arg0: i32, %arg1: i32) -> (i32, i32, i32) {
    %c0_i32 = arith.constant 0 : i32
    %c0_i32_0 = arith.constant 0 : i32
    %c0_i32_1 = arith.constant 0 : i32
    return %arg1, %c0_i32, %c0_i32_0 : i32, i32, i32
  }
  func.func @transform_13(%arg0: i32, %arg1: i32) -> (i32, i32, i32) {
    %c0_i32 = arith.constant 0 : i32
    %c0_i32_0 = arith.constant 0 : i32
    %c0_i32_1 = arith.constant 0 : i32
    return %arg1, %c0_i32, %c0_i32_0 : i32, i32, i32
  }
  func.func @transform_14(%arg0: i32, %arg1: i32) -> (i32, i32, i32) {
    %c0_i32 = arith.constant 0 : i32
    %c0_i32_0 = arith.constant 0 : i32
    %c0_i32_1 = arith.constant 0 : i32
    return %arg1, %c0_i32, %c0_i32_0 : i32, i32, i32
  }
  func.func @transform_15(%arg0: i32, %arg1: i32) -> (i32, i32, i32) {
    %c0_i32 = arith.constant 0 : i32
    %c0_i32_0 = arith.constant 0 : i32
    %c0_i32_1 = arith.constant 0 : i32
    return %arg1, %c0_i32, %c0_i32_0 : i32, i32, i32
  }
  func.func @transform_16(%arg0: i32, %arg1: i32) -> (i32, i32, i32) {
    %c0_i32 = arith.constant 0 : i32
    %c0_i32_0 = arith.constant 0 : i32
    %c0_i32_1 = arith.constant 0 : i32
    return %arg1, %c0_i32, %c0_i32_0 : i32, i32, i32
  }
  func.func @transform_17(%arg0: i32, %arg1: i32) -> (i32, i32, i32) {
    %c0_i32 = arith.constant 0 : i32
    %c0_i32_0 = arith.constant 0 : i32
    %c0_i32_1 = arith.constant 0 : i32
    return %arg1, %c0_i32, %c0_i32_0 : i32, i32, i32
  }
  func.func @transform_18(%arg0: i32, %arg1: i32) -> (i32, i32, i32) {
    %c0_i32 = arith.constant 0 : i32
    %c0_i32_0 = arith.constant 0 : i32
    %c0_i32_1 = arith.constant 0 : i32
    return %arg1, %c0_i32, %c0_i32_0 : i32, i32, i32
  }
  func.func @transform_19(%arg0: i32, %arg1: i32) -> (i32, i32, i32) {
    %c0_i32 = arith.constant 0 : i32
    %c0_i32_0 = arith.constant 0 : i32
    %c0_i32_1 = arith.constant 0 : i32
    return %arg1, %c0_i32, %c0_i32_0 : i32, i32, i32
  }
  func.func @transform_20(%arg0: i32, %arg1: i32) -> (i32, i32, i32) {
    %c0_i32 = arith.constant 0 : i32
    %c0_i32_0 = arith.constant 0 : i32
    %c0_i32_1 = arith.constant 0 : i32
    return %arg1, %c0_i32, %c0_i32_0 : i32, i32, i32
  }
  func.func @transform_21(%arg0: i32, %arg1: i32) -> (i32, i32, i32) {
    %c0_i32 = arith.constant 0 : i32
    %c0_i32_0 = arith.constant 0 : i32
    %c0_i32_1 = arith.constant 0 : i32
    return %arg1, %c0_i32, %c0_i32_0 : i32, i32, i32
  }
  func.func @transform_22(%arg0: i32, %arg1: i32) -> (i32, i32, i32) {
    %c0_i32 = arith.constant 0 : i32
    %c0_i32_0 = arith.constant 0 : i32
    %c0_i32_1 = arith.constant 0 : i32
    return %arg1, %c0_i32, %c0_i32_0 : i32, i32, i32
  }
  func.func @transform_23(%arg0: i32, %arg1: i32) -> (i32, i32, i32) {
    %c0_i32 = arith.constant 0 : i32
    %c0_i32_0 = arith.constant 0 : i32
    %c0_i32_1 = arith.constant 0 : i32
    return %arg1, %c0_i32, %c0_i32_0 : i32, i32, i32
  }
  func.func @transform_24(%arg0: i32, %arg1: i32) -> (i32, i32, i32) {
    %c0_i32 = arith.constant 0 : i32
    %c0_i32_0 = arith.constant 0 : i32
    %c0_i32_1 = arith.constant 0 : i32
    return %arg1, %c0_i32, %c0_i32_0 : i32, i32, i32
  }
  func.func @transform_25(%arg0: i32, %arg1: i32) -> (i32, i32, i32) {
    %c0_i32 = arith.constant 0 : i32
    %c0_i32_0 = arith.constant 0 : i32
    %c0_i32_1 = arith.constant 0 : i32
    return %arg1, %c0_i32, %c0_i32_0 : i32, i32, i32
  }
  func.func @transform_26(%arg0: i32, %arg1: i32) -> (i32, i32) {
    %c0_i32 = arith.constant 0 : i32
    %c0_i32_0 = arith.constant 0 : i32
    %c0_i32_1 = arith.constant 0 : i32
    return %c0_i32, %c0_i32_0 : i32, i32
  }
  func.func @transform_27(%arg0: i32, %arg1: i32) -> (i32, i32) {
    %c0_i32 = arith.constant 0 : i32
    %c0_i32_0 = arith.constant 0 : i32
    %c0_i32_1 = arith.constant 0 : i32
    return %c0_i32, %c0_i32_0 : i32, i32
  }
  func.func @transform_28(%arg0: i32, %arg1: i32) -> (i32, i32) {
    %c0_i32 = arith.constant 0 : i32
    %c0_i32_0 = arith.constant 0 : i32
    %c0_i32_1 = arith.constant 0 : i32
    return %c0_i32, %c0_i32_0 : i32, i32
  }
  func.func @transform_29(%arg0: i32, %arg1: i32) -> (i32, i32) {
    %c0_i32 = arith.constant 0 : i32
    %c0_i32_0 = arith.constant 0 : i32
    %c0_i32_1 = arith.constant 0 : i32
    return %c0_i32, %c0_i32_0 : i32, i32
  }
  func.func @transform_30(%arg0: i32, %arg1: i32) -> (i32, i32) {
    %c0_i32 = arith.constant 0 : i32
    %c0_i32_0 = arith.constant 0 : i32
    %c0_i32_1 = arith.constant 0 : i32
    return %c0_i32, %c0_i32_0 : i32, i32
  }
  func.func @transform_31(%arg0: i32, %arg1: i32) -> (i32, i32) {
    %c0_i32 = arith.constant 0 : i32
    %c0_i32_0 = arith.constant 0 : i32
    %c0_i32_1 = arith.constant 0 : i32
    return %c0_i32, %c0_i32_0 : i32, i32
  }
  func.func @transform_32(%arg0: i32, %arg1: i32) -> (i32, i32) {
    %c0_i32 = arith.constant 0 : i32
    %c0_i32_0 = arith.constant 0 : i32
    %c0_i32_1 = arith.constant 0 : i32
    return %c0_i32, %c0_i32_0 : i32, i32
  }
  func.func @transform_33(%arg0: i32, %arg1: i32) -> (i32, i32) {
    %c0_i32 = arith.constant 0 : i32
    %c0_i32_0 = arith.constant 0 : i32
    %c0_i32_1 = arith.constant 0 : i32
    return %c0_i32, %c0_i32_0 : i32, i32
  }
  func.func @transform_34(%arg0: i32, %arg1: i32) -> (i32, i32, i32) {
    %c0_i32 = arith.constant 0 : i32
    %c0_i32_0 = arith.constant 0 : i32
    %c0_i32_1 = arith.constant 0 : i32
    return %arg0, %c0_i32, %c0_i32_0 : i32, i32, i32
  }
}

</mosaic_0001>

<llo_original>
// kernel: tpu_custom_call.1
$region0: #{tpu_custom_call.1}
  #allocation0 [shape = 'u32[]', space=smem, size = 0x4, offset = 0x4, fixed_abs, tag = 'smem constant byte address 0x4 - core index']
  #allocation1 [shape = 'u32[144,128]{1,0:T(1,128)}', space=vmem, size = 0x12000, scoped, tag = 'internal scratch']
  #allocation2 [shape = 'f32[8,32]{1,0:T(8,128)}', space=vmem, size = 0x1000, scoped, tag = 'scratch operand']
  #allocation3 [shape = 'f32[1,1]{1,0:T(1,128)S(1)}', space=vmem, size = 0x200, scoped, tag = 'scoped memory for tpu_custom_call.1']
  %s0 = inlined_call_operand.smem [shape: u32[35], index: -1, kind: input, shape index: {}]
  %s1 = sld [smem:[%s0]]
  %s2 = scalar_lea.smem %s0, 1
  %s3 = sld [smem:[%s2]]
  %s4 = scalar_lea.smem %s0, 2
  %s5 = sld [smem:[%s4]]
  %s6 = scalar_lea.smem %s0, 3
  %s7 = sld [smem:[%s6]]
  %s8 = scalar_lea.smem %s0, 4
  %s9 = sld [smem:[%s8]]
  %s10 = scalar_lea.smem %s0, 5
  %s11 = sld [smem:[%s10]]
  %s12 = scalar_lea.smem %s0, 6
  %s13 = sld [smem:[%s12]]
  %s14 = scalar_lea.smem %s0, 7
  %s15 = sld [smem:[%s14]]
  %s16 = scalar_lea.smem %s0, 8
  %s17 = sld [smem:[%s16]]
  %s18 = scalar_lea.smem %s0, 9
  %s19 = sld [smem:[%s18]]
  %s20 = scalar_lea.smem %s0, 10
  %s21 = sld [smem:[%s20]]
  %s22 = scalar_lea.smem %s0, 11
  %s23 = sld [smem:[%s22]]
  %s24 = scalar_lea.smem %s0, 12
  %s25 = sld [smem:[%s24]]
  %s26 = scalar_lea.smem %s0, 13
  %s27 = sld [smem:[%s26]]
  %s28 = scalar_lea.smem %s0, 14
  %s29 = sld [smem:[%s28]]
  %s30 = scalar_lea.smem %s0, 15
  %s31 = sld [smem:[%s30]]
  %s32 = scalar_lea.smem %s0, 16
  %s33 = sld [smem:[%s32]]
  %s34 = scalar_lea.smem %s0, 17
  %s35 = sld [smem:[%s34]]
  %s36 = scalar_lea.smem %s0, 18
  %s37 = sld [smem:[%s36]]
  %s38 = scalar_lea.smem %s0, 19
  %s39 = sld [smem:[%s38]]
  %s40 = scalar_lea.smem %s0, 20
  %s41 = sld [smem:[%s40]]
  %s42 = scalar_lea.smem %s0, 21
  %s43 = sld [smem:[%s42]]
  %s44 = scalar_lea.smem %s0, 22
  %s45 = sld [smem:[%s44]]
  %s46 = scalar_lea.smem %s0, 23
  %s47 = sld [smem:[%s46]]
  %s48 = scalar_lea.smem %s0, 24
  %s49 = sld [smem:[%s48]]
  %s50 = scalar_lea.smem %s0, 25
  %s51 = sld [smem:[%s50]]
  %s52 = scalar_lea.smem %s0, 26
  %s53 = sld [smem:[%s52]]
  %s54 = scalar_lea.smem %s0, 27
  %s55 = sld [smem:[%s54]]
  %s56 = scalar_lea.smem %s0, 28
  %s57 = sld [smem:[%s56]]
  %s58 = scalar_lea.smem %s0, 29
  %s59 = sld [smem:[%s58]]
  %s60 = scalar_lea.smem %s0, 30
  %s61 = sld [smem:[%s60]]
  %s62 = scalar_lea.smem %s0, 31
  %s63 = sld [smem:[%s62]]
  %s64 = scalar_lea.smem %s0, 32
  %s65 = sld [smem:[%s64]]
  %s66 = scalar_lea.smem %s0, 33
  %s67 = sld [smem:[%s66]]
  %s68 = scalar_lea.smem %s0, 34
  %s69 = sld [smem:[%s68]]
  %s70 = sld [smem:[#allocation0]]
  $region185: #{tpu_custom_call.1} parent=0
    _
  %s72 = ssub.s32 1, %s70
  %s73 = scalar_select 0, %s72, %s70
  %v74 = vstv %s67
  %75 = vst [vmem:[#allocation3] sm:$0x1] %v74
  $region1: #{tpu_custom_call.1} parent=0
    #allocation4 [shape = 'u8[8192]{0}', space=vmem, size = 0x2000, scoped, tag = 'input window, operand 1']
    #allocation5 [shape = 's32[2]{0}', space=sflag, size = 0x8, scoped, tag = 'scoped memory for tpu_custom_call.1']
    #allocation6 [shape = 'u8[512]{0}', space=vmem, size = 0x400, scoped, tag = 'input window, operand 5, single buffered']
    #allocation7 [shape = 's32[1]{0}', space=sflag, size = 0x4, scoped, tag = 'scoped memory for tpu_custom_call.1']
    %76 = vsyncpa [#allocation5], 0
    %s77 = scalar_lea.sflag [#allocation5], 1
    %78 = vsyncpa %s77, 0
    %79 = vsyncpa [#allocation7], 0
    loop: start=0, step=1, limit=6
    $region2: #{tpu_custom_call.1} parent=1 // loop_pre_header
      _
    $region3: #{tpu_custom_call.1} parent=1 // loop_header
      %s81 = sphi 0, %s85
      %p82 = scmp.ge.s32.totalorder %s81, 6
      %s88 = sphi 0, %s100
      %s89 = sphi 0, %s96
      %s90 = sphi 0, %s88
      %s91 = sphi 0, %s89
      %s92 = sphi 0, %s90
      %s93 = sphi 0, %s91
      %s103 = sphi 0, %s105
      %s106 = sphi 0, %s103
      %s107 = sphi 0, %s106
      %s123 = sphi 0, %s107
      %s129 = sphi 0, %s131
      %s132 = sphi 0, %s129
      %s133 = sphi 0, %s132
      %s149 = sphi 0, %s133
      %s155 = sphi 0, %s157
      %s158 = sphi 0, %s155
      %s159 = sphi 0, %s158
      %s175 = sphi 0, %s159
      %s181 = sphi 0, %s183
      %s184 = sphi 0, %s181
      %s185 = sphi 0, %s184
      %s201 = sphi 0, %s185
      %s205 = sphi 0, %s205
      %s207 = sphi 0, %s205
      %s208 = sphi 0, %s207
      %s222 = sphi 0, %s208
      %s226 = sphi 0, %s226
      %s228 = sphi 0, %s226
      %s229 = sphi 0, %s228
      %s243 = sphi 0, %s229
      %s249 = sphi 0, %s251
      %s252 = sphi 0, %s249
      %s253 = sphi 0, %s252
      %s269 = sphi 0, %s253
      %s275 = sphi 0, %s277
      %s278 = sphi 0, %s275
      %s279 = sphi 0, %s278
      %s295 = sphi 0, %s279
      %s301 = sphi 0, %s303
      %s304 = sphi 0, %s301
      %s305 = sphi 0, %s304
      %s321 = sphi 0, %s305
      %s327 = sphi 0, %s329
      %s330 = sphi 0, %s327
      %s331 = sphi 0, %s330
      %s347 = sphi 0, %s331
      %s353 = sphi 0, %s355
      %s356 = sphi 0, %s353
      %s357 = sphi 0, %s356
      %s373 = sphi 0, %s357
      %s379 = sphi 0, %s381
      %s382 = sphi 0, %s379
      %s383 = sphi 0, %s382
      %s399 = sphi 0, %s383
      %s405 = sphi 0, %s407
      %s408 = sphi 0, %s405
      %s409 = sphi 0, %s408
      %s425 = sphi 0, %s409
      %s431 = sphi 0, %s433
      %s434 = sphi 0, %s431
      %s435 = sphi 0, %s434
      %s451 = sphi 0, %s435
      %s457 = sphi 0, %s459
      %s460 = sphi 0, %s457
      %s461 = sphi 0, %s460
      %s477 = sphi 0, %s461
      %s483 = sphi 0, %s485
      %s486 = sphi 0, %s483
      %s487 = sphi 0, %s486
      %s503 = sphi 0, %s487
      %s509 = sphi 0, %s511
      %s512 = sphi 0, %s509
      %s513 = sphi 0, %s512
      %s529 = sphi 0, %s513
      %s535 = sphi 0, %s537
      %s538 = sphi 0, %s535
      %s539 = sphi 0, %s538
      %s555 = sphi 0, %s539
      %s561 = sphi 0, %s563
      %s564 = sphi 0, %s561
      %s565 = sphi 0, %s564
      %s581 = sphi 0, %s565
      %s587 = sphi 0, %s589
      %s590 = sphi 0, %s587
      %s591 = sphi 0, %s590
      %s607 = sphi 0, %s591
      %s613 = sphi 0, %s615
      %s616 = sphi 0, %s613
      %s617 = sphi 0, %s616
      %s633 = sphi 0, %s617
      %s639 = sphi 0, %s641
      %s642 = sphi 0, %s639
      %s643 = sphi 0, %s642
      %s659 = sphi 0, %s643
      %s665 = sphi 0, %s667
      %s668 = sphi 0, %s665
      %s669 = sphi 0, %s668
      %s685 = sphi 0, %s669
      %s691 = sphi 0, %s693
      %s694 = sphi 0, %s691
      %s695 = sphi 0, %s694
      %s711 = sphi 0, %s695
      %s717 = sphi 0, %s719
      %s720 = sphi 0, %s717
      %s721 = sphi 0, %s720
      %s737 = sphi 0, %s721
      %s743 = sphi 0, %s745
      %s746 = sphi 0, %s743
      %s747 = sphi 0, %s746
      %s763 = sphi 0, %s747
      %s767 = sphi 0, %s767
      %s769 = sphi 0, %s767
      %s770 = sphi 0, %s769
      %s784 = sphi 0, %s770
      %s788 = sphi 0, %s788
      %s790 = sphi 0, %s788
      %s791 = sphi 0, %s790
      %s805 = sphi 0, %s791
      %s809 = sphi 0, %s809
      %s811 = sphi 0, %s809
      %s812 = sphi 0, %s811
      %s826 = sphi 0, %s812
      %s830 = sphi 0, %s830
      %s832 = sphi 0, %s830
      %s833 = sphi 0, %s832
      %s847 = sphi 0, %s833
      %s851 = sphi 0, %s851
      %s853 = sphi 0, %s851
      %s854 = sphi 0, %s853
      %s868 = sphi 0, %s854
      %s872 = sphi 0, %s872
      %s874 = sphi 0, %s872
      %s875 = sphi 0, %s874
      %s889 = sphi 0, %s875
      %s893 = sphi 0, %s893
      %s895 = sphi 0, %s893
      %s896 = sphi 0, %s895
      %s910 = sphi 0, %s896
      %s914 = sphi 0, %s914
      %s916 = sphi 0, %s914
      %s917 = sphi 0, %s916
      %s931 = sphi 0, %s917
      %s937 = sphi 0, %s939
      %s940 = sphi 0, %s937
      %s941 = sphi 0, %s940
      %s957 = sphi 0, %s941
    $region4: #{tpu_custom_call.1} parent=1 // loop_header_branch
      %84 = sbr.rel (%p82) target = $region8
    $region5: #{tpu_custom_call.1} parent=1 // loop_body
      %s86 = ssub.s32 %s81, 1
      %s87 = ssub.s32 %s81, 2
      %s94 = sadd.s32 1, %s89
      %p95 = scmp.ge.s32.totalorder %s94, 2
      %s96 = scalar_select %p95, 0, %s94
      %s97 = sadd.s32 1, %s88
      %s98 = scalar_select %p95, %s97, %s88
      %p99 = scmp.ge.s32.totalorder %s98, 2
      %s100 = scalar_select %p99, 0, %s98
      %s101 = ssub.s32 %s88, %s100
      %p102 = scmp.eq.s32.totalorder %s101, 0
      %s104 = sadd.s32 %s103, 1
      %s105 = scalar_select %p102, %s103, %s104
      %p108 = pneg %p102
      %p109 = scmp.eq.s32.totalorder %s81, 3
      %p110 = por %p108, %p109
      %p111 = scmp.ne.s32.totalorder %s103, %s106
      %p112 = scmp.eq.s32.totalorder %s81, 0
      %p113 = por %p111, %p112
      %p114 = scmp.ne.s32.totalorder %s103, %s106
      %p115 = scmp.eq.s32.totalorder %s86, 3
      %p116 = por %p114, %p115
      %p117 = scmp.ne.s32.totalorder %s106, %s107
      %p118 = scmp.eq.s32.totalorder %s86, 0
      %p119 = por %p117, %p118
      %p120 = scmp.ne.s32.totalorder %s106, %s107
      %p121 = scmp.eq.s32.totalorder %s87, 3
      %p122 = por %p120, %p121
      %p124 = scmp.ne.s32.totalorder %s107, %s123
      %p125 = scmp.eq.s32.totalorder %s87, 0
      %p126 = por %p124, %p125
      %s127 = ssub.s32 %s88, %s100
      %p128 = scmp.eq.s32.totalorder %s127, 0
      %s130 = sadd.s32 %s129, 1
      %s131 = scalar_select %p128, %s129, %s130
      %p134 = pneg %p128
      %p135 = scmp.eq.s32.totalorder %s81, 3
      %p136 = por %p134, %p135
      %p137 = scmp.ne.s32.totalorder %s129, %s132
      %p138 = scmp.eq.s32.totalorder %s81, 0
      %p139 = por %p137, %p138
      %p140 = scmp.ne.s32.totalorder %s129, %s132
      %p141 = scmp.eq.s32.totalorder %s86, 3
      %p142 = por %p140, %p141
      %p143 = scmp.ne.s32.totalorder %s132, %s133
      %p144 = scmp.eq.s32.totalorder %s86, 0
      %p145 = por %p143, %p144
      %p146 = scmp.ne.s32.totalorder %s132, %s133
      %p147 = scmp.eq.s32.totalorder %s87, 3
      %p148 = por %p146, %p147
      %p150 = scmp.ne.s32.totalorder %s133, %s149
      %p151 = scmp.eq.s32.totalorder %s87, 0
      %p152 = por %p150, %p151
      %s153 = ssub.s32 %s88, %s100
      %p154 = scmp.eq.s32.totalorder %s153, 0
      %s156 = sadd.s32 %s155, 1
      %s157 = scalar_select %p154, %s155, %s156
      %p160 = pneg %p154
      %p161 = scmp.eq.s32.totalorder %s81, 3
      %p162 = por %p160, %p161
      %p163 = scmp.ne.s32.totalorder %s155, %s158
      %p164 = scmp.eq.s32.totalorder %s81, 0
      %p165 = por %p163, %p164
      %p166 = scmp.ne.s32.totalorder %s155, %s158
      %p167 = scmp.eq.s32.totalorder %s86, 3
      %p168 = por %p166, %p167
      %p169 = scmp.ne.s32.totalorder %s158, %s159
      %p170 = scmp.eq.s32.totalorder %s86, 0
      %p171 = por %p169, %p170
      %p172 = scmp.ne.s32.totalorder %s158, %s159
      %p173 = scmp.eq.s32.totalorder %s87, 3
      %p174 = por %p172, %p173
      %p176 = scmp.ne.s32.totalorder %s159, %s175
      %p177 = scmp.eq.s32.totalorder %s87, 0
      %p178 = por %p176, %p177
      %s179 = ssub.s32 %s88, %s100
      %p180 = scmp.eq.s32.totalorder %s179, 0
      %s182 = sadd.s32 %s181, 1
      %s183 = scalar_select %p180, %s181, %s182
      %p186 = pneg %p180
      %p187 = scmp.eq.s32.totalorder %s81, 3
      %p188 = por %p186, %p187
      %p189 = scmp.ne.s32.totalorder %s181, %s184
      %p190 = scmp.eq.s32.totalorder %s81, 0
      %p191 = por %p189, %p190
      %p192 = scmp.ne.s32.totalorder %s181, %s184
      %p193 = scmp.eq.s32.totalorder %s86, 3
      %p194 = por %p192, %p193
      %p195 = scmp.ne.s32.totalorder %s184, %s185
      %p196 = scmp.eq.s32.totalorder %s86, 0
      %p197 = por %p195, %p196
      %p198 = scmp.ne.s32.totalorder %s184, %s185
      %p199 = scmp.eq.s32.totalorder %s87, 3
      %p200 = por %p198, %p199
      %p202 = scmp.ne.s32.totalorder %s185, %s201
      %p203 = scmp.eq.s32.totalorder %s87, 0
      %p204 = por %p202, %p203
      %s206 = sadd.s32 %s205, 1
      %p209 = scmp.eq.s32.totalorder %s81, 3
      %p210 = scmp.ne.s32.totalorder %s205, %s207
      %p211 = scmp.eq.s32.totalorder %s81, 0
      %p212 = por %p210, %p211
      %p213 = scmp.ne.s32.totalorder %s205, %s207
      %p214 = scmp.eq.s32.totalorder %s86, 3
      %p215 = por %p213, %p214
      %p216 = scmp.ne.s32.totalorder %s207, %s208
      %p217 = scmp.eq.s32.totalorder %s86, 0
      %p218 = por %p216, %p217
      %p219 = scmp.ne.s32.totalorder %s207, %s208
      %p220 = scmp.eq.s32.totalorder %s87, 3
      %p221 = por %p219, %p220
      %p223 = scmp.ne.s32.totalorder %s208, %s222
      %p224 = scmp.eq.s32.totalorder %s87, 0
      %p225 = por %p223, %p224
      %s227 = sadd.s32 %s226, 1
      %p230 = scmp.eq.s32.totalorder %s81, 3
      %p231 = scmp.ne.s32.totalorder %s226, %s228
      %p232 = scmp.eq.s32.totalorder %s81, 0
      %p233 = por %p231, %p232
      %p234 = scmp.ne.s32.totalorder %s226, %s228
      %p235 = scmp.eq.s32.totalorder %s86, 3
      %p236 = por %p234, %p235
      %p237 = scmp.ne.s32.totalorder %s228, %s229
      %p238 = scmp.eq.s32.totalorder %s86, 0
      %p239 = por %p237, %p238
      %p240 = scmp.ne.s32.totalorder %s228, %s229
      %p241 = scmp.eq.s32.totalorder %s87, 3
      %p242 = por %p240, %p241
      %p244 = scmp.ne.s32.totalorder %s229, %s243
      %p245 = scmp.eq.s32.totalorder %s87, 0
      %p246 = por %p244, %p245
      %s247 = ssub.s32 %s89, %s96
      %p248 = scmp.eq.s32.totalorder %s247, 0
      %s250 = sadd.s32 %s249, 1
      %s251 = scalar_select %p248, %s249, %s250
      %p254 = pneg %p248
      %p255 = scmp.eq.s32.totalorder %s81, 3
      %p256 = por %p254, %p255
      %p257 = scmp.ne.s32.totalorder %s249, %s252
      %p258 = scmp.eq.s32.totalorder %s81, 0
      %p259 = por %p257, %p258
      %p260 = scmp.ne.s32.totalorder %s249, %s252
      %p261 = scmp.eq.s32.totalorder %s86, 3
      %p262 = por %p260, %p261
      %p263 = scmp.ne.s32.totalorder %s252, %s253
      %p264 = scmp.eq.s32.totalorder %s86, 0
      %p265 = por %p263, %p264
      %p266 = scmp.ne.s32.totalorder %s252, %s253
      %p267 = scmp.eq.s32.totalorder %s87, 3
      %p268 = por %p266, %p267
      %p270 = scmp.ne.s32.totalorder %s253, %s269
      %p271 = scmp.eq.s32.totalorder %s87, 0
      %p272 = por %p270, %p271
      %s273 = ssub.s32 %s89, %s96
      %p274 = scmp.eq.s32.totalorder %s273, 0
      %s276 = sadd.s32 %s275, 1
      %s277 = scalar_select %p274, %s275, %s276
      %p280 = pneg %p274
      %p281 = scmp.eq.s32.totalorder %s81, 3
      %p282 = por %p280, %p281
      %p283 = scmp.ne.s32.totalorder %s275, %s278
      %p284 = scmp.eq.s32.totalorder %s81, 0
      %p285 = por %p283, %p284
      %p286 = scmp.ne.s32.totalorder %s275, %s278
      %p287 = scmp.eq.s32.totalorder %s86, 3
      %p288 = por %p286, %p287
      %p289 = scmp.ne.s32.totalorder %s278, %s279
      %p290 = scmp.eq.s32.totalorder %s86, 0
      %p291 = por %p289, %p290
      %p292 = scmp.ne.s32.totalorder %s278, %s279
      %p293 = scmp.eq.s32.totalorder %s87, 3
      %p294 = por %p292, %p293
      %p296 = scmp.ne.s32.totalorder %s279, %s295
      %p297 = scmp.eq.s32.totalorder %s87, 0
      %p298 = por %p296, %p297
      %s299 = ssub.s32 %s89, %s96
      %p300 = scmp.eq.s32.totalorder %s299, 0
      %s302 = sadd.s32 %s301, 1
      %s303 = scalar_select %p300, %s301, %s302
      %p306 = pneg %p300
      %p307 = scmp.eq.s32.totalorder %s81, 3
      %p308 = por %p306, %p307
      %p309 = scmp.ne.s32.totalorder %s301, %s304
      %p310 = scmp.eq.s32.totalorder %s81, 0
      %p311 = por %p309, %p310
      %p312 = scmp.ne.s32.totalorder %s301, %s304
      %p313 = scmp.eq.s32.totalorder %s86, 3
      %p314 = por %p312, %p313
      %p315 = scmp.ne.s32.totalorder %s304, %s305
      %p316 = scmp.eq.s32.totalorder %s86, 0
      %p317 = por %p315, %p316
      %p318 = scmp.ne.s32.totalorder %s304, %s305
      %p319 = scmp.eq.s32.totalorder %s87, 3
      %p320 = por %p318, %p319
      %p322 = scmp.ne.s32.totalorder %s305, %s321
      %p323 = scmp.eq.s32.totalorder %s87, 0
      %p324 = por %p322, %p323
      %s325 = ssub.s32 %s89, %s96
      %p326 = scmp.eq.s32.totalorder %s325, 0
      %s328 = sadd.s32 %s327, 1
      %s329 = scalar_select %p326, %s327, %s328
      %p332 = pneg %p326
      %p333 = scmp.eq.s32.totalorder %s81, 3
      %p334 = por %p332, %p333
      %p335 = scmp.ne.s32.totalorder %s327, %s330
      %p336 = scmp.eq.s32.totalorder %s81, 0
      %p337 = por %p335, %p336
      %p338 = scmp.ne.s32.totalorder %s327, %s330
      %p339 = scmp.eq.s32.totalorder %s86, 3
      %p340 = por %p338, %p339
      %p341 = scmp.ne.s32.totalorder %s330, %s331
      %p342 = scmp.eq.s32.totalorder %s86, 0
      %p343 = por %p341, %p342
      %p344 = scmp.ne.s32.totalorder %s330, %s331
      %p345 = scmp.eq.s32.totalorder %s87, 3
      %p346 = por %p344, %p345
      %p348 = scmp.ne.s32.totalorder %s331, %s347
      %p349 = scmp.eq.s32.totalorder %s87, 0
      %p350 = por %p348, %p349
      %s351 = ssub.s32 %s89, %s96
      %p352 = scmp.eq.s32.totalorder %s351, 0
      %s354 = sadd.s32 %s353, 1
      %s355 = scalar_select %p352, %s353, %s354
      %p358 = pneg %p352
      %p359 = scmp.eq.s32.totalorder %s81, 3
      %p360 = por %p358, %p359
      %p361 = scmp.ne.s32.totalorder %s353, %s356
      %p362 = scmp.eq.s32.totalorder %s81, 0
      %p363 = por %p361, %p362
      %p364 = scmp.ne.s32.totalorder %s353, %s356
      %p365 = scmp.eq.s32.totalorder %s86, 3
      %p366 = por %p364, %p365
      %p367 = scmp.ne.s32.totalorder %s356, %s357
      %p368 = scmp.eq.s32.totalorder %s86, 0
      %p369 = por %p367, %p368
      %p370 = scmp.ne.s32.totalorder %s356, %s357
      %p371 = scmp.eq.s32.totalorder %s87, 3
      %p372 = por %p370, %p371
      %p374 = scmp.ne.s32.totalorder %s357, %s373
      %p375 = scmp.eq.s32.totalorder %s87, 0
      %p376 = por %p374, %p375
      %s377 = ssub.s32 %s89, %s96
      %p378 = scmp.eq.s32.totalorder %s377, 0
      %s380 = sadd.s32 %s379, 1
      %s381 = scalar_select %p378, %s379, %s380
      %p384 = pneg %p378
      %p385 = scmp.eq.s32.totalorder %s81, 3
      %p386 = por %p384, %p385
      %p387 = scmp.ne.s32.totalorder %s379, %s382
      %p388 = scmp.eq.s32.totalorder %s81, 0
      %p389 = por %p387, %p388
      %p390 = scmp.ne.s32.totalorder %s379, %s382
      %p391 = scmp.eq.s32.totalorder %s86, 3
      %p392 = por %p390, %p391
      %p393 = scmp.ne.s32.totalorder %s382, %s383
      %p394 = scmp.eq.s32.totalorder %s86, 0
      %p395 = por %p393, %p394
      %p396 = scmp.ne.s32.totalorder %s382, %s383
      %p397 = scmp.eq.s32.totalorder %s87, 3
      %p398 = por %p396, %p397
      %p400 = scmp.ne.s32.totalorder %s383, %s399
      %p401 = scmp.eq.s32.totalorder %s87, 0
      %p402 = por %p400, %p401
      %s403 = ssub.s32 %s89, %s96
      %p404 = scmp.eq.s32.totalorder %s403, 0
      %s406 = sadd.s32 %s405, 1
      %s407 = scalar_select %p404, %s405, %s406
      %p410 = pneg %p404
      %p411 = scmp.eq.s32.totalorder %s81, 3
      %p412 = por %p410, %p411
      %p413 = scmp.ne.s32.totalorder %s405, %s408
      %p414 = scmp.eq.s32.totalorder %s81, 0
      %p415 = por %p413, %p414
      %p416 = scmp.ne.s32.totalorder %s405, %s408
      %p417 = scmp.eq.s32.totalorder %s86, 3
      %p418 = por %p416, %p417
      %p419 = scmp.ne.s32.totalorder %s408, %s409
      %p420 = scmp.eq.s32.totalorder %s86, 0
      %p421 = por %p419, %p420
      %p422 = scmp.ne.s32.totalorder %s408, %s409
      %p423 = scmp.eq.s32.totalorder %s87, 3
      %p424 = por %p422, %p423
      %p426 = scmp.ne.s32.totalorder %s409, %s425
      %p427 = scmp.eq.s32.totalorder %s87, 0
      %p428 = por %p426, %p427
      %s429 = ssub.s32 %s89, %s96
      %p430 = scmp.eq.s32.totalorder %s429, 0
      %s432 = sadd.s32 %s431, 1
      %s433 = scalar_select %p430, %s431, %s432
      %p436 = pneg %p430
      %p437 = scmp.eq.s32.totalorder %s81, 3
      %p438 = por %p436, %p437
      %p439 = scmp.ne.s32.totalorder %s431, %s434
      %p440 = scmp.eq.s32.totalorder %s81, 0
      %p441 = por %p439, %p440
      %p442 = scmp.ne.s32.totalorder %s431, %s434
      %p443 = scmp.eq.s32.totalorder %s86, 3
      %p444 = por %p442, %p443
      %p445 = scmp.ne.s32.totalorder %s434, %s435
      %p446 = scmp.eq.s32.totalorder %s86, 0
      %p447 = por %p445, %p446
      %p448 = scmp.ne.s32.totalorder %s434, %s435
      %p449 = scmp.eq.s32.totalorder %s87, 3
      %p450 = por %p448, %p449
      %p452 = scmp.ne.s32.totalorder %s435, %s451
      %p453 = scmp.eq.s32.totalorder %s87, 0
      %p454 = por %p452, %p453
      %s455 = ssub.s32 %s89, %s96
      %p456 = scmp.eq.s32.totalorder %s455, 0
      %s458 = sadd.s32 %s457, 1
      %s459 = scalar_select %p456, %s457, %s458
      %p462 = pneg %p456
      %p463 = scmp.eq.s32.totalorder %s81, 3
      %p464 = por %p462, %p463
      %p465 = scmp.ne.s32.totalorder %s457, %s460
      %p466 = scmp.eq.s32.totalorder %s81, 0
      %p467 = por %p465, %p466
      %p468 = scmp.ne.s32.totalorder %s457, %s460
      %p469 = scmp.eq.s32.totalorder %s86, 3
      %p470 = por %p468, %p469
      %p471 = scmp.ne.s32.totalorder %s460, %s461
      %p472 = scmp.eq.s32.totalorder %s86, 0
      %p473 = por %p471, %p472
      %p474 = scmp.ne.s32.totalorder %s460, %s461
      %p475 = scmp.eq.s32.totalorder %s87, 3
      %p476 = por %p474, %p475
      %p478 = scmp.ne.s32.totalorder %s461, %s477
      %p479 = scmp.eq.s32.totalorder %s87, 0
      %p480 = por %p478, %p479
      %s481 = ssub.s32 %s89, %s96
      %p482 = scmp.eq.s32.totalorder %s481, 0
      %s484 = sadd.s32 %s483, 1
      %s485 = scalar_select %p482, %s483, %s484
      %p488 = pneg %p482
      %p489 = scmp.eq.s32.totalorder %s81, 3
      %p490 = por %p488, %p489
      %p491 = scmp.ne.s32.totalorder %s483, %s486
      %p492 = scmp.eq.s32.totalorder %s81, 0
      %p493 = por %p491, %p492
      %p494 = scmp.ne.s32.totalorder %s483, %s486
      %p495 = scmp.eq.s32.totalorder %s86, 3
      %p496 = por %p494, %p495
      %p497 = scmp.ne.s32.totalorder %s486, %s487
      %p498 = scmp.eq.s32.totalorder %s86, 0
      %p499 = por %p497, %p498
      %p500 = scmp.ne.s32.totalorder %s486, %s487
      %p501 = scmp.eq.s32.totalorder %s87, 3
      %p502 = por %p500, %p501
      %p504 = scmp.ne.s32.totalorder %s487, %s503
      %p505 = scmp.eq.s32.totalorder %s87, 0
      %p506 = por %p504, %p505
      %s507 = ssub.s32 %s89, %s96
      %p508 = scmp.eq.s32.totalorder %s507, 0
      %s510 = sadd.s32 %s509, 1
      %s511 = scalar_select %p508, %s509, %s510
      %p514 = pneg %p508
      %p515 = scmp.eq.s32.totalorder %s81, 3
      %p516 = por %p514, %p515
      %p517 = scmp.ne.s32.totalorder %s509, %s512
      %p518 = scmp.eq.s32.totalorder %s81, 0
      %p519 = por %p517, %p518
      %p520 = scmp.ne.s32.totalorder %s509, %s512
      %p521 = scmp.eq.s32.totalorder %s86, 3
      %p522 = por %p520, %p521
      %p523 = scmp.ne.s32.totalorder %s512, %s513
      %p524 = scmp.eq.s32.totalorder %s86, 0
      %p525 = por %p523, %p524
      %p526 = scmp.ne.s32.totalorder %s512, %s513
      %p527 = scmp.eq.s32.totalorder %s87, 3
      %p528 = por %p526, %p527
      %p530 = scmp.ne.s32.totalorder %s513, %s529
      %p531 = scmp.eq.s32.totalorder %s87, 0
      %p532 = por %p530, %p531
      %s533 = ssub.s32 %s89, %s96
      %p534 = scmp.eq.s32.totalorder %s533, 0
      %s536 = sadd.s32 %s535, 1
      %s537 = scalar_select %p534, %s535, %s536
      %p540 = pneg %p534
      %p541 = scmp.eq.s32.totalorder %s81, 3
      %p542 = por %p540, %p541
      %p543 = scmp.ne.s32.totalorder %s535, %s538
      %p544 = scmp.eq.s32.totalorder %s81, 0
      %p545 = por %p543, %p544
      %p546 = scmp.ne.s32.totalorder %s535, %s538
      %p547 = scmp.eq.s32.totalorder %s86, 3
      %p548 = por %p546, %p547
      %p549 = scmp.ne.s32.totalorder %s538, %s539
      %p550 = scmp.eq.s32.totalorder %s86, 0
      %p551 = por %p549, %p550
      %p552 = scmp.ne.s32.totalorder %s538, %s539
      %p553 = scmp.eq.s32.totalorder %s87, 3
      %p554 = por %p552, %p553
      %p556 = scmp.ne.s32.totalorder %s539, %s555
      %p557 = scmp.eq.s32.totalorder %s87, 0
      %p558 = por %p556, %p557
      %s559 = ssub.s32 %s89, %s96
      %p560 = scmp.eq.s32.totalorder %s559, 0
      %s562 = sadd.s32 %s561, 1
      %s563 = scalar_select %p560, %s561, %s562
      %p566 = pneg %p560
      %p567 = scmp.eq.s32.totalorder %s81, 3
      %p568 = por %p566, %p567
      %p569 = scmp.ne.s32.totalorder %s561, %s564
      %p570 = scmp.eq.s32.totalorder %s81, 0
      %p571 = por %p569, %p570
      %p572 = scmp.ne.s32.totalorder %s561, %s564
      %p573 = scmp.eq.s32.totalorder %s86, 3
      %p574 = por %p572, %p573
      %p575 = scmp.ne.s32.totalorder %s564, %s565
      %p576 = scmp.eq.s32.totalorder %s86, 0
      %p577 = por %p575, %p576
      %p578 = scmp.ne.s32.totalorder %s564, %s565
      %p579 = scmp.eq.s32.totalorder %s87, 3
      %p580 = por %p578, %p579
      %p582 = scmp.ne.s32.totalorder %s565, %s581
      %p583 = scmp.eq.s32.totalorder %s87, 0
      %p584 = por %p582, %p583
      %s585 = ssub.s32 %s89, %s96
      %p586 = scmp.eq.s32.totalorder %s585, 0
      %s588 = sadd.s32 %s587, 1
      %s589 = scalar_select %p586, %s587, %s588
      %p592 = pneg %p586
      %p593 = scmp.eq.s32.totalorder %s81, 3
      %p594 = por %p592, %p593
      %p595 = scmp.ne.s32.totalorder %s587, %s590
      %p596 = scmp.eq.s32.totalorder %s81, 0
      %p597 = por %p595, %p596
      %p598 = scmp.ne.s32.totalorder %s587, %s590
      %p599 = scmp.eq.s32.totalorder %s86, 3
      %p600 = por %p598, %p599
      %p601 = scmp.ne.s32.totalorder %s590, %s591
      %p602 = scmp.eq.s32.totalorder %s86, 0
      %p603 = por %p601, %p602
      %p604 = scmp.ne.s32.totalorder %s590, %s591
      %p605 = scmp.eq.s32.totalorder %s87, 3
      %p606 = por %p604, %p605
      %p608 = scmp.ne.s32.totalorder %s591, %s607
      %p609 = scmp.eq.s32.totalorder %s87, 0
      %p610 = por %p608, %p609
      %s611 = ssub.s32 %s89, %s96
      %p612 = scmp.eq.s32.totalorder %s611, 0
      %s614 = sadd.s32 %s613, 1
      %s615 = scalar_select %p612, %s613, %s614
      %p618 = pneg %p612
      %p619 = scmp.eq.s32.totalorder %s81, 3
      %p620 = por %p618, %p619
      %p621 = scmp.ne.s32.totalorder %s613, %s616
      %p622 = scmp.eq.s32.totalorder %s81, 0
      %p623 = por %p621, %p622
      %p624 = scmp.ne.s32.totalorder %s613, %s616
      %p625 = scmp.eq.s32.totalorder %s86, 3
      %p626 = por %p624, %p625
      %p627 = scmp.ne.s32.totalorder %s616, %s617
      %p628 = scmp.eq.s32.totalorder %s86, 0
      %p629 = por %p627, %p628
      %p630 = scmp.ne.s32.totalorder %s616, %s617
      %p631 = scmp.eq.s32.totalorder %s87, 3
      %p632 = por %p630, %p631
      %p634 = scmp.ne.s32.totalorder %s617, %s633
      %p635 = scmp.eq.s32.totalorder %s87, 0
      %p636 = por %p634, %p635
      %s637 = ssub.s32 %s89, %s96
      %p638 = scmp.eq.s32.totalorder %s637, 0
      %s640 = sadd.s32 %s639, 1
      %s641 = scalar_select %p638, %s639, %s640
      %p644 = pneg %p638
      %p645 = scmp.eq.s32.totalorder %s81, 3
      %p646 = por %p644, %p645
      %p647 = scmp.ne.s32.totalorder %s639, %s642
      %p648 = scmp.eq.s32.totalorder %s81, 0
      %p649 = por %p647, %p648
      %p650 = scmp.ne.s32.totalorder %s639, %s642
      %p651 = scmp.eq.s32.totalorder %s86, 3
      %p652 = por %p650, %p651
      %p653 = scmp.ne.s32.totalorder %s642, %s643
      %p654 = scmp.eq.s32.totalorder %s86, 0
      %p655 = por %p653, %p654
      %p656 = scmp.ne.s32.totalorder %s642, %s643
      %p657 = scmp.eq.s32.totalorder %s87, 3
      %p658 = por %p656, %p657
      %p660 = scmp.ne.s32.totalorder %s643, %s659
      %p661 = scmp.eq.s32.totalorder %s87, 0
      %p662 = por %p660, %p661
      %s663 = ssub.s32 %s89, %s96
      %p664 = scmp.eq.s32.totalorder %s663, 0
      %s666 = sadd.s32 %s665, 1
      %s667 = scalar_select %p664, %s665, %s666
      %p670 = pneg %p664
      %p671 = scmp.eq.s32.totalorder %s81, 3
      %p672 = por %p670, %p671
      %p673 = scmp.ne.s32.totalorder %s665, %s668
      %p674 = scmp.eq.s32.totalorder %s81, 0
      %p675 = por %p673, %p674
      %p676 = scmp.ne.s32.totalorder %s665, %s668
      %p677 = scmp.eq.s32.totalorder %s86, 3
      %p678 = por %p676, %p677
      %p679 = scmp.ne.s32.totalorder %s668, %s669
      %p680 = scmp.eq.s32.totalorder %s86, 0
      %p681 = por %p679, %p680
      %p682 = scmp.ne.s32.totalorder %s668, %s669
      %p683 = scmp.eq.s32.totalorder %s87, 3
      %p684 = por %p682, %p683
      %p686 = scmp.ne.s32.totalorder %s669, %s685
      %p687 = scmp.eq.s32.totalorder %s87, 0
      %p688 = por %p686, %p687
      %s689 = ssub.s32 %s89, %s96
      %p690 = scmp.eq.s32.totalorder %s689, 0
      %s692 = sadd.s32 %s691, 1
      %s693 = scalar_select %p690, %s691, %s692
      %p696 = pneg %p690
      %p697 = scmp.eq.s32.totalorder %s81, 3
      %p698 = por %p696, %p697
      %p699 = scmp.ne.s32.totalorder %s691, %s694
      %p700 = scmp.eq.s32.totalorder %s81, 0
      %p701 = por %p699, %p700
      %p702 = scmp.ne.s32.totalorder %s691, %s694
      %p703 = scmp.eq.s32.totalorder %s86, 3
      %p704 = por %p702, %p703
      %p705 = scmp.ne.s32.totalorder %s694, %s695
      %p706 = scmp.eq.s32.totalorder %s86, 0
      %p707 = por %p705, %p706
      %p708 = scmp.ne.s32.totalorder %s694, %s695
      %p709 = scmp.eq.s32.totalorder %s87, 3
      %p710 = por %p708, %p709
      %p712 = scmp.ne.s32.totalorder %s695, %s711
      %p713 = scmp.eq.s32.totalorder %s87, 0
      %p714 = por %p712, %p713
      %s715 = ssub.s32 %s89, %s96
      %p716 = scmp.eq.s32.totalorder %s715, 0
      %s718 = sadd.s32 %s717, 1
      %s719 = scalar_select %p716, %s717, %s718
      %p722 = pneg %p716
      %p723 = scmp.eq.s32.totalorder %s81, 3
      %p724 = por %p722, %p723
      %p725 = scmp.ne.s32.totalorder %s717, %s720
      %p726 = scmp.eq.s32.totalorder %s81, 0
      %p727 = por %p725, %p726
      %p728 = scmp.ne.s32.totalorder %s717, %s720
      %p729 = scmp.eq.s32.totalorder %s86, 3
      %p730 = por %p728, %p729
      %p731 = scmp.ne.s32.totalorder %s720, %s721
      %p732 = scmp.eq.s32.totalorder %s86, 0
      %p733 = por %p731, %p732
      %p734 = scmp.ne.s32.totalorder %s720, %s721
      %p735 = scmp.eq.s32.totalorder %s87, 3
      %p736 = por %p734, %p735
      %p738 = scmp.ne.s32.totalorder %s721, %s737
      %p739 = scmp.eq.s32.totalorder %s87, 0
      %p740 = por %p738, %p739
      %s741 = ssub.s32 %s89, %s96
      %p742 = scmp.eq.s32.totalorder %s741, 0
      %s744 = sadd.s32 %s743, 1
      %s745 = scalar_select %p742, %s743, %s744
      %p748 = pneg %p742
      %p749 = scmp.eq.s32.totalorder %s81, 3
      %p750 = por %p748, %p749
      %p751 = scmp.ne.s32.totalorder %s743, %s746
      %p752 = scmp.eq.s32.totalorder %s81, 0
      %p753 = por %p751, %p752
      %p754 = scmp.ne.s32.totalorder %s743, %s746
      %p755 = scmp.eq.s32.totalorder %s86, 3
      %p756 = por %p754, %p755
      %p757 = scmp.ne.s32.totalorder %s746, %s747
      %p758 = scmp.eq.s32.totalorder %s86, 0
      %p759 = por %p757, %p758
      %p760 = scmp.ne.s32.totalorder %s746, %s747
      %p761 = scmp.eq.s32.totalorder %s87, 3
      %p762 = por %p760, %p761
      %p764 = scmp.ne.s32.totalorder %s747, %s763
      %p765 = scmp.eq.s32.totalorder %s87, 0
      %p766 = por %p764, %p765
      %s768 = sadd.s32 %s767, 1
      %p771 = scmp.eq.s32.totalorder %s81, 3
      %p772 = scmp.ne.s32.totalorder %s767, %s769
      %p773 = scmp.eq.s32.totalorder %s81, 0
      %p774 = por %p772, %p773
      %p775 = scmp.ne.s32.totalorder %s767, %s769
      %p776 = scmp.eq.s32.totalorder %s86, 3
      %p777 = por %p775, %p776
      %p778 = scmp.ne.s32.totalorder %s769, %s770
      %p779 = scmp.eq.s32.totalorder %s86, 0
      %p780 = por %p778, %p779
      %p781 = scmp.ne.s32.totalorder %s769, %s770
      %p782 = scmp.eq.s32.totalorder %s87, 3
      %p783 = por %p781, %p782
      %p785 = scmp.ne.s32.totalorder %s770, %s784
      %p786 = scmp.eq.s32.totalorder %s87, 0
      %p787 = por %p785, %p786
      %s789 = sadd.s32 %s788, 1
      %p792 = scmp.eq.s32.totalorder %s81, 3
      %p793 = scmp.ne.s32.totalorder %s788, %s790
      %p794 = scmp.eq.s32.totalorder %s81, 0
      %p795 = por %p793, %p794
      %p796 = scmp.ne.s32.totalorder %s788, %s790
      %p797 = scmp.eq.s32.totalorder %s86, 3
      %p798 = por %p796, %p797
      %p799 = scmp.ne.s32.totalorder %s790, %s791
      %p800 = scmp.eq.s32.totalorder %s86, 0
      %p801 = por %p799, %p800
      %p802 = scmp.ne.s32.totalorder %s790, %s791
      %p803 = scmp.eq.s32.totalorder %s87, 3
      %p804 = por %p802, %p803
      %p806 = scmp.ne.s32.totalorder %s791, %s805
      %p807 = scmp.eq.s32.totalorder %s87, 0
      %p808 = por %p806, %p807
      %s810 = sadd.s32 %s809, 1
      %p813 = scmp.eq.s32.totalorder %s81, 3
      %p814 = scmp.ne.s32.totalorder %s809, %s811
      %p815 = scmp.eq.s32.totalorder %s81, 0
      %p816 = por %p814, %p815
      %p817 = scmp.ne.s32.totalorder %s809, %s811
      %p818 = scmp.eq.s32.totalorder %s86, 3
      %p819 = por %p817, %p818
      %p820 = scmp.ne.s32.totalorder %s811, %s812
      %p821 = scmp.eq.s32.totalorder %s86, 0
      %p822 = por %p820, %p821
      %p823 = scmp.ne.s32.totalorder %s811, %s812
      %p824 = scmp.eq.s32.totalorder %s87, 3
      %p825 = por %p823, %p824
      %p827 = scmp.ne.s32.totalorder %s812, %s826
      %p828 = scmp.eq.s32.totalorder %s87, 0
      %p829 = por %p827, %p828
      %s831 = sadd.s32 %s830, 1
      %p834 = scmp.eq.s32.totalorder %s81, 3
      %p835 = scmp.ne.s32.totalorder %s830, %s832
      %p836 = scmp.eq.s32.totalorder %s81, 0
      %p837 = por %p835, %p836
      %p838 = scmp.ne.s32.totalorder %s830, %s832
      %p839 = scmp.eq.s32.totalorder %s86, 3
      %p840 = por %p838, %p839
      %p841 = scmp.ne.s32.totalorder %s832, %s833
      %p842 = scmp.eq.s32.totalorder %s86, 0
      %p843 = por %p841, %p842
      %p844 = scmp.ne.s32.totalorder %s832, %s833
      %p845 = scmp.eq.s32.totalorder %s87, 3
      %p846 = por %p844, %p845
      %p848 = scmp.ne.s32.totalorder %s833, %s847
      %p849 = scmp.eq.s32.totalorder %s87, 0
      %p850 = por %p848, %p849
      %s852 = sadd.s32 %s851, 1
      %p855 = scmp.eq.s32.totalorder %s81, 3
      %p856 = scmp.ne.s32.totalorder %s851, %s853
      %p857 = scmp.eq.s32.totalorder %s81, 0
      %p858 = por %p856, %p857
      %p859 = scmp.ne.s32.totalorder %s851, %s853
      %p860 = scmp.eq.s32.totalorder %s86, 3
      %p861 = por %p859, %p860
      %p862 = scmp.ne.s32.totalorder %s853, %s854
      %p863 = scmp.eq.s32.totalorder %s86, 0
      %p864 = por %p862, %p863
      %p865 = scmp.ne.s32.totalorder %s853, %s854
      %p866 = scmp.eq.s32.totalorder %s87, 3
      %p867 = por %p865, %p866
      %p869 = scmp.ne.s32.totalorder %s854, %s868
      %p870 = scmp.eq.s32.totalorder %s87, 0
      %p871 = por %p869, %p870
      %s873 = sadd.s32 %s872, 1
      %p876 = scmp.eq.s32.totalorder %s81, 3
      %p877 = scmp.ne.s32.totalorder %s872, %s874
      %p878 = scmp.eq.s32.totalorder %s81, 0
      %p879 = por %p877, %p878
      %p880 = scmp.ne.s32.totalorder %s872, %s874
      %p881 = scmp.eq.s32.totalorder %s86, 3
      %p882 = por %p880, %p881
      %p883 = scmp.ne.s32.totalorder %s874, %s875
      %p884 = scmp.eq.s32.totalorder %s86, 0
      %p885 = por %p883, %p884
      %p886 = scmp.ne.s32.totalorder %s874, %s875
      %p887 = scmp.eq.s32.totalorder %s87, 3
      %p888 = por %p886, %p887
      %p890 = scmp.ne.s32.totalorder %s875, %s889
      %p891 = scmp.eq.s32.totalorder %s87, 0
      %p892 = por %p890, %p891
      %s894 = sadd.s32 %s893, 1
      %p897 = scmp.eq.s32.totalorder %s81, 3
      %p898 = scmp.ne.s32.totalorder %s893, %s895
      %p899 = scmp.eq.s32.totalorder %s81, 0
      %p900 = por %p898, %p899
      %p901 = scmp.ne.s32.totalorder %s893, %s895
      %p902 = scmp.eq.s32.totalorder %s86, 3
      %p903 = por %p901, %p902
      %p904 = scmp.ne.s32.totalorder %s895, %s896
      %p905 = scmp.eq.s32.totalorder %s86, 0
      %p906 = por %p904, %p905
      %p907 = scmp.ne.s32.totalorder %s895, %s896
      %p908 = scmp.eq.s32.totalorder %s87, 3
      %p909 = por %p907, %p908
      %p911 = scmp.ne.s32.totalorder %s896, %s910
      %p912 = scmp.eq.s32.totalorder %s87, 0
      %p913 = por %p911, %p912
      %s915 = sadd.s32 %s914, 1
      %p918 = scmp.eq.s32.totalorder %s81, 3
      %p919 = scmp.ne.s32.totalorder %s914, %s916
      %p920 = scmp.eq.s32.totalorder %s81, 0
      %p921 = por %p919, %p920
      %p922 = scmp.ne.s32.totalorder %s914, %s916
      %p923 = scmp.eq.s32.totalorder %s86, 3
      %p924 = por %p922, %p923
      %p925 = scmp.ne.s32.totalorder %s916, %s917
      %p926 = scmp.eq.s32.totalorder %s86, 0
      %p927 = por %p925, %p926
      %p928 = scmp.ne.s32.totalorder %s916, %s917
      %p929 = scmp.eq.s32.totalorder %s87, 3
      %p930 = por %p928, %p929
      %p932 = scmp.ne.s32.totalorder %s917, %s931
      %p933 = scmp.eq.s32.totalorder %s87, 0
      %p934 = por %p932, %p933
      %s935 = ssub.s32 %s88, %s100
      %p936 = scmp.eq.s32.totalorder %s935, 0
      %s938 = sadd.s32 %s937, 1
      %s939 = scalar_select %p936, %s937, %s938
      %p942 = pneg %p936
      %p943 = scmp.eq.s32.totalorder %s81, 3
      %p944 = por %p942, %p943
      %p945 = scmp.ne.s32.totalorder %s937, %s940
      %p946 = scmp.eq.s32.totalorder %s81, 0
      %p947 = por %p945, %p946
      %p948 = scmp.ne.s32.totalorder %s937, %s940
      %p949 = scmp.eq.s32.totalorder %s86, 3
      %p950 = por %p948, %p949
      %p951 = scmp.ne.s32.totalorder %s940, %s941
      %p952 = scmp.eq.s32.totalorder %s86, 0
      %p953 = por %p951, %p952
      %p954 = scmp.ne.s32.totalorder %s940, %s941
      %p955 = scmp.eq.s32.totalorder %s87, 3
      %p956 = por %p954, %p955
      %p958 = scmp.ne.s32.totalorder %s941, %s957
      %p959 = scmp.eq.s32.totalorder %s87, 0
      %p960 = por %p958, %p959
      %p961 = scmp.le.s32.totalorder 1, %s81
      %p962 = scmp.lt.s32.totalorder %s81, 5
      %p963 = pnand %p961, %p962
      %p964 = pneg %p963
      // Predicated region
      $region9: #{tpu_custom_call.1} parent=5 // pred_check
        _
      $region10: #{tpu_custom_call.1} parent=5 // pred_check_branch
        %966 = sbr.rel (%p963) target = $region12
      $region11: #{tpu_custom_call.1} parent=5 // pred_region
        %s967 = ssub.s32 %s81, 1
        // Predicated region
        $region13: #{tpu_custom_call.1} parent=11 // pred_check
          %p968 = pneg %p218
        $region14: #{tpu_custom_call.1} parent=11 // pred_check_branch
          %970 = sbr.rel (%p968) target = $region16
        $region15: #{tpu_custom_call.1} parent=11 // pred_region
          _
        $region16: #{tpu_custom_call.1} parent=11 // pred_fallthru
          _
        // Predicated region
        $region17: #{tpu_custom_call.1} parent=11 // pred_check
          %p971 = pneg %p239
        $region18: #{tpu_custom_call.1} parent=11 // pred_check_branch
          %973 = sbr.rel (%p971) target = $region20
        $region19: #{tpu_custom_call.1} parent=11 // pred_region
          %s975 = ssub.s32 16, 16
          %976 = vsyncadd [#allocation7], %s975
          %s978 = sshll.u32 [#allocation6], 4
          %s979 = int_to_ptr.vmem [resolvable:$true] %s978
          %981 = dma.hbm_to_vmem [thread:$0]  %s11, 16, %s979, [#allocation7]
        $region20: #{tpu_custom_call.1} parent=11 // pred_fallthru
          _
        // Predicated region
        $region21: #{tpu_custom_call.1} parent=11 // pred_check
          %p982 = pneg %p780
        $region22: #{tpu_custom_call.1} parent=11 // pred_check_branch
          %984 = sbr.rel (%p982) target = $region24
        $region23: #{tpu_custom_call.1} parent=11 // pred_region
          _
        $region24: #{tpu_custom_call.1} parent=11 // pred_fallthru
          _
        // Predicated region
        $region25: #{tpu_custom_call.1} parent=11 // pred_check
          %p985 = pneg %p801
        $region26: #{tpu_custom_call.1} parent=11 // pred_check_branch
          %987 = sbr.rel (%p985) target = $region28
        $region27: #{tpu_custom_call.1} parent=11 // pred_region
          _
        $region28: #{tpu_custom_call.1} parent=11 // pred_fallthru
          _
        // Predicated region
        $region29: #{tpu_custom_call.1} parent=11 // pred_check
          %p988 = pneg %p822
        $region30: #{tpu_custom_call.1} parent=11 // pred_check_branch
          %990 = sbr.rel (%p988) target = $region32
        $region31: #{tpu_custom_call.1} parent=11 // pred_region
          _
        $region32: #{tpu_custom_call.1} parent=11 // pred_fallthru
          _
        // Predicated region
        $region33: #{tpu_custom_call.1} parent=11 // pred_check
          %p991 = pneg %p843
        $region34: #{tpu_custom_call.1} parent=11 // pred_check_branch
          %993 = sbr.rel (%p991) target = $region36
        $region35: #{tpu_custom_call.1} parent=11 // pred_region
          _
        $region36: #{tpu_custom_call.1} parent=11 // pred_fallthru
          _
        // Predicated region
        $region37: #{tpu_custom_call.1} parent=11 // pred_check
          %p994 = pneg %p864
        $region38: #{tpu_custom_call.1} parent=11 // pred_check_branch
          %996 = sbr.rel (%p994) target = $region40
        $region39: #{tpu_custom_call.1} parent=11 // pred_region
          _
        $region40: #{tpu_custom_call.1} parent=11 // pred_fallthru
          _
        // Predicated region
        $region41: #{tpu_custom_call.1} parent=11 // pred_check
          %p997 = pneg %p885
        $region42: #{tpu_custom_call.1} parent=11 // pred_check_branch
          %999 = sbr.rel (%p997) target = $region44
        $region43: #{tpu_custom_call.1} parent=11 // pred_region
          _
        $region44: #{tpu_custom_call.1} parent=11 // pred_fallthru
          _
        // Predicated region
        $region45: #{tpu_custom_call.1} parent=11 // pred_check
          %p1000 = pneg %p906
        $region46: #{tpu_custom_call.1} parent=11 // pred_check_branch
          %1002 = sbr.rel (%p1000) target = $region48
        $region47: #{tpu_custom_call.1} parent=11 // pred_region
          _
        $region48: #{tpu_custom_call.1} parent=11 // pred_fallthru
          _
        // Predicated region
        $region49: #{tpu_custom_call.1} parent=11 // pred_check
          %p1003 = pneg %p927
        $region50: #{tpu_custom_call.1} parent=11 // pred_check_branch
          %1005 = sbr.rel (%p1003) target = $region52
        $region51: #{tpu_custom_call.1} parent=11 // pred_region
          _
        $region52: #{tpu_custom_call.1} parent=11 // pred_fallthru
          _
      $region12: #{tpu_custom_call.1} parent=5 // pred_fallthru
        _
      %p1006 = scmp.lt.s32.totalorder %s81, 4
      // Predicated region
      $region53: #{tpu_custom_call.1} parent=5 // pred_check
        %p1007 = pneg %p1006
      $region54: #{tpu_custom_call.1} parent=5 // pred_check_branch
        %1009 = sbr.rel (%p1007) target = $region56
      $region55: #{tpu_custom_call.1} parent=5 // pred_region
        // Predicated region
        $region57: #{tpu_custom_call.1} parent=55 // pred_check
          %p1010 = pneg %p113
        $region58: #{tpu_custom_call.1} parent=55 // pred_check_branch
          %1012 = sbr.rel (%p1010) target = $region60
        $region59: #{tpu_custom_call.1} parent=55 // pred_region
          %p1013 = scmp.lt.s32.totalorder %s88, 1
          %s1014 = scalar_select %p1013, %s88, 1
          %s1015 = smul.addr %s1014, 8
          %s1016 = scalar_lea.vmem %s1, %s1015
        $region60: #{tpu_custom_call.1} parent=55 // pred_fallthru
          _
        // Predicated region
        $region61: #{tpu_custom_call.1} parent=55 // pred_check
          %p1017 = pneg %p139
        $region62: #{tpu_custom_call.1} parent=55 // pred_check_branch
          %1019 = sbr.rel (%p1017) target = $region64
        $region63: #{tpu_custom_call.1} parent=55 // pred_region
          %s1020 = sand.u32 %s129, 1
          %s1021 = scalar_lea.sflag [#allocation5], %s1020
          %s1022 = sand.u32 %s129, 1
          %s1023 = smul.addr %s1022, 8
          %s1024 = scalar_lea.vmem [#allocation4], %s1023
          %s1026 = ssub.s32 128, 128
          %1027 = vsyncadd %s1021, %s1026
          %s1028 = smul.addr %s88, 128
          %s1029 = scalar_lea.hbm %s3, %s1028
          %s1031 = sshll.u32 %s1024, 4
          %s1032 = int_to_ptr.vmem [resolvable:$true] %s1031
          %1034 = dma.hbm_to_vmem [thread:$0]  %s1029, 128, %s1032, %s1021
        $region64: #{tpu_custom_call.1} parent=55 // pred_fallthru
          _
        // Predicated region
        $region65: #{tpu_custom_call.1} parent=55 // pred_check
          %p1035 = pneg %p165
        $region66: #{tpu_custom_call.1} parent=55 // pred_check_branch
          %1037 = sbr.rel (%p1035) target = $region68
        $region67: #{tpu_custom_call.1} parent=55 // pred_region
          %p1038 = scmp.lt.s32.totalorder %s88, 1
          %s1039 = scalar_select %p1038, %s88, 1
          %s1040 = smul.addr %s1039, 8
          %s1041 = scalar_lea.vmem %s5, %s1040
        $region68: #{tpu_custom_call.1} parent=55 // pred_fallthru
          _
        // Predicated region
        $region69: #{tpu_custom_call.1} parent=55 // pred_check
          %p1042 = pneg %p191
        $region70: #{tpu_custom_call.1} parent=55 // pred_check_branch
          %1044 = sbr.rel (%p1042) target = $region72
        $region71: #{tpu_custom_call.1} parent=55 // pred_region
          %p1045 = scmp.lt.s32.totalorder %s88, 1
          %s1046 = scalar_select %p1045, %s88, 1
          %s1047 = scalar_lea.vmem %s7, %s1046
        $region72: #{tpu_custom_call.1} parent=55 // pred_fallthru
          _
        // Predicated region
        $region73: #{tpu_custom_call.1} parent=55 // pred_check
          %p1048 = pneg %p259
        $region74: #{tpu_custom_call.1} parent=55 // pred_check_branch
          %1050 = sbr.rel (%p1048) target = $region76
        $region75: #{tpu_custom_call.1} parent=55 // pred_region
          %p1051 = scmp.lt.s32.totalorder %s89, 1
          %s1052 = scalar_select %p1051, %s89, 1
          %s1053 = smul.addr %s1052, 4
          %s1054 = smul.addr %s1053, 8
          %s1055 = scalar_lea.vmem %s13, %s1054
        $region76: #{tpu_custom_call.1} parent=55 // pred_fallthru
          _
        // Predicated region
        $region77: #{tpu_custom_call.1} parent=55 // pred_check
          %p1056 = pneg %p285
        $region78: #{tpu_custom_call.1} parent=55 // pred_check_branch
          %1058 = sbr.rel (%p1056) target = $region80
        $region79: #{tpu_custom_call.1} parent=55 // pred_region
          %p1059 = scmp.lt.s32.totalorder %s89, 1
          %s1060 = scalar_select %p1059, %s89, 1
          %s1061 = scalar_lea.vmem %s15, %s1060
        $region80: #{tpu_custom_call.1} parent=55 // pred_fallthru
          _
        // Predicated region
        $region81: #{tpu_custom_call.1} parent=55 // pred_check
          %p1062 = pneg %p311
        $region82: #{tpu_custom_call.1} parent=55 // pred_check_branch
          %1064 = sbr.rel (%p1062) target = $region84
        $region83: #{tpu_custom_call.1} parent=55 // pred_region
          %p1065 = scmp.lt.s32.totalorder %s89, 1
          %s1066 = scalar_select %p1065, %s89, 1
          %s1067 = smul.addr %s1066, 4
          %s1068 = smul.addr %s1067, 8
          %s1069 = scalar_lea.vmem %s17, %s1068
        $region84: #{tpu_custom_call.1} parent=55 // pred_fallthru
          _
        // Predicated region
        $region85: #{tpu_custom_call.1} parent=55 // pred_check
          %p1070 = pneg %p337
        $region86: #{tpu_custom_call.1} parent=55 // pred_check_branch
          %1072 = sbr.rel (%p1070) target = $region88
        $region87: #{tpu_custom_call.1} parent=55 // pred_region
          %p1073 = scmp.lt.s32.totalorder %s89, 1
          %s1074 = scalar_select %p1073, %s89, 1
          %s1075 = scalar_lea.vmem %s19, %s1074
        $region88: #{tpu_custom_call.1} parent=55 // pred_fallthru
          _
        // Predicated region
        $region89: #{tpu_custom_call.1} parent=55 // pred_check
          %p1076 = pneg %p363
        $region90: #{tpu_custom_call.1} parent=55 // pred_check_branch
          %1078 = sbr.rel (%p1076) target = $region92
        $region91: #{tpu_custom_call.1} parent=55 // pred_region
          %p1079 = scmp.lt.s32.totalorder %s89, 1
          %s1080 = scalar_select %p1079, %s89, 1
          %s1081 = smul.addr %s1080, 4
          %s1082 = smul.addr %s1081, 8
          %s1083 = scalar_lea.vmem %s21, %s1082
        $region92: #{tpu_custom_call.1} parent=55 // pred_fallthru
          _
        // Predicated region
        $region93: #{tpu_custom_call.1} parent=55 // pred_check
          %p1084 = pneg %p389
        $region94: #{tpu_custom_call.1} parent=55 // pred_check_branch
          %1086 = sbr.rel (%p1084) target = $region96
        $region95: #{tpu_custom_call.1} parent=55 // pred_region
          %p1087 = scmp.lt.s32.totalorder %s89, 1
          %s1088 = scalar_select %p1087, %s89, 1
          %s1089 = scalar_lea.vmem %s23, %s1088
        $region96: #{tpu_custom_call.1} parent=55 // pred_fallthru
          _
        // Predicated region
        $region97: #{tpu_custom_call.1} parent=55 // pred_check
          %p1090 = pneg %p415
        $region98: #{tpu_custom_call.1} parent=55 // pred_check_branch
          %1092 = sbr.rel (%p1090) target = $region100
        $region99: #{tpu_custom_call.1} parent=55 // pred_region
          %p1093 = scmp.lt.s32.totalorder %s89, 1
          %s1094 = scalar_select %p1093, %s89, 1
          %s1095 = smul.addr %s1094, 4
          %s1096 = smul.addr %s1095, 8
          %s1097 = scalar_lea.vmem %s25, %s1096
        $region100: #{tpu_custom_call.1} parent=55 // pred_fallthru
          _
        // Predicated region
        $region101: #{tpu_custom_call.1} parent=55 // pred_check
          %p1098 = pneg %p441
        $region102: #{tpu_custom_call.1} parent=55 // pred_check_branch
          %1100 = sbr.rel (%p1098) target = $region104
        $region103: #{tpu_custom_call.1} parent=55 // pred_region
          %p1101 = scmp.lt.s32.totalorder %s89, 1
          %s1102 = scalar_select %p1101, %s89, 1
          %s1103 = scalar_lea.vmem %s27, %s1102
        $region104: #{tpu_custom_call.1} parent=55 // pred_fallthru
          _
        // Predicated region
        $region105: #{tpu_custom_call.1} parent=55 // pred_check
          %p1104 = pneg %p467
        $region106: #{tpu_custom_call.1} parent=55 // pred_check_branch
          %1106 = sbr.rel (%p1104) target = $region108
        $region107: #{tpu_custom_call.1} parent=55 // pred_region
          %p1107 = scmp.lt.s32.totalorder %s89, 1
          %s1108 = scalar_select %p1107, %s89, 1
          %s1109 = smul.addr %s1108, 4
          %s1110 = smul.addr %s1109, 8
          %s1111 = scalar_lea.vmem %s29, %s1110
        $region108: #{tpu_custom_call.1} parent=55 // pred_fallthru
          _
        // Predicated region
        $region109: #{tpu_custom_call.1} parent=55 // pred_check
          %p1112 = pneg %p493
        $region110: #{tpu_custom_call.1} parent=55 // pred_check_branch
          %1114 = sbr.rel (%p1112) target = $region112
        $region111: #{tpu_custom_call.1} parent=55 // pred_region
          %p1115 = scmp.lt.s32.totalorder %s89, 1
          %s1116 = scalar_select %p1115, %s89, 1
          %s1117 = scalar_lea.vmem %s31, %s1116
        $region112: #{tpu_custom_call.1} parent=55 // pred_fallthru
          _
        // Predicated region
        $region113: #{tpu_custom_call.1} parent=55 // pred_check
          %p1118 = pneg %p519
        $region114: #{tpu_custom_call.1} parent=55 // pred_check_branch
          %1120 = sbr.rel (%p1118) target = $region116
        $region115: #{tpu_custom_call.1} parent=55 // pred_region
          %p1121 = scmp.lt.s32.totalorder %s89, 1
          %s1122 = scalar_select %p1121, %s89, 1
          %s1123 = scalar_lea.vmem %s33, %s1122
        $region116: #{tpu_custom_call.1} parent=55 // pred_fallthru
          _
        // Predicated region
        $region117: #{tpu_custom_call.1} parent=55 // pred_check
          %p1124 = pneg %p545
        $region118: #{tpu_custom_call.1} parent=55 // pred_check_branch
          %1126 = sbr.rel (%p1124) target = $region120
        $region119: #{tpu_custom_call.1} parent=55 // pred_region
          %p1127 = scmp.lt.s32.totalorder %s89, 1
          %s1128 = scalar_select %p1127, %s89, 1
          %s1129 = scalar_lea.vmem %s35, %s1128
        $region120: #{tpu_custom_call.1} parent=55 // pred_fallthru
          _
        // Predicated region
        $region121: #{tpu_custom_call.1} parent=55 // pred_check
          %p1130 = pneg %p571
        $region122: #{tpu_custom_call.1} parent=55 // pred_check_branch
          %1132 = sbr.rel (%p1130) target = $region124
        $region123: #{tpu_custom_call.1} parent=55 // pred_region
          %p1133 = scmp.lt.s32.totalorder %s89, 1
          %s1134 = scalar_select %p1133, %s89, 1
          %s1135 = scalar_lea.vmem %s37, %s1134
        $region124: #{tpu_custom_call.1} parent=55 // pred_fallthru
          _
        // Predicated region
        $region125: #{tpu_custom_call.1} parent=55 // pred_check
          %p1136 = pneg %p597
        $region126: #{tpu_custom_call.1} parent=55 // pred_check_branch
          %1138 = sbr.rel (%p1136) target = $region128
        $region127: #{tpu_custom_call.1} parent=55 // pred_region
          %p1139 = scmp.lt.s32.totalorder %s89, 1
          %s1140 = scalar_select %p1139, %s89, 1
          %s1141 = scalar_lea.vmem %s39, %s1140
        $region128: #{tpu_custom_call.1} parent=55 // pred_fallthru
          _
        // Predicated region
        $region129: #{tpu_custom_call.1} parent=55 // pred_check
          %p1142 = pneg %p623
        $region130: #{tpu_custom_call.1} parent=55 // pred_check_branch
          %1144 = sbr.rel (%p1142) target = $region132
        $region131: #{tpu_custom_call.1} parent=55 // pred_region
          %p1145 = scmp.lt.s32.totalorder %s89, 1
          %s1146 = scalar_select %p1145, %s89, 1
          %s1147 = scalar_lea.vmem %s41, %s1146
        $region132: #{tpu_custom_call.1} parent=55 // pred_fallthru
          _
        // Predicated region
        $region133: #{tpu_custom_call.1} parent=55 // pred_check
          %p1148 = pneg %p649
        $region134: #{tpu_custom_call.1} parent=55 // pred_check_branch
          %1150 = sbr.rel (%p1148) target = $region136
        $region135: #{tpu_custom_call.1} parent=55 // pred_region
          %p1151 = scmp.lt.s32.totalorder %s89, 1
          %s1152 = scalar_select %p1151, %s89, 1
          %s1153 = scalar_lea.vmem %s43, %s1152
        $region136: #{tpu_custom_call.1} parent=55 // pred_fallthru
          _
        // Predicated region
        $region137: #{tpu_custom_call.1} parent=55 // pred_check
          %p1154 = pneg %p675
        $region138: #{tpu_custom_call.1} parent=55 // pred_check_branch
          %1156 = sbr.rel (%p1154) target = $region140
        $region139: #{tpu_custom_call.1} parent=55 // pred_region
          %p1157 = scmp.lt.s32.totalorder %s89, 1
          %s1158 = scalar_select %p1157, %s89, 1
          %s1159 = smul.addr %s1158, 4
          %s1160 = smul.addr %s1159, 8
          %s1161 = scalar_lea.vmem %s45, %s1160
        $region140: #{tpu_custom_call.1} parent=55 // pred_fallthru
          _
        // Predicated region
        $region141: #{tpu_custom_call.1} parent=55 // pred_check
          %p1162 = pneg %p701
        $region142: #{tpu_custom_call.1} parent=55 // pred_check_branch
          %1164 = sbr.rel (%p1162) target = $region144
        $region143: #{tpu_custom_call.1} parent=55 // pred_region
          %p1165 = scmp.lt.s32.totalorder %s89, 1
          %s1166 = scalar_select %p1165, %s89, 1
          %s1167 = scalar_lea.vmem %s47, %s1166
        $region144: #{tpu_custom_call.1} parent=55 // pred_fallthru
          _
        // Predicated region
        $region145: #{tpu_custom_call.1} parent=55 // pred_check
          %p1168 = pneg %p727
        $region146: #{tpu_custom_call.1} parent=55 // pred_check_branch
          %1170 = sbr.rel (%p1168) target = $region148
        $region147: #{tpu_custom_call.1} parent=55 // pred_region
          %p1171 = scmp.lt.s32.totalorder %s89, 1
          %s1172 = scalar_select %p1171, %s89, 1
          %s1173 = smul.addr %s1172, 8
          %s1174 = smul.addr %s1173, 8
          %s1175 = scalar_lea.vmem %s49, %s1174
        $region148: #{tpu_custom_call.1} parent=55 // pred_fallthru
          _
        // Predicated region
        $region149: #{tpu_custom_call.1} parent=55 // pred_check
          %p1176 = pneg %p753
        $region150: #{tpu_custom_call.1} parent=55 // pred_check_branch
          %1178 = sbr.rel (%p1176) target = $region152
        $region151: #{tpu_custom_call.1} parent=55 // pred_region
          %p1179 = scmp.lt.s32.totalorder %s89, 1
          %s1180 = scalar_select %p1179, %s89, 1
          %s1181 = scalar_lea.vmem %s51, %s1180
        $region152: #{tpu_custom_call.1} parent=55 // pred_fallthru
          _
      $region56: #{tpu_custom_call.1} parent=5 // pred_fallthru
        _
      %p1182 = scmp.le.s32.totalorder 1, %s81
      %p1183 = scmp.lt.s32.totalorder %s81, 5
      %p1184 = pnand %p1182, %p1183
      %p1185 = pneg %p1184
      // Predicated region
      $region153: #{tpu_custom_call.1} parent=5 // pred_check
        _
      $region154: #{tpu_custom_call.1} parent=5 // pred_check_branch
        %1187 = sbr.rel (%p1184) target = $region156
      $region155: #{tpu_custom_call.1} parent=5 // pred_region
        %s1188 = ssub.s32 %s81, 1
        %s1189 = sand.u32 %s132, 1
        %s1190 = scalar_lea.sflag [#allocation5], %s1189
        %s1191 = sand.u32 %s132, 1
        %s1192 = smul.addr %s1191, 8
        %s1193 = scalar_lea.vmem [#allocation4], %s1192
        // Predicated region
        $region157: #{tpu_custom_call.1} parent=155 // pred_check
          %p1194 = pneg %p145
        $region158: #{tpu_custom_call.1} parent=155 // pred_check_branch
          %1196 = sbr.rel (%p1194) target = $region160
        $region159: #{tpu_custom_call.1} parent=155 // pred_region
          %1197 = dma.done %s1190, 128
        $region160: #{tpu_custom_call.1} parent=155 // pred_fallthru
          _
        // Predicated region
        $region161: #{tpu_custom_call.1} parent=155 // pred_check
          %p1198 = pneg %p239
        $region162: #{tpu_custom_call.1} parent=155 // pred_check_branch
          %1200 = sbr.rel (%p1198) target = $region164
        $region163: #{tpu_custom_call.1} parent=155 // pred_region
          %1201 = dma.done [#allocation7], 16
        $region164: #{tpu_custom_call.1} parent=155 // pred_fallthru
          _
        %p1202 = scmp.lt.s32.totalorder %s90, 1
        %s1203 = scalar_select %p1202, %s90, 1
        %s1204 = smul.addr %s1203, 8
        %s1205 = scalar_lea.vmem %s1, %s1204
        %p1206 = pneg %p119
        %p1207 = pneg %p116
        %s1208 = sand.u32 %s132, 1
        %s1209 = scalar_lea.sflag [#allocation5], %s1208
        %s1210 = sand.u32 %s132, 1
        %s1211 = smul.addr %s1210, 8
        %s1212 = scalar_lea.vmem [#allocation4], %s1211
        %p1213 = pneg %p145
        %p1214 = pneg %p142
        %p1215 = scmp.lt.s32.totalorder %s90, 1
        %s1216 = scalar_select %p1215, %s90, 1
        %s1217 = smul.addr %s1216, 8
        %s1218 = scalar_lea.vmem %s5, %s1217
        %p1219 = pneg %p171
        %p1220 = pneg %p168
        %p1221 = scmp.lt.s32.totalorder %s90, 1
        %s1222 = scalar_select %p1221, %s90, 1
        %s1223 = scalar_lea.vmem %s7, %s1222
        %p1224 = pneg %p197
        %p1225 = pneg %p194
        %p1226 = pneg %p218
        %p1227 = pneg %p215
        %p1228 = pneg %p239
        %p1229 = pneg %p236
        %p1230 = scmp.lt.s32.totalorder %s91, 1
        %s1231 = scalar_select %p1230, %s91, 1
        %s1232 = smul.addr %s1231, 4
        %s1233 = smul.addr %s1232, 8
        %s1234 = scalar_lea.vmem %s13, %s1233
        %p1235 = pneg %p265
        %p1236 = pneg %p262
        %p1237 = scmp.lt.s32.totalorder %s91, 1
        %s1238 = scalar_select %p1237, %s91, 1
        %s1239 = scalar_lea.vmem %s15, %s1238
        %p1240 = pneg %p291
        %p1241 = pneg %p288
        %p1242 = scmp.lt.s32.totalorder %s91, 1
        %s1243 = scalar_select %p1242, %s91, 1
        %s1244 = smul.addr %s1243, 4
        %s1245 = smul.addr %s1244, 8
        %s1246 = scalar_lea.vmem %s17, %s1245
        %p1247 = pneg %p317
        %p1248 = pneg %p314
        %p1249 = scmp.lt.s32.totalorder %s91, 1
        %s1250 = scalar_select %p1249, %s91, 1
        %s1251 = scalar_lea.vmem %s19, %s1250
        %p1252 = pneg %p343
        %p1253 = pneg %p340
        %p1254 = scmp.lt.s32.totalorder %s91, 1
        %s1255 = scalar_select %p1254, %s91, 1
        %s1256 = smul.addr %s1255, 4
        %s1257 = smul.addr %s1256, 8
        %s1258 = scalar_lea.vmem %s21, %s1257
        %p1259 = pneg %p369
        %p1260 = pneg %p366
        %p1261 = scmp.lt.s32.totalorder %s91, 1
        %s1262 = scalar_select %p1261, %s91, 1
        %s1263 = scalar_lea.vmem %s23, %s1262
        %p1264 = pneg %p395
        %p1265 = pneg %p392
        %p1266 = scmp.lt.s32.totalorder %s91, 1
        %s1267 = scalar_select %p1266, %s91, 1
        %s1268 = smul.addr %s1267, 4
        %s1269 = smul.addr %s1268, 8
        %s1270 = scalar_lea.vmem %s25, %s1269
        %p1271 = pneg %p421
        %p1272 = pneg %p418
        %p1273 = scmp.lt.s32.totalorder %s91, 1
        %s1274 = scalar_select %p1273, %s91, 1
        %s1275 = scalar_lea.vmem %s27, %s1274
        %p1276 = pneg %p447
        %p1277 = pneg %p444
        %p1278 = scmp.lt.s32.totalorder %s91, 1
        %s1279 = scalar_select %p1278, %s91, 1
        %s1280 = smul.addr %s1279, 4
        %s1281 = smul.addr %s1280, 8
        %s1282 = scalar_lea.vmem %s29, %s1281
        %p1283 = pneg %p473
        %p1284 = pneg %p470
        %p1285 = scmp.lt.s32.totalorder %s91, 1
        %s1286 = scalar_select %p1285, %s91, 1
        %s1287 = scalar_lea.vmem %s31, %s1286
        %p1288 = pneg %p499
        %p1289 = pneg %p496
        %p1290 = scmp.lt.s32.totalorder %s91, 1
        %s1291 = scalar_select %p1290, %s91, 1
        %s1292 = scalar_lea.vmem %s33, %s1291
        %p1293 = pneg %p525
        %p1294 = pneg %p522
        %p1295 = scmp.lt.s32.totalorder %s91, 1
        %s1296 = scalar_select %p1295, %s91, 1
        %s1297 = scalar_lea.vmem %s35, %s1296
        %p1298 = pneg %p551
        %p1299 = pneg %p548
        %p1300 = scmp.lt.s32.totalorder %s91, 1
        %s1301 = scalar_select %p1300, %s91, 1
        %s1302 = scalar_lea.vmem %s37, %s1301
        %p1303 = pneg %p577
        %p1304 = pneg %p574
        %p1305 = scmp.lt.s32.totalorder %s91, 1
        %s1306 = scalar_select %p1305, %s91, 1
        %s1307 = scalar_lea.vmem %s39, %s1306
        %p1308 = pneg %p603
        %p1309 = pneg %p600
        %p1310 = scmp.lt.s32.totalorder %s91, 1
        %s1311 = scalar_select %p1310, %s91, 1
        %s1312 = scalar_lea.vmem %s41, %s1311
        %p1313 = pneg %p629
        %p1314 = pneg %p626
        %p1315 = scmp.lt.s32.totalorder %s91, 1
        %s1316 = scalar_select %p1315, %s91, 1
        %s1317 = scalar_lea.vmem %s43, %s1316
        %p1318 = pneg %p655
        %p1319 = pneg %p652
        %p1320 = scmp.lt.s32.totalorder %s91, 1
        %s1321 = scalar_select %p1320, %s91, 1
        %s1322 = smul.addr %s1321, 4
        %s1323 = smul.addr %s1322, 8
        %s1324 = scalar_lea.vmem %s45, %s1323
        %p1325 = pneg %p681
        %p1326 = pneg %p678
        %p1327 = scmp.lt.s32.totalorder %s91, 1
        %s1328 = scalar_select %p1327, %s91, 1
        %s1329 = scalar_lea.vmem %s47, %s1328
        %p1330 = pneg %p707
        %p1331 = pneg %p704
        %p1332 = scmp.lt.s32.totalorder %s91, 1
        %s1333 = scalar_select %p1332, %s91, 1
        %s1334 = smul.addr %s1333, 8
        %s1335 = smul.addr %s1334, 8
        %s1336 = scalar_lea.vmem %s49, %s1335
        %p1337 = pneg %p733
        %p1338 = pneg %p730
        %p1339 = scmp.lt.s32.totalorder %s91, 1
        %s1340 = scalar_select %p1339, %s91, 1
        %s1341 = scalar_lea.vmem %s51, %s1340
        %p1342 = pneg %p759
        %p1343 = pneg %p756
        %p1344 = pneg %p780
        %p1345 = pneg %p777
        %p1346 = pneg %p801
        %p1347 = pneg %p798
        %p1348 = pneg %p822
        %p1349 = pneg %p819
        %p1350 = pneg %p843
        %p1351 = pneg %p840
        %p1352 = pneg %p864
        %p1353 = pneg %p861
        %p1354 = pneg %p885
        %p1355 = pneg %p882
        %p1356 = pneg %p906
        %p1357 = pneg %p903
        %p1358 = pneg %p927
        %p1359 = pneg %p924
        %p1360 = pneg %p953
        %p1361 = pneg %p950
        %p1362 = scmp.lt.s32.totalorder %s90, 1
        %s1363 = scalar_select %p1362, %s90, 1
        %s1364 = scalar_lea.vmem %s69, %s1363
        %p1365 = scmp.lt.s32.totalorder %s90, 1
        %s1366 = scalar_select %p1365, %s90, 1
        %s1367 = smul.addr %s1366, 8
        %s1368 = scalar_lea.vmem %s1, %s1367
        %p1369 = scmp.lt.s32.totalorder %s90, 1
        %s1370 = scalar_select %p1369, %s90, 1
        %s1371 = smul.addr %s1370, 8
        %s1372 = scalar_lea.vmem %s5, %s1371
        %p1373 = scmp.lt.s32.totalorder %s90, 1
        %s1374 = scalar_select %p1373, %s90, 1
        %s1375 = scalar_lea.vmem %s7, %s1374
        %p1376 = scmp.lt.s32.totalorder %s91, 1
        %s1377 = scalar_select %p1376, %s91, 1
        %s1378 = smul.addr %s1377, 4
        %s1379 = smul.addr %s1378, 8
        %s1380 = scalar_lea.vmem %s13, %s1379
        %p1381 = scmp.lt.s32.totalorder %s91, 1
        %s1382 = scalar_select %p1381, %s91, 1
        %s1383 = scalar_lea.vmem %s15, %s1382
        %p1384 = scmp.lt.s32.totalorder %s91, 1
        %s1385 = scalar_select %p1384, %s91, 1
        %s1386 = smul.addr %s1385, 4
        %s1387 = smul.addr %s1386, 8
        %s1388 = scalar_lea.vmem %s17, %s1387
        %p1389 = scmp.lt.s32.totalorder %s91, 1
        %s1390 = scalar_select %p1389, %s91, 1
        %s1391 = scalar_lea.vmem %s19, %s1390
        %p1392 = scmp.lt.s32.totalorder %s91, 1
        %s1393 = scalar_select %p1392, %s91, 1
        %s1394 = smul.addr %s1393, 4
        %s1395 = smul.addr %s1394, 8
        %s1396 = scalar_lea.vmem %s21, %s1395
        %p1397 = scmp.lt.s32.totalorder %s91, 1
        %s1398 = scalar_select %p1397, %s91, 1
        %s1399 = scalar_lea.vmem %s23, %s1398
        %p1400 = scmp.lt.s32.totalorder %s91, 1
        %s1401 = scalar_select %p1400, %s91, 1
        %s1402 = smul.addr %s1401, 4
        %s1403 = smul.addr %s1402, 8
        %s1404 = scalar_lea.vmem %s25, %s1403
        %p1405 = scmp.lt.s32.totalorder %s91, 1
        %s1406 = scalar_select %p1405, %s91, 1
        %s1407 = scalar_lea.vmem %s27, %s1406
        %p1408 = scmp.lt.s32.totalorder %s91, 1
        %s1409 = scalar_select %p1408, %s91, 1
        %s1410 = smul.addr %s1409, 4
        %s1411 = smul.addr %s1410, 8
        %s1412 = scalar_lea.vmem %s29, %s1411
        %p1413 = scmp.lt.s32.totalorder %s91, 1
        %s1414 = scalar_select %p1413, %s91, 1
        %s1415 = scalar_lea.vmem %s31, %s1414
        %p1416 = scmp.lt.s32.totalorder %s91, 1
        %s1417 = scalar_select %p1416, %s91, 1
        %s1418 = scalar_lea.vmem %s33, %s1417
        %p1419 = scmp.lt.s32.totalorder %s91, 1
        %s1420 = scalar_select %p1419, %s91, 1
        %s1421 = scalar_lea.vmem %s35, %s1420
        %p1422 = scmp.lt.s32.totalorder %s91, 1
        %s1423 = scalar_select %p1422, %s91, 1
        %s1424 = scalar_lea.vmem %s37, %s1423
        %p1425 = scmp.lt.s32.totalorder %s91, 1
        %s1426 = scalar_select %p1425, %s91, 1
        %s1427 = scalar_lea.vmem %s39, %s1426
        %p1428 = scmp.lt.s32.totalorder %s91, 1
        %s1429 = scalar_select %p1428, %s91, 1
        %s1430 = scalar_lea.vmem %s41, %s1429
        %p1431 = scmp.lt.s32.totalorder %s91, 1
        %s1432 = scalar_select %p1431, %s91, 1
        %s1433 = scalar_lea.vmem %s43, %s1432
        %p1434 = scmp.lt.s32.totalorder %s91, 1
        %s1435 = scalar_select %p1434, %s91, 1
        %s1436 = smul.addr %s1435, 4
        %s1437 = smul.addr %s1436, 8
        %s1438 = scalar_lea.vmem %s45, %s1437
        %p1439 = scmp.lt.s32.totalorder %s91, 1
        %s1440 = scalar_select %p1439, %s91, 1
        %s1441 = scalar_lea.vmem %s47, %s1440
        %p1442 = scmp.lt.s32.totalorder %s91, 1
        %s1443 = scalar_select %p1442, %s91, 1
        %s1444 = smul.addr %s1443, 8
        %s1445 = smul.addr %s1444, 8
        %s1446 = scalar_lea.vmem %s49, %s1445
        %p1447 = scmp.lt.s32.totalorder %s91, 1
        %s1448 = scalar_select %p1447, %s91, 1
        %s1449 = scalar_lea.vmem %s51, %s1448
        %p1450 = scmp.lt.s32.totalorder %s90, 1
        %s1451 = scalar_select %p1450, %s90, 1
        %s1452 = scalar_lea.vmem %s69, %s1451
        %p1453 = scmp.eq.s32.totalorder %s91, 0
        // Predicated region
        $region165: #{tpu_custom_call.1} parent=155 // pred_check
          %p1454 = pneg %p1453
        $region166: #{tpu_custom_call.1} parent=155 // pred_check_branch
          %1456 = sbr.rel (%p1454) target = $region168
        $region167: #{tpu_custom_call.1} parent=155 // pred_region
          %v1457 = vld [vmem:[%s1368] sm:$0xff]
          %v1458 = vld [vmem:[%s9] sm:$0xff]
          %v1459 = vld [vmem:[%s9 + $0x8] sm:$0xff]
          %v1460 = vld [vmem:[%s9 + $0x10] sm:$0xff]
          %v1461 = vld [vmem:[%s9 + $0x18] sm:$0xff]
          %v1462 = vld [vmem:[#allocation6] sm:$0x1]
          %v1464 = vlaneseq
          %v1465 = vshrl.u32 %v1464, 7
          %v1466 = vsub.s32 0, %v1465
          %v1467 = vrot.slane %v1462, %v1466
          %vm1469 = vcmask 261120
          %v1471 = vsel %vm1469, %v1457, 0
          %1473 = vmatprep.subr.mxu0 0.0
          %1474 = vmatpush1.msra.mxu0 %v1458
          %1475 = vmatprep.subr.mxu0 0.0
          %1476 = vmatpush1.msra.mxu0 %v1459
          %1477 = vmatprep.subr.mxu0 0.0
          %1478 = vmatpush1.msra.mxu0 %v1460
          %1479 = vmatprep.subr.mxu0 0.0
          %1480 = vmatpush1.msra.mxu0 %v1461
          %1481 = vmatprep.subr.mxu0 0.0
          %1482 = vmatpush1.msra.mxu0 0.0
          %1483 = vmatprep.subr.mxu0 0.0
          %1484 = vmatpush1.msra.mxu0 0.0
          %1485 = vmatprep.subr.mxu0 0.0
          %1486 = vmatpush1.msra.mxu0 0.0
          %1487 = vmatprep.subr.mxu0 0.0
          %1488 = vmatpush1.msra.mxu0 0.0
          %1489 = vmatprep.subr.mxu0 0.0
          %1490 = vmatpush1.msra.mxu0 0.0
          %1491 = vmatprep.subr.mxu0 0.0
          %1492 = vmatpush1.msra.mxu0 0.0
          %1493 = vmatprep.subr.mxu0 0.0
          %1494 = vmatpush1.msra.mxu0 0.0
          %1495 = vmatprep.subr.mxu0 0.0
          %1496 = vmatpush1.msra.mxu0 0.0
          %1497 = vmatprep.subr.mxu0 0.0
          %1498 = vmatpush1.msra.mxu0 0.0
          %1499 = vmatprep.subr.mxu0 0.0
          %1500 = vmatpush1.msra.mxu0 0.0
          %1501 = vmatprep.subr.mxu0 0.0
          %1502 = vmatpush1.msra.mxu0 0.0
          %1503 = vmatprep.subr.mxu0 0.0
          %1504 = vmatpush1.msra.mxu0 0.0
          %1505 = vmatprep.subr.mxu0 0.0
          %1506 = vmatpush1.msra.mxu0 0.0
          %1507 = vmatprep.subr.mxu0 0.0
          %1508 = vmatpush1.msra.mxu0 0.0
          %1509 = vmatprep.subr.mxu0 0.0
          %1510 = vmatpush1.msra.mxu0 0.0
          %1511 = vmatprep.subr.mxu0 0.0
          %1512 = vmatpush1.msra.mxu0 0.0
          %1513 = vmatprep.subr.mxu0 0.0
          %1514 = vmatpush1.msra.mxu0 0.0
          %1515 = vmatprep.subr.mxu0 0.0
          %1516 = vmatpush1.msra.mxu0 0.0
          %1517 = vmatprep.subr.mxu0 0.0
          %1518 = vmatpush1.msra.mxu0 0.0
          %1519 = vmatprep.subr.mxu0 0.0
          %1520 = vmatpush1.msra.mxu0 0.0
          %1521 = vmatprep.subr.mxu0 0.0
          %1522 = vmatpush1.msra.mxu0 0.0
          %1523 = vmatprep.subr.mxu0 0.0
          %1524 = vmatpush1.msra.mxu0 0.0
          %1525 = vmatprep.subr.mxu0 0.0
          %1526 = vmatpush1.msra.mxu0 0.0
          %1527 = vmatprep.subr.mxu0 0.0
          %1528 = vmatpush1.msra.mxu0 0.0
          %1529 = vmatprep.subr.mxu0 0.0
          %1530 = vmatpush1.msra.mxu0 0.0
          %1531 = vmatprep.subr.mxu0 0.0
          %1532 = vmatpush1.msra.mxu0 0.0
          %1533 = vmatprep.subr.mxu0 0.0
          %1534 = vmatpush1.msra.mxu0 0.0
          %1535 = vmatprep.subr.mxu0 0.0
          %1536 = vmatpush1.msra.mxu0 0.0
          %1537 = vmatprep.mubr.f32.mxu0 0.0
          %1538 = vmatmul.mubr.f32.gmra.mrb[0].mxu0 %v1471
          %v1539 = vpop.f32.mrb[0].mxu0
          %v1540 = vadd.f32 %v1467, %v1539
          %v1541 = vpop.f32.mrb[0].mxu0
          %1542 = vdwg.mxu0
          %1543 = vst.msk [vmem:[#allocation2] sm:$0xff] %vm1469, %v1540
        $region168: #{tpu_custom_call.1} parent=155 // pred_fallthru
          _
        %v1544 = vld [vmem:[#allocation2] sm:$0xff]
        %v1545 = vld [vmem:[%s1193] sm:$0xff]
        %v1546 = vld [vmem:[%s1372] sm:$0xff]
        %v1547 = vld [vmem:[%s1375] sm:$0x1]
        %vm1548 = vcmp.eq.f32.partialorder %v1546, 0.0
        %vm1549 = vcmp.eq.f32.partialorder %v1547, 0.0
        %v1550 = vld [vmem:[%s1380] sm:$0xff]
        %v1551 = vld [vmem:[%s1380 + $0x8] sm:$0xff]
        %v1552 = vld [vmem:[%s1380 + $0x10] sm:$0xff]
        %v1553 = vld [vmem:[%s1380 + $0x18] sm:$0xff]
        %v1554 = vld [vmem:[%s1383] sm:$0x1]
        %v1556 = vlaneseq
        %v1557 = vshrl.u32 %v1556, 7
        %v1558 = vsub.s32 0, %v1557
        %v1559 = vrot.slane %v1554, %v1558
        %vm1561 = vcmask 261120
        %v1563 = vsel %vm1561, %v1544, 0
        %1565 = vmatprep.subr.mxu0 0.0
        %1566 = vmatpush1.msra.mxu0 %v1550
        %1567 = vmatprep.subr.mxu0 0.0
        %1568 = vmatpush1.msra.mxu0 %v1551
        %1569 = vmatprep.subr.mxu0 0.0
        %1570 = vmatpush1.msra.mxu0 %v1552
        %1571 = vmatprep.subr.mxu0 0.0
        %1572 = vmatpush1.msra.mxu0 %v1553
        %1573 = vmatprep.subr.mxu0 0.0
        %1574 = vmatpush1.msra.mxu0 0.0
        %1575 = vmatprep.subr.mxu0 0.0
        %1576 = vmatpush1.msra.mxu0 0.0
        %1577 = vmatprep.subr.mxu0 0.0
        %1578 = vmatpush1.msra.mxu0 0.0
        %1579 = vmatprep.subr.mxu0 0.0
        %1580 = vmatpush1.msra.mxu0 0.0
        %1581 = vmatprep.subr.mxu0 0.0
        %1582 = vmatpush1.msra.mxu0 0.0
        %1583 = vmatprep.subr.mxu0 0.0
        %1584 = vmatpush1.msra.mxu0 0.0
        %1585 = vmatprep.subr.mxu0 0.0
        %1586 = vmatpush1.msra.mxu0 0.0
        %1587 = vmatprep.subr.mxu0 0.0
        %1588 = vmatpush1.msra.mxu0 0.0
        %1589 = vmatprep.subr.mxu0 0.0
        %1590 = vmatpush1.msra.mxu0 0.0
        %1591 = vmatprep.subr.mxu0 0.0
        %1592 = vmatpush1.msra.mxu0 0.0
        %1593 = vmatprep.subr.mxu0 0.0
        %1594 = vmatpush1.msra.mxu0 0.0
        %1595 = vmatprep.subr.mxu0 0.0
        %1596 = vmatpush1.msra.mxu0 0.0
        %1597 = vmatprep.subr.mxu0 0.0
        %1598 = vmatpush1.msra.mxu0 0.0
        %1599 = vmatprep.subr.mxu0 0.0
        %1600 = vmatpush1.msra.mxu0 0.0
        %1601 = vmatprep.subr.mxu0 0.0
        %1602 = vmatpush1.msra.mxu0 0.0
        %1603 = vmatprep.subr.mxu0 0.0
        %1604 = vmatpush1.msra.mxu0 0.0
        %1605 = vmatprep.subr.mxu0 0.0
        %1606 = vmatpush1.msra.mxu0 0.0
        %1607 = vmatprep.subr.mxu0 0.0
        %1608 = vmatpush1.msra.mxu0 0.0
        %1609 = vmatprep.subr.mxu0 0.0
        %1610 = vmatpush1.msra.mxu0 0.0
        %1611 = vmatprep.subr.mxu0 0.0
        %1612 = vmatpush1.msra.mxu0 0.0
        %1613 = vmatprep.subr.mxu0 0.0
        %1614 = vmatpush1.msra.mxu0 0.0
        %1615 = vmatprep.subr.mxu0 0.0
        %1616 = vmatpush1.msra.mxu0 0.0
        %1617 = vmatprep.subr.mxu0 0.0
        %1618 = vmatpush1.msra.mxu0 0.0
        %1619 = vmatprep.subr.mxu0 0.0
        %1620 = vmatpush1.msra.mxu0 0.0
        %1621 = vmatprep.subr.mxu0 0.0
        %1622 = vmatpush1.msra.mxu0 0.0
        %1623 = vmatprep.subr.mxu0 0.0
        %1624 = vmatpush1.msra.mxu0 0.0
        %1625 = vmatprep.subr.mxu0 0.0
        %1626 = vmatpush1.msra.mxu0 0.0
        %1627 = vmatprep.subr.mxu0 0.0
        %1628 = vmatpush1.msra.mxu0 0.0
        %1629 = vmatprep.mubr.f32.mxu0 0.0
        %1630 = vmatmul.mubr.f32.gmra.mrb[0].mxu0 %v1563
        %v1631 = vpop.f32.mrb[0].mxu0
        %v1632 = vadd.f32 %v1559, %v1631
        %v1633 = vpop.f32.mrb[0].mxu0
        %1634 = vdwg.mxu0
        %1636 = vrot.lane.b32.xlu0 %v1632, 96
        %v1637 = vpop.permute.xlu0 %1636
        %vm1638 = vcmask 64512
        %v1639 = vsel %vm1638, %v1632, 0
        %v1641 = vsel %vm1638, %v1637, 0
        %1643 = vmatprep.subr.mxu0 0.0
        %1644 = vmatpush1.xpose.msra.mxu0 %v1641
        %1645 = vmatprep.subr.mxu0 0.0
        %1646 = vmatpush1.xpose.msra.mxu0 0.0
        %1647 = vmatprep.subr.mxu0 0.0
        %1648 = vmatpush1.xpose.msra.mxu0 0.0
        %1649 = vmatprep.subr.mxu0 0.0
        %1650 = vmatpush1.xpose.msra.mxu0 0.0
        %1651 = vmatprep.subr.mxu0 0.0
        %1652 = vmatpush1.xpose.msra.mxu0 0.0
        %1653 = vmatprep.subr.mxu0 0.0
        %1654 = vmatpush1.xpose.msra.mxu0 0.0
        %1655 = vmatprep.subr.mxu0 0.0
        %1656 = vmatpush1.xpose.msra.mxu0 0.0
        %1657 = vmatprep.subr.mxu0 0.0
        %1658 = vmatpush1.xpose.msra.mxu0 0.0
        %1659 = vmatprep.subr.mxu0 0.0
        %1660 = vmatpush1.xpose.msra.mxu0 0.0
        %1661 = vmatprep.subr.mxu0 0.0
        %1662 = vmatpush1.xpose.msra.mxu0 0.0
        %1663 = vmatprep.subr.mxu0 0.0
        %1664 = vmatpush1.xpose.msra.mxu0 0.0
        %1665 = vmatprep.subr.mxu0 0.0
        %1666 = vmatpush1.xpose.msra.mxu0 0.0
        %1667 = vmatprep.subr.mxu0 0.0
        %1668 = vmatpush1.xpose.msra.mxu0 0.0
        %1669 = vmatprep.subr.mxu0 0.0
        %1670 = vmatpush1.xpose.msra.mxu0 0.0
        %1671 = vmatprep.subr.mxu0 0.0
        %1672 = vmatpush1.xpose.msra.mxu0 0.0
        %1673 = vmatprep.subr.mxu0 0.0
        %1674 = vmatpush1.xpose.msra.mxu0 0.0
        %1675 = vmatprep.subr.mxu0 0.0
        %1676 = vmatpush1.xpose.msra.mxu0 0.0
        %1677 = vmatprep.subr.mxu0 0.0
        %1678 = vmatpush1.xpose.msra.mxu0 0.0
        %1679 = vmatprep.subr.mxu0 0.0
        %1680 = vmatpush1.xpose.msra.mxu0 0.0
        %1681 = vmatprep.subr.mxu0 0.0
        %1682 = vmatpush1.xpose.msra.mxu0 0.0
        %1683 = vmatprep.subr.mxu0 0.0
        %1684 = vmatpush1.xpose.msra.mxu0 0.0
        %1685 = vmatprep.subr.mxu0 0.0
        %1686 = vmatpush1.xpose.msra.mxu0 0.0
        %1687 = vmatprep.subr.mxu0 0.0
        %1688 = vmatpush1.xpose.msra.mxu0 0.0
        %1689 = vmatprep.subr.mxu0 0.0
        %1690 = vmatpush1.xpose.msra.mxu0 0.0
        %1691 = vmatprep.subr.mxu0 0.0
        %1692 = vmatpush1.xpose.msra.mxu0 0.0
        %1693 = vmatprep.subr.mxu0 0.0
        %1694 = vmatpush1.xpose.msra.mxu0 0.0
        %1695 = vmatprep.subr.mxu0 0.0
        %1696 = vmatpush1.xpose.msra.mxu0 0.0
        %1697 = vmatprep.subr.mxu0 0.0
        %1698 = vmatpush1.xpose.msra.mxu0 0.0
        %1699 = vmatprep.subr.mxu0 0.0
        %1700 = vmatpush1.xpose.msra.mxu0 0.0
        %1701 = vmatprep.subr.mxu0 0.0
        %1702 = vmatpush1.xpose.msra.mxu0 0.0
        %1703 = vmatprep.subr.mxu0 0.0
        %1704 = vmatpush1.xpose.msra.mxu0 0.0
        %1705 = vmatprep.subr.mxu0 0.0
        %1706 = vmatpush1.xpose.msra.mxu0 0.0
        %1707 = vmatprep.mubr.f32.mxu0 0.0
        %1708 = vmatmul.mubr.f32.gmra.mrb[0].mxu0 %v1639
        %v1709 = vpop.f32.mrb[0].mxu0
        %v1710 = vadd.f32 0.0, %v1709
        %v1711 = vpop.f32.mrb[0].mxu0
        %1712 = vdwg.mxu0
        %v1713 = vmul.f32 %v1710, 0.35355338
        %v1714 = vsel %vm1548, 1, 0
        %1715 = vset.pattern.permute.xlu0 0
        %1716 = vperm.xlu0 %1715, %v1714
        %v1717 = vpop.permute.xlu0 %1716
        %vm1718 = vcmp.eq.s32.totalorder %v1717, 1
        %v1719 = vsel %vm1718, -1e+10, %v1713
        %v1720 = vsel %vm1638, %v1719, -inf
        %1721 = vmax.xlane.f32.xlu0 %v1720
        %v1722 = vpop.xlane.xlu0 %1721
        %v1723 = vsub.f32 %v1719, %v1722
        %v1724 = vmul.f32 %v1723, 1.442695
        %v1725 = vpow.pop %v1724
        %v1726 = vsel %vm1638, %v1725, 0.0
        %1727 = vadd.xlane.f32.xlu0 %v1726
        %v1728 = vpop.xlane.xlu0 %1727
        %v1729 = vrcp.pop %v1728
        %v1730 = vmul.f32 %v1725, %v1729
        %1731 = vrot.lane.b32.xlu0 %v1632, 64
        %v1732 = vpop.permute.xlu0 %1731
        %v1735 = vsel %vm1638, %v1730, 0
        %1737 = vmatprep.subr.mxu0 0.0
        %1738 = vmatpush1.msra.mxu0 %v1732
        %1739 = vmatprep.subr.mxu0 0.0
        %1740 = vmatpush1.msra.mxu0 0.0
        %1741 = vmatprep.subr.mxu0 0.0
        %1742 = vmatpush1.msra.mxu0 0.0
        %1743 = vmatprep.subr.mxu0 0.0
        %1744 = vmatpush1.msra.mxu0 0.0
        %1745 = vmatprep.subr.mxu0 0.0
        %1746 = vmatpush1.msra.mxu0 0.0
        %1747 = vmatprep.subr.mxu0 0.0
        %1748 = vmatpush1.msra.mxu0 0.0
        %1749 = vmatprep.subr.mxu0 0.0
        %1750 = vmatpush1.msra.mxu0 0.0
        %1751 = vmatprep.subr.mxu0 0.0
        %1752 = vmatpush1.msra.mxu0 0.0
        %1753 = vmatprep.subr.mxu0 0.0
        %1754 = vmatpush1.msra.mxu0 0.0
        %1755 = vmatprep.subr.mxu0 0.0
        %1756 = vmatpush1.msra.mxu0 0.0
        %1757 = vmatprep.subr.mxu0 0.0
        %1758 = vmatpush1.msra.mxu0 0.0
        %1759 = vmatprep.subr.mxu0 0.0
        %1760 = vmatpush1.msra.mxu0 0.0
        %1761 = vmatprep.subr.mxu0 0.0
        %1762 = vmatpush1.msra.mxu0 0.0
        %1763 = vmatprep.subr.mxu0 0.0
        %1764 = vmatpush1.msra.mxu0 0.0
        %1765 = vmatprep.subr.mxu0 0.0
        %1766 = vmatpush1.msra.mxu0 0.0
        %1767 = vmatprep.subr.mxu0 0.0
        %1768 = vmatpush1.msra.mxu0 0.0
        %1769 = vmatprep.subr.mxu0 0.0
        %1770 = vmatpush1.msra.mxu0 0.0
        %1771 = vmatprep.subr.mxu0 0.0
        %1772 = vmatpush1.msra.mxu0 0.0
        %1773 = vmatprep.subr.mxu0 0.0
        %1774 = vmatpush1.msra.mxu0 0.0
        %1775 = vmatprep.subr.mxu0 0.0
        %1776 = vmatpush1.msra.mxu0 0.0
        %1777 = vmatprep.subr.mxu0 0.0
        %1778 = vmatpush1.msra.mxu0 0.0
        %1779 = vmatprep.subr.mxu0 0.0
        %1780 = vmatpush1.msra.mxu0 0.0
        %1781 = vmatprep.subr.mxu0 0.0
        %1782 = vmatpush1.msra.mxu0 0.0
        %1783 = vmatprep.subr.mxu0 0.0
        %1784 = vmatpush1.msra.mxu0 0.0
        %1785 = vmatprep.subr.mxu0 0.0
        %1786 = vmatpush1.msra.mxu0 0.0
        %1787 = vmatprep.subr.mxu0 0.0
        %1788 = vmatpush1.msra.mxu0 0.0
        %1789 = vmatprep.subr.mxu0 0.0
        %1790 = vmatpush1.msra.mxu0 0.0
        %1791 = vmatprep.subr.mxu0 0.0
        %1792 = vmatpush1.msra.mxu0 0.0
        %1793 = vmatprep.subr.mxu0 0.0
        %1794 = vmatpush1.msra.mxu0 0.0
        %1795 = vmatprep.subr.mxu0 0.0
        %1796 = vmatpush1.msra.mxu0 0.0
        %1797 = vmatprep.subr.mxu0 0.0
        %1798 = vmatpush1.msra.mxu0 0.0
        %1799 = vmatprep.subr.mxu0 0.0
        %1800 = vmatpush1.msra.mxu0 0.0
        %1801 = vmatprep.mubr.f32.mxu0 0.0
        %1802 = vmatmul.mubr.f32.gmra.mrb[0].mxu0 %v1735
        %v1803 = vpop.f32.mrb[0].mxu0
        %v1804 = vadd.f32 0.0, %v1803
        %v1805 = vpop.f32.mrb[0].mxu0
        %1806 = vdwg.mxu0
        %1807 = vrot.lane.b32.xlu0 %v1632, 120
        %v1808 = vpop.permute.xlu0 %1807
        %1809 = vrot.lane.b32.xlu0 %v1632, 88
        %v1810 = vpop.permute.xlu0 %1809
        %v1811 = vsel %vm1638, %v1808, 0
        %v1813 = vsel %vm1638, %v1810, 0
        %1815 = vmatprep.subr.mxu0 0.0
        %1816 = vmatpush1.xpose.msra.mxu0 %v1813
        %1817 = vmatprep.subr.mxu0 0.0
        %1818 = vmatpush1.xpose.msra.mxu0 0.0
        %1819 = vmatprep.subr.mxu0 0.0
        %1820 = vmatpush1.xpose.msra.mxu0 0.0
        %1821 = vmatprep.subr.mxu0 0.0
        %1822 = vmatpush1.xpose.msra.mxu0 0.0
        %1823 = vmatprep.subr.mxu0 0.0
        %1824 = vmatpush1.xpose.msra.mxu0 0.0
        %1825 = vmatprep.subr.mxu0 0.0
        %1826 = vmatpush1.xpose.msra.mxu0 0.0
        %1827 = vmatprep.subr.mxu0 0.0
        %1828 = vmatpush1.xpose.msra.mxu0 0.0
        %1829 = vmatprep.subr.mxu0 0.0
        %1830 = vmatpush1.xpose.msra.mxu0 0.0
        %1831 = vmatprep.subr.mxu0 0.0
        %1832 = vmatpush1.xpose.msra.mxu0 0.0
        %1833 = vmatprep.subr.mxu0 0.0
        %1834 = vmatpush1.xpose.msra.mxu0 0.0
        %1835 = vmatprep.subr.mxu0 0.0
        %1836 = vmatpush1.xpose.msra.mxu0 0.0
        %1837 = vmatprep.subr.mxu0 0.0
        %1838 = vmatpush1.xpose.msra.mxu0 0.0
        %1839 = vmatprep.subr.mxu0 0.0
        %1840 = vmatpush1.xpose.msra.mxu0 0.0
        %1841 = vmatprep.subr.mxu0 0.0
        %1842 = vmatpush1.xpose.msra.mxu0 0.0
        %1843 = vmatprep.subr.mxu0 0.0
        %1844 = vmatpush1.xpose.msra.mxu0 0.0
        %1845 = vmatprep.subr.mxu0 0.0
        %1846 = vmatpush1.xpose.msra.mxu0 0.0
        %1847 = vmatprep.subr.mxu0 0.0
        %1848 = vmatpush1.xpose.msra.mxu0 0.0
        %1849 = vmatprep.subr.mxu0 0.0
        %1850 = vmatpush1.xpose.msra.mxu0 0.0
        %1851 = vmatprep.subr.mxu0 0.0
        %1852 = vmatpush1.xpose.msra.mxu0 0.0
        %1853 = vmatprep.subr.mxu0 0.0
        %1854 = vmatpush1.xpose.msra.mxu0 0.0
        %1855 = vmatprep.subr.mxu0 0.0
        %1856 = vmatpush1.xpose.msra.mxu0 0.0
        %1857 = vmatprep.subr.mxu0 0.0
        %1858 = vmatpush1.xpose.msra.mxu0 0.0
        %1859 = vmatprep.subr.mxu0 0.0
        %1860 = vmatpush1.xpose.msra.mxu0 0.0
        %1861 = vmatprep.subr.mxu0 0.0
        %1862 = vmatpush1.xpose.msra.mxu0 0.0
        %1863 = vmatprep.subr.mxu0 0.0
        %1864 = vmatpush1.xpose.msra.mxu0 0.0
        %1865 = vmatprep.subr.mxu0 0.0
        %1866 = vmatpush1.xpose.msra.mxu0 0.0
        %1867 = vmatprep.subr.mxu0 0.0
        %1868 = vmatpush1.xpose.msra.mxu0 0.0
        %1869 = vmatprep.subr.mxu0 0.0
        %1870 = vmatpush1.xpose.msra.mxu0 0.0
        %1871 = vmatprep.subr.mxu0 0.0
        %1872 = vmatpush1.xpose.msra.mxu0 0.0
        %1873 = vmatprep.subr.mxu0 0.0
        %1874 = vmatpush1.xpose.msra.mxu0 0.0
        %1875 = vmatprep.subr.mxu0 0.0
        %1876 = vmatpush1.xpose.msra.mxu0 0.0
        %1877 = vmatprep.subr.mxu0 0.0
        %1878 = vmatpush1.xpose.msra.mxu0 0.0
        %1879 = vmatprep.mubr.f32.mxu0 0.0
        %1880 = vmatmul.mubr.f32.gmra.mrb[0].mxu0 %v1811
        %v1881 = vpop.f32.mrb[0].mxu0
        %v1882 = vadd.f32 0.0, %v1881
        %v1883 = vpop.f32.mrb[0].mxu0
        %1884 = vdwg.mxu0
        %v1885 = vmul.f32 %v1882, 0.35355338
        %v1886 = vsel %vm1718, -1e+10, %v1885
        %v1887 = vsel %vm1638, %v1886, -inf
        %1888 = vmax.xlane.f32.xlu0 %v1887
        %v1889 = vpop.xlane.xlu0 %1888
        %v1890 = vsub.f32 %v1886, %v1889
        %v1891 = vmul.f32 %v1890, 1.442695
        %v1892 = vpow.pop %v1891
        %v1893 = vsel %vm1638, %v1892, 0.0
        %1894 = vadd.xlane.f32.xlu0 %v1893
        %v1895 = vpop.xlane.xlu0 %1894
        %v1896 = vrcp.pop %v1895
        %v1897 = vmul.f32 %v1892, %v1896
        %1898 = vrot.lane.b32.xlu0 %v1632, 56
        %v1899 = vpop.permute.xlu0 %1898
        %v1902 = vsel %vm1638, %v1897, 0
        %1904 = vmatprep.subr.mxu0 0.0
        %1905 = vmatpush1.msra.mxu0 %v1899
        %1906 = vmatprep.subr.mxu0 0.0
        %1907 = vmatpush1.msra.mxu0 0.0
        %1908 = vmatprep.subr.mxu0 0.0
        %1909 = vmatpush1.msra.mxu0 0.0
        %1910 = vmatprep.subr.mxu0 0.0
        %1911 = vmatpush1.msra.mxu0 0.0
        %1912 = vmatprep.subr.mxu0 0.0
        %1913 = vmatpush1.msra.mxu0 0.0
        %1914 = vmatprep.subr.mxu0 0.0
        %1915 = vmatpush1.msra.mxu0 0.0
        %1916 = vmatprep.subr.mxu0 0.0
        %1917 = vmatpush1.msra.mxu0 0.0
        %1918 = vmatprep.subr.mxu0 0.0
        %1919 = vmatpush1.msra.mxu0 0.0
        %1920 = vmatprep.subr.mxu0 0.0
        %1921 = vmatpush1.msra.mxu0 0.0
        %1922 = vmatprep.subr.mxu0 0.0
        %1923 = vmatpush1.msra.mxu0 0.0
        %1924 = vmatprep.subr.mxu0 0.0
        %1925 = vmatpush1.msra.mxu0 0.0
        %1926 = vmatprep.subr.mxu0 0.0
        %1927 = vmatpush1.msra.mxu0 0.0
        %1928 = vmatprep.subr.mxu0 0.0
        %1929 = vmatpush1.msra.mxu0 0.0
        %1930 = vmatprep.subr.mxu0 0.0
        %1931 = vmatpush1.msra.mxu0 0.0
        %1932 = vmatprep.subr.mxu0 0.0
        %1933 = vmatpush1.msra.mxu0 0.0
        %1934 = vmatprep.subr.mxu0 0.0
        %1935 = vmatpush1.msra.mxu0 0.0
        %1936 = vmatprep.subr.mxu0 0.0
        %1937 = vmatpush1.msra.mxu0 0.0
        %1938 = vmatprep.subr.mxu0 0.0
        %1939 = vmatpush1.msra.mxu0 0.0
        %1940 = vmatprep.subr.mxu0 0.0
        %1941 = vmatpush1.msra.mxu0 0.0
        %1942 = vmatprep.subr.mxu0 0.0
        %1943 = vmatpush1.msra.mxu0 0.0
        %1944 = vmatprep.subr.mxu0 0.0
        %1945 = vmatpush1.msra.mxu0 0.0
        %1946 = vmatprep.subr.mxu0 0.0
        %1947 = vmatpush1.msra.mxu0 0.0
        %1948 = vmatprep.subr.mxu0 0.0
        %1949 = vmatpush1.msra.mxu0 0.0
        %1950 = vmatprep.subr.mxu0 0.0
        %1951 = vmatpush1.msra.mxu0 0.0
        %1952 = vmatprep.subr.mxu0 0.0
        %1953 = vmatpush1.msra.mxu0 0.0
        %1954 = vmatprep.subr.mxu0 0.0
        %1955 = vmatpush1.msra.mxu0 0.0
        %1956 = vmatprep.subr.mxu0 0.0
        %1957 = vmatpush1.msra.mxu0 0.0
        %1958 = vmatprep.subr.mxu0 0.0
        %1959 = vmatpush1.msra.mxu0 0.0
        %1960 = vmatprep.subr.mxu0 0.0
        %1961 = vmatpush1.msra.mxu0 0.0
        %1962 = vmatprep.subr.mxu0 0.0
        %1963 = vmatpush1.msra.mxu0 0.0
        %1964 = vmatprep.subr.mxu0 0.0
        %1965 = vmatpush1.msra.mxu0 0.0
        %1966 = vmatprep.subr.mxu0 0.0
        %1967 = vmatpush1.msra.mxu0 0.0
        %1968 = vmatprep.mubr.f32.mxu0 0.0
        %1969 = vmatmul.mubr.f32.gmra.mrb[0].mxu0 %v1902
        %v1970 = vpop.f32.mrb[0].mxu0
        %v1971 = vadd.f32 0.0, %v1970
        %v1972 = vpop.f32.mrb[0].mxu0
        %1973 = vdwg.mxu0
        %1974 = vrot.lane.b32.xlu0 %v1632, 112
        %v1975 = vpop.permute.xlu0 %1974
        %1976 = vrot.lane.b32.xlu0 %v1632, 80
        %v1977 = vpop.permute.xlu0 %1976
        %v1978 = vsel %vm1638, %v1975, 0
        %v1980 = vsel %vm1638, %v1977, 0
        %1982 = vmatprep.subr.mxu0 0.0
        %1983 = vmatpush1.xpose.msra.mxu0 %v1980
        %1984 = vmatprep.subr.mxu0 0.0
        %1985 = vmatpush1.xpose.msra.mxu0 0.0
        %1986 = vmatprep.subr.mxu0 0.0
        %1987 = vmatpush1.xpose.msra.mxu0 0.0
        %1988 = vmatprep.subr.mxu0 0.0
        %1989 = vmatpush1.xpose.msra.mxu0 0.0
        %1990 = vmatprep.subr.mxu0 0.0
        %1991 = vmatpush1.xpose.msra.mxu0 0.0
        %1992 = vmatprep.subr.mxu0 0.0
        %1993 = vmatpush1.xpose.msra.mxu0 0.0
        %1994 = vmatprep.subr.mxu0 0.0
        %1995 = vmatpush1.xpose.msra.mxu0 0.0
        %1996 = vmatprep.subr.mxu0 0.0
        %1997 = vmatpush1.xpose.msra.mxu0 0.0
        %1998 = vmatprep.subr.mxu0 0.0
        %1999 = vmatpush1.xpose.msra.mxu0 0.0
        %2000 = vmatprep.subr.mxu0 0.0
        %2001 = vmatpush1.xpose.msra.mxu0 0.0
        %2002 = vmatprep.subr.mxu0 0.0
        %2003 = vmatpush1.xpose.msra.mxu0 0.0
        %2004 = vmatprep.subr.mxu0 0.0
        %2005 = vmatpush1.xpose.msra.mxu0 0.0
        %2006 = vmatprep.subr.mxu0 0.0
        %2007 = vmatpush1.xpose.msra.mxu0 0.0
        %2008 = vmatprep.subr.mxu0 0.0
        %2009 = vmatpush1.xpose.msra.mxu0 0.0
        %2010 = vmatprep.subr.mxu0 0.0
        %2011 = vmatpush1.xpose.msra.mxu0 0.0
        %2012 = vmatprep.subr.mxu0 0.0
        %2013 = vmatpush1.xpose.msra.mxu0 0.0
        %2014 = vmatprep.subr.mxu0 0.0
        %2015 = vmatpush1.xpose.msra.mxu0 0.0
        %2016 = vmatprep.subr.mxu0 0.0
        %2017 = vmatpush1.xpose.msra.mxu0 0.0
        %2018 = vmatprep.subr.mxu0 0.0
        %2019 = vmatpush1.xpose.msra.mxu0 0.0
        %2020 = vmatprep.subr.mxu0 0.0
        %2021 = vmatpush1.xpose.msra.mxu0 0.0
        %2022 = vmatprep.subr.mxu0 0.0
        %2023 = vmatpush1.xpose.msra.mxu0 0.0
        %2024 = vmatprep.subr.mxu0 0.0
        %2025 = vmatpush1.xpose.msra.mxu0 0.0
        %2026 = vmatprep.subr.mxu0 0.0
        %2027 = vmatpush1.xpose.msra.mxu0 0.0
        %2028 = vmatprep.subr.mxu0 0.0
        %2029 = vmatpush1.xpose.msra.mxu0 0.0
        %2030 = vmatprep.subr.mxu0 0.0
        %2031 = vmatpush1.xpose.msra.mxu0 0.0
        %2032 = vmatprep.subr.mxu0 0.0
        %2033 = vmatpush1.xpose.msra.mxu0 0.0
        %2034 = vmatprep.subr.mxu0 0.0
        %2035 = vmatpush1.xpose.msra.mxu0 0.0
        %2036 = vmatprep.subr.mxu0 0.0
        %2037 = vmatpush1.xpose.msra.mxu0 0.0
        %2038 = vmatprep.subr.mxu0 0.0
        %2039 = vmatpush1.xpose.msra.mxu0 0.0
        %2040 = vmatprep.subr.mxu0 0.0
        %2041 = vmatpush1.xpose.msra.mxu0 0.0
        %2042 = vmatprep.subr.mxu0 0.0
        %2043 = vmatpush1.xpose.msra.mxu0 0.0
        %2044 = vmatprep.subr.mxu0 0.0
        %2045 = vmatpush1.xpose.msra.mxu0 0.0
        %2046 = vmatprep.mubr.f32.mxu0 0.0
        %2047 = vmatmul.mubr.f32.gmra.mrb[0].mxu0 %v1978
        %v2048 = vpop.f32.mrb[0].mxu0
        %v2049 = vadd.f32 0.0, %v2048
        %v2050 = vpop.f32.mrb[0].mxu0
        %2051 = vdwg.mxu0
        %v2052 = vmul.f32 %v2049, 0.35355338
        %v2053 = vsel %vm1718, -1e+10, %v2052
        %v2054 = vsel %vm1638, %v2053, -inf
        %2055 = vmax.xlane.f32.xlu0 %v2054
        %v2056 = vpop.xlane.xlu0 %2055
        %v2057 = vsub.f32 %v2053, %v2056
        %v2058 = vmul.f32 %v2057, 1.442695
        %v2059 = vpow.pop %v2058
        %v2060 = vsel %vm1638, %v2059, 0.0
        %2061 = vadd.xlane.f32.xlu0 %v2060
        %v2062 = vpop.xlane.xlu0 %2061
        %v2063 = vrcp.pop %v2062
        %v2064 = vmul.f32 %v2059, %v2063
        %2065 = vrot.lane.b32.xlu0 %v1632, 48
        %v2066 = vpop.permute.xlu0 %2065
        %v2069 = vsel %vm1638, %v2064, 0
        %2071 = vmatprep.subr.mxu0 0.0
        %2072 = vmatpush1.msra.mxu0 %v2066
        %2073 = vmatprep.subr.mxu0 0.0
        %2074 = vmatpush1.msra.mxu0 0.0
        %2075 = vmatprep.subr.mxu0 0.0
        %2076 = vmatpush1.msra.mxu0 0.0
        %2077 = vmatprep.subr.mxu0 0.0
        %2078 = vmatpush1.msra.mxu0 0.0
        %2079 = vmatprep.subr.mxu0 0.0
        %2080 = vmatpush1.msra.mxu0 0.0
        %2081 = vmatprep.subr.mxu0 0.0
        %2082 = vmatpush1.msra.mxu0 0.0
        %2083 = vmatprep.subr.mxu0 0.0
        %2084 = vmatpush1.msra.mxu0 0.0
        %2085 = vmatprep.subr.mxu0 0.0
        %2086 = vmatpush1.msra.mxu0 0.0
        %2087 = vmatprep.subr.mxu0 0.0
        %2088 = vmatpush1.msra.mxu0 0.0
        %2089 = vmatprep.subr.mxu0 0.0
        %2090 = vmatpush1.msra.mxu0 0.0
        %2091 = vmatprep.subr.mxu0 0.0
        %2092 = vmatpush1.msra.mxu0 0.0
        %2093 = vmatprep.subr.mxu0 0.0
        %2094 = vmatpush1.msra.mxu0 0.0
        %2095 = vmatprep.subr.mxu0 0.0
        %2096 = vmatpush1.msra.mxu0 0.0
        %2097 = vmatprep.subr.mxu0 0.0
        %2098 = vmatpush1.msra.mxu0 0.0
        %2099 = vmatprep.subr.mxu0 0.0
        %2100 = vmatpush1.msra.mxu0 0.0
        %2101 = vmatprep.subr.mxu0 0.0
        %2102 = vmatpush1.msra.mxu0 0.0
        %2103 = vmatprep.subr.mxu0 0.0
        %2104 = vmatpush1.msra.mxu0 0.0
        %2105 = vmatprep.subr.mxu0 0.0
        %2106 = vmatpush1.msra.mxu0 0.0
        %2107 = vmatprep.subr.mxu0 0.0
        %2108 = vmatpush1.msra.mxu0 0.0
        %2109 = vmatprep.subr.mxu0 0.0
        %2110 = vmatpush1.msra.mxu0 0.0
        %2111 = vmatprep.subr.mxu0 0.0
        %2112 = vmatpush1.msra.mxu0 0.0
        %2113 = vmatprep.subr.mxu0 0.0
        %2114 = vmatpush1.msra.mxu0 0.0
        %2115 = vmatprep.subr.mxu0 0.0
        %2116 = vmatpush1.msra.mxu0 0.0
        %2117 = vmatprep.subr.mxu0 0.0
        %2118 = vmatpush1.msra.mxu0 0.0
        %2119 = vmatprep.subr.mxu0 0.0
        %2120 = vmatpush1.msra.mxu0 0.0
        %2121 = vmatprep.subr.mxu0 0.0
        %2122 = vmatpush1.msra.mxu0 0.0
        %2123 = vmatprep.subr.mxu0 0.0
        %2124 = vmatpush1.msra.mxu0 0.0
        %2125 = vmatprep.subr.mxu0 0.0
        %2126 = vmatpush1.msra.mxu0 0.0
        %2127 = vmatprep.subr.mxu0 0.0
        %2128 = vmatpush1.msra.mxu0 0.0
        %2129 = vmatprep.subr.mxu0 0.0
        %2130 = vmatpush1.msra.mxu0 0.0
        %2131 = vmatprep.subr.mxu0 0.0
        %2132 = vmatpush1.msra.mxu0 0.0
        %2133 = vmatprep.subr.mxu0 0.0
        %2134 = vmatpush1.msra.mxu0 0.0
        %2135 = vmatprep.mubr.f32.mxu0 0.0
        %2136 = vmatmul.mubr.f32.gmra.mrb[0].mxu0 %v2069
        %v2137 = vpop.f32.mrb[0].mxu0
        %v2138 = vadd.f32 0.0, %v2137
        %v2139 = vpop.f32.mrb[0].mxu0
        %2140 = vdwg.mxu0
        %2141 = vrot.lane.b32.xlu0 %v1632, 104
        %v2142 = vpop.permute.xlu0 %2141
        %2143 = vrot.lane.b32.xlu0 %v1632, 72
        %v2144 = vpop.permute.xlu0 %2143
        %v2145 = vsel %vm1638, %v2142, 0
        %v2147 = vsel %vm1638, %v2144, 0
        %2149 = vmatprep.subr.mxu0 0.0
        %2150 = vmatpush1.xpose.msra.mxu0 %v2147
        %2151 = vmatprep.subr.mxu0 0.0
        %2152 = vmatpush1.xpose.msra.mxu0 0.0
        %2153 = vmatprep.subr.mxu0 0.0
        %2154 = vmatpush1.xpose.msra.mxu0 0.0
        %2155 = vmatprep.subr.mxu0 0.0
        %2156 = vmatpush1.xpose.msra.mxu0 0.0
        %2157 = vmatprep.subr.mxu0 0.0
        %2158 = vmatpush1.xpose.msra.mxu0 0.0
        %2159 = vmatprep.subr.mxu0 0.0
        %2160 = vmatpush1.xpose.msra.mxu0 0.0
        %2161 = vmatprep.subr.mxu0 0.0
        %2162 = vmatpush1.xpose.msra.mxu0 0.0
        %2163 = vmatprep.subr.mxu0 0.0
        %2164 = vmatpush1.xpose.msra.mxu0 0.0
        %2165 = vmatprep.subr.mxu0 0.0
        %2166 = vmatpush1.xpose.msra.mxu0 0.0
        %2167 = vmatprep.subr.mxu0 0.0
        %2168 = vmatpush1.xpose.msra.mxu0 0.0
        %2169 = vmatprep.subr.mxu0 0.0
        %2170 = vmatpush1.xpose.msra.mxu0 0.0
        %2171 = vmatprep.subr.mxu0 0.0
        %2172 = vmatpush1.xpose.msra.mxu0 0.0
        %2173 = vmatprep.subr.mxu0 0.0
        %2174 = vmatpush1.xpose.msra.mxu0 0.0
        %2175 = vmatprep.subr.mxu0 0.0
        %2176 = vmatpush1.xpose.msra.mxu0 0.0
        %2177 = vmatprep.subr.mxu0 0.0
        %2178 = vmatpush1.xpose.msra.mxu0 0.0
        %2179 = vmatprep.subr.mxu0 0.0
        %2180 = vmatpush1.xpose.msra.mxu0 0.0
        %2181 = vmatprep.subr.mxu0 0.0
        %2182 = vmatpush1.xpose.msra.mxu0 0.0
        %2183 = vmatprep.subr.mxu0 0.0
        %2184 = vmatpush1.xpose.msra.mxu0 0.0
        %2185 = vmatprep.subr.mxu0 0.0
        %2186 = vmatpush1.xpose.msra.mxu0 0.0
        %2187 = vmatprep.subr.mxu0 0.0
        %2188 = vmatpush1.xpose.msra.mxu0 0.0
        %2189 = vmatprep.subr.mxu0 0.0
        %2190 = vmatpush1.xpose.msra.mxu0 0.0
        %2191 = vmatprep.subr.mxu0 0.0
        %2192 = vmatpush1.xpose.msra.mxu0 0.0
        %2193 = vmatprep.subr.mxu0 0.0
        %2194 = vmatpush1.xpose.msra.mxu0 0.0
        %2195 = vmatprep.subr.mxu0 0.0
        %2196 = vmatpush1.xpose.msra.mxu0 0.0
        %2197 = vmatprep.subr.mxu0 0.0
        %2198 = vmatpush1.xpose.msra.mxu0 0.0
        %2199 = vmatprep.subr.mxu0 0.0
        %2200 = vmatpush1.xpose.msra.mxu0 0.0
        %2201 = vmatprep.subr.mxu0 0.0
        %2202 = vmatpush1.xpose.msra.mxu0 0.0
        %2203 = vmatprep.subr.mxu0 0.0
        %2204 = vmatpush1.xpose.msra.mxu0 0.0
        %2205 = vmatprep.subr.mxu0 0.0
        %2206 = vmatpush1.xpose.msra.mxu0 0.0
        %2207 = vmatprep.subr.mxu0 0.0
        %2208 = vmatpush1.xpose.msra.mxu0 0.0
        %2209 = vmatprep.subr.mxu0 0.0
        %2210 = vmatpush1.xpose.msra.mxu0 0.0
        %2211 = vmatprep.subr.mxu0 0.0
        %2212 = vmatpush1.xpose.msra.mxu0 0.0
        %2213 = vmatprep.mubr.f32.mxu0 0.0
        %2214 = vmatmul.mubr.f32.gmra.mrb[0].mxu0 %v2145
        %v2215 = vpop.f32.mrb[0].mxu0
        %v2216 = vadd.f32 0.0, %v2215
        %v2217 = vpop.f32.mrb[0].mxu0
        %2218 = vdwg.mxu0
        %v2219 = vmul.f32 %v2216, 0.35355338
        %v2220 = vsel %vm1718, -1e+10, %v2219
        %v2221 = vsel %vm1638, %v2220, -inf
        %2222 = vmax.xlane.f32.xlu0 %v2221
        %v2223 = vpop.xlane.xlu0 %2222
        %v2224 = vsub.f32 %v2220, %v2223
        %v2225 = vmul.f32 %v2224, 1.442695
        %v2226 = vpow.pop %v2225
        %v2227 = vsel %vm1638, %v2226, 0.0
        %2228 = vadd.xlane.f32.xlu0 %v2227
        %v2229 = vpop.xlane.xlu0 %2228
        %v2230 = vrcp.pop %v2229
        %v2231 = vmul.f32 %v2226, %v2230
        %2232 = vrot.lane.b32.xlu0 %v1632, 40
        %v2233 = vpop.permute.xlu0 %2232
        %v2236 = vsel %vm1638, %v2231, 0
        %2238 = vmatprep.subr.mxu0 0.0
        %2239 = vmatpush1.msra.mxu0 %v2233
        %2240 = vmatprep.subr.mxu0 0.0
        %2241 = vmatpush1.msra.mxu0 0.0
        %2242 = vmatprep.subr.mxu0 0.0
        %2243 = vmatpush1.msra.mxu0 0.0
        %2244 = vmatprep.subr.mxu0 0.0
        %2245 = vmatpush1.msra.mxu0 0.0
        %2246 = vmatprep.subr.mxu0 0.0
        %2247 = vmatpush1.msra.mxu0 0.0
        %2248 = vmatprep.subr.mxu0 0.0
        %2249 = vmatpush1.msra.mxu0 0.0
        %2250 = vmatprep.subr.mxu0 0.0
        %2251 = vmatpush1.msra.mxu0 0.0
        %2252 = vmatprep.subr.mxu0 0.0
        %2253 = vmatpush1.msra.mxu0 0.0
        %2254 = vmatprep.subr.mxu0 0.0
        %2255 = vmatpush1.msra.mxu0 0.0
        %2256 = vmatprep.subr.mxu0 0.0
        %2257 = vmatpush1.msra.mxu0 0.0
        %2258 = vmatprep.subr.mxu0 0.0
        %2259 = vmatpush1.msra.mxu0 0.0
        %2260 = vmatprep.subr.mxu0 0.0
        %2261 = vmatpush1.msra.mxu0 0.0
        %2262 = vmatprep.subr.mxu0 0.0
        %2263 = vmatpush1.msra.mxu0 0.0
        %2264 = vmatprep.subr.mxu0 0.0
        %2265 = vmatpush1.msra.mxu0 0.0
        %2266 = vmatprep.subr.mxu0 0.0
        %2267 = vmatpush1.msra.mxu0 0.0
        %2268 = vmatprep.subr.mxu0 0.0
        %2269 = vmatpush1.msra.mxu0 0.0
        %2270 = vmatprep.subr.mxu0 0.0
        %2271 = vmatpush1.msra.mxu0 0.0
        %2272 = vmatprep.subr.mxu0 0.0
        %2273 = vmatpush1.msra.mxu0 0.0
        %2274 = vmatprep.subr.mxu0 0.0
        %2275 = vmatpush1.msra.mxu0 0.0
        %2276 = vmatprep.subr.mxu0 0.0
        %2277 = vmatpush1.msra.mxu0 0.0
        %2278 = vmatprep.subr.mxu0 0.0
        %2279 = vmatpush1.msra.mxu0 0.0
        %2280 = vmatprep.subr.mxu0 0.0
        %2281 = vmatpush1.msra.mxu0 0.0
        %2282 = vmatprep.subr.mxu0 0.0
        %2283 = vmatpush1.msra.mxu0 0.0
        %2284 = vmatprep.subr.mxu0 0.0
        %2285 = vmatpush1.msra.mxu0 0.0
        %2286 = vmatprep.subr.mxu0 0.0
        %2287 = vmatpush1.msra.mxu0 0.0
        %2288 = vmatprep.subr.mxu0 0.0
        %2289 = vmatpush1.msra.mxu0 0.0
        %2290 = vmatprep.subr.mxu0 0.0
        %2291 = vmatpush1.msra.mxu0 0.0
        %2292 = vmatprep.subr.mxu0 0.0
        %2293 = vmatpush1.msra.mxu0 0.0
        %2294 = vmatprep.subr.mxu0 0.0
        %2295 = vmatpush1.msra.mxu0 0.0
        %2296 = vmatprep.subr.mxu0 0.0
        %2297 = vmatpush1.msra.mxu0 0.0
        %2298 = vmatprep.subr.mxu0 0.0
        %2299 = vmatpush1.msra.mxu0 0.0
        %2300 = vmatprep.subr.mxu0 0.0
        %2301 = vmatpush1.msra.mxu0 0.0
        %2302 = vmatprep.mubr.f32.mxu0 0.0
        %2303 = vmatmul.mubr.f32.gmra.mrb[0].mxu0 %v2236
        %v2304 = vpop.f32.mrb[0].mxu0
        %v2305 = vadd.f32 0.0, %v2304
        %v2306 = vpop.f32.mrb[0].mxu0
        %2307 = vdwg.mxu0
        %2309 = vrot.lane.b32.xlu0 %v1971, 8
        %v2310 = vpop.permute.xlu0 %2309
        %2313 = vrot.lane.b32.xlu0 %v2138, 16
        %v2314 = vpop.permute.xlu0 %2313
        %2317 = vrot.lane.b32.xlu0 %v2305, 24
        %v2318 = vpop.permute.xlu0 %2317
        %v2320 = vsel %vm1638, %v1804, %v2310
        %vm2321 = vcmask 130048
        %v2322 = vsel %vm2321, %v2320, %v2314
        %vm2323 = vcmask 195584
        %v2324 = vsel %vm2323, %v2322, %v2318
        %v2325 = vld [vmem:[%s1388] sm:$0xff]
        %v2326 = vld [vmem:[%s1388 + $0x8] sm:$0xff]
        %v2327 = vld [vmem:[%s1388 + $0x10] sm:$0xff]
        %v2328 = vld [vmem:[%s1388 + $0x18] sm:$0xff]
        %v2329 = vld [vmem:[%s1391] sm:$0x1]
        %v2331 = vlaneseq
        %v2332 = vshrl.u32 %v2331, 7
        %v2333 = vsub.s32 0, %v2332
        %v2334 = vrot.slane %v2329, %v2333
        %v2337 = vsel %vm1561, %v2324, 0
        %2339 = vmatprep.subr.mxu0 0.0
        %2340 = vmatpush1.msra.mxu0 %v2325
        %2341 = vmatprep.subr.mxu0 0.0
        %2342 = vmatpush1.msra.mxu0 %v2326
        %2343 = vmatprep.subr.mxu0 0.0
        %2344 = vmatpush1.msra.mxu0 %v2327
        %2345 = vmatprep.subr.mxu0 0.0
        %2346 = vmatpush1.msra.mxu0 %v2328
        %2347 = vmatprep.subr.mxu0 0.0
        %2348 = vmatpush1.msra.mxu0 0.0
        %2349 = vmatprep.subr.mxu0 0.0
        %2350 = vmatpush1.msra.mxu0 0.0
        %2351 = vmatprep.subr.mxu0 0.0
        %2352 = vmatpush1.msra.mxu0 0.0
        %2353 = vmatprep.subr.mxu0 0.0
        %2354 = vmatpush1.msra.mxu0 0.0
        %2355 = vmatprep.subr.mxu0 0.0
        %2356 = vmatpush1.msra.mxu0 0.0
        %2357 = vmatprep.subr.mxu0 0.0
        %2358 = vmatpush1.msra.mxu0 0.0
        %2359 = vmatprep.subr.mxu0 0.0
        %2360 = vmatpush1.msra.mxu0 0.0
        %2361 = vmatprep.subr.mxu0 0.0
        %2362 = vmatpush1.msra.mxu0 0.0
        %2363 = vmatprep.subr.mxu0 0.0
        %2364 = vmatpush1.msra.mxu0 0.0
        %2365 = vmatprep.subr.mxu0 0.0
        %2366 = vmatpush1.msra.mxu0 0.0
        %2367 = vmatprep.subr.mxu0 0.0
        %2368 = vmatpush1.msra.mxu0 0.0
        %2369 = vmatprep.subr.mxu0 0.0
        %2370 = vmatpush1.msra.mxu0 0.0
        %2371 = vmatprep.subr.mxu0 0.0
        %2372 = vmatpush1.msra.mxu0 0.0
        %2373 = vmatprep.subr.mxu0 0.0
        %2374 = vmatpush1.msra.mxu0 0.0
        %2375 = vmatprep.subr.mxu0 0.0
        %2376 = vmatpush1.msra.mxu0 0.0
        %2377 = vmatprep.subr.mxu0 0.0
        %2378 = vmatpush1.msra.mxu0 0.0
        %2379 = vmatprep.subr.mxu0 0.0
        %2380 = vmatpush1.msra.mxu0 0.0
        %2381 = vmatprep.subr.mxu0 0.0
        %2382 = vmatpush1.msra.mxu0 0.0
        %2383 = vmatprep.subr.mxu0 0.0
        %2384 = vmatpush1.msra.mxu0 0.0
        %2385 = vmatprep.subr.mxu0 0.0
        %2386 = vmatpush1.msra.mxu0 0.0
        %2387 = vmatprep.subr.mxu0 0.0
        %2388 = vmatpush1.msra.mxu0 0.0
        %2389 = vmatprep.subr.mxu0 0.0
        %2390 = vmatpush1.msra.mxu0 0.0
        %2391 = vmatprep.subr.mxu0 0.0
        %2392 = vmatpush1.msra.mxu0 0.0
        %2393 = vmatprep.subr.mxu0 0.0
        %2394 = vmatpush1.msra.mxu0 0.0
        %2395 = vmatprep.subr.mxu0 0.0
        %2396 = vmatpush1.msra.mxu0 0.0
        %2397 = vmatprep.subr.mxu0 0.0
        %2398 = vmatpush1.msra.mxu0 0.0
        %2399 = vmatprep.subr.mxu0 0.0
        %2400 = vmatpush1.msra.mxu0 0.0
        %2401 = vmatprep.subr.mxu0 0.0
        %2402 = vmatpush1.msra.mxu0 0.0
        %2403 = vmatprep.mubr.f32.mxu0 0.0
        %2404 = vmatmul.mubr.f32.gmra.mrb[0].mxu0 %v2337
        %v2405 = vpop.f32.mrb[0].mxu0
        %v2406 = vadd.f32 %v2334, %v2405
        %v2407 = vpop.f32.mrb[0].mxu0
        %2408 = vdwg.mxu0
        %v2409 = vadd.f32 %v1544, %v2406
        %v2410 = vsel %vm1561, %v2409, 0.0
        %2411 = vadd.xlane.f32.xlu0 %v2410
        %v2412 = vpop.xlane.xlu0 %2411
        %v2413 = vrcp.pop 32.0
        %v2414 = vmul.f32 %v2412, %v2413
        %v2415 = vsub.f32 %v2409, %v2414
        %v2416 = vmul.f32 %v2415, %v2415
        %v2417 = vsel %vm1561, %v2416, 0.0
        %2418 = vadd.xlane.f32.xlu0 %v2417
        %v2419 = vpop.xlane.xlu0 %2418
        %v2420 = vrcp.pop 31.0
        %v2421 = vmul.f32 %v2419, %v2420
        %v2422 = vld [vmem:[%s1418] sm:$0x1]
        %v2423 = vrsqrt.pop %v2421
        %v2424 = vmul.f32 %v2421, %v2423
        %vm2425 = vcmp.eq.f32.partialorder %v2421, inf
        %v2426 = vsel %vm2425, %v2421, %v2424
        %vm2427 = vcmp.eq.f32.partialorder %v2421, 0.0
        %v2428 = vand.u32 %v2421, 2147483648
        %v2429 = vsel %vm2427, %v2428, %v2426
        %v2430 = vadd.f32 %v2429, 1e-12
        %v2431 = vrcp.pop %v2430
        %v2432 = vmul.f32 %v2415, %v2431
        %v2434 = vlaneseq
        %v2435 = vshrl.u32 %v2434, 7
        %v2436 = vsub.s32 0, %v2435
        %v2437 = vrot.slane %v2422, %v2436
        %v2439 = vmul.f32 %v2437, %v2432
        %v2440 = vld [vmem:[%s1421] sm:$0x1]
        %v2442 = vlaneseq
        %v2443 = vshrl.u32 %v2442, 7
        %v2444 = vsub.s32 0, %v2443
        %v2445 = vrot.slane %v2440, %v2444
        %v2447 = vadd.f32 %v2439, %v2445
        %v2448 = vld [vmem:[%s1396] sm:$0xff]
        %v2449 = vld [vmem:[%s1396 + $0x8] sm:$0xff]
        %v2450 = vld [vmem:[%s1396 + $0x10] sm:$0xff]
        %v2451 = vld [vmem:[%s1396 + $0x18] sm:$0xff]
        %v2452 = vld [vmem:[%s1399] sm:$0x1]
        %v2454 = vlaneseq
        %v2455 = vshrl.u32 %v2454, 7
        %v2456 = vsub.s32 0, %v2455
        %v2457 = vrot.slane %v2452, %v2456
        %v2460 = vsel %vm1561, %v2447, 0
        %2462 = vmatprep.subr.mxu0 0.0
        %2463 = vmatpush1.msra.mxu0 %v2448
        %2464 = vmatprep.subr.mxu0 0.0
        %2465 = vmatpush1.msra.mxu0 %v2449
        %2466 = vmatprep.subr.mxu0 0.0
        %2467 = vmatpush1.msra.mxu0 %v2450
        %2468 = vmatprep.subr.mxu0 0.0
        %2469 = vmatpush1.msra.mxu0 %v2451
        %2470 = vmatprep.subr.mxu0 0.0
        %2471 = vmatpush1.msra.mxu0 0.0
        %2472 = vmatprep.subr.mxu0 0.0
        %2473 = vmatpush1.msra.mxu0 0.0
        %2474 = vmatprep.subr.mxu0 0.0
        %2475 = vmatpush1.msra.mxu0 0.0
        %2476 = vmatprep.subr.mxu0 0.0
        %2477 = vmatpush1.msra.mxu0 0.0
        %2478 = vmatprep.subr.mxu0 0.0
        %2479 = vmatpush1.msra.mxu0 0.0
        %2480 = vmatprep.subr.mxu0 0.0
        %2481 = vmatpush1.msra.mxu0 0.0
        %2482 = vmatprep.subr.mxu0 0.0
        %2483 = vmatpush1.msra.mxu0 0.0
        %2484 = vmatprep.subr.mxu0 0.0
        %2485 = vmatpush1.msra.mxu0 0.0
        %2486 = vmatprep.subr.mxu0 0.0
        %2487 = vmatpush1.msra.mxu0 0.0
        %2488 = vmatprep.subr.mxu0 0.0
        %2489 = vmatpush1.msra.mxu0 0.0
        %2490 = vmatprep.subr.mxu0 0.0
        %2491 = vmatpush1.msra.mxu0 0.0
        %2492 = vmatprep.subr.mxu0 0.0
        %2493 = vmatpush1.msra.mxu0 0.0
        %2494 = vmatprep.subr.mxu0 0.0
        %2495 = vmatpush1.msra.mxu0 0.0
        %2496 = vmatprep.subr.mxu0 0.0
        %2497 = vmatpush1.msra.mxu0 0.0
        %2498 = vmatprep.subr.mxu0 0.0
        %2499 = vmatpush1.msra.mxu0 0.0
        %2500 = vmatprep.subr.mxu0 0.0
        %2501 = vmatpush1.msra.mxu0 0.0
        %2502 = vmatprep.subr.mxu0 0.0
        %2503 = vmatpush1.msra.mxu0 0.0
        %2504 = vmatprep.subr.mxu0 0.0
        %2505 = vmatpush1.msra.mxu0 0.0
        %2506 = vmatprep.subr.mxu0 0.0
        %2507 = vmatpush1.msra.mxu0 0.0
        %2508 = vmatprep.subr.mxu0 0.0
        %2509 = vmatpush1.msra.mxu0 0.0
        %2510 = vmatprep.subr.mxu0 0.0
        %2511 = vmatpush1.msra.mxu0 0.0
        %2512 = vmatprep.subr.mxu0 0.0
        %2513 = vmatpush1.msra.mxu0 0.0
        %2514 = vmatprep.subr.mxu0 0.0
        %2515 = vmatpush1.msra.mxu0 0.0
        %2516 = vmatprep.subr.mxu0 0.0
        %2517 = vmatpush1.msra.mxu0 0.0
        %2518 = vmatprep.subr.mxu0 0.0
        %2519 = vmatpush1.msra.mxu0 0.0
        %2520 = vmatprep.subr.mxu0 0.0
        %2521 = vmatpush1.msra.mxu0 0.0
        %2522 = vmatprep.subr.mxu0 0.0
        %2523 = vmatpush1.msra.mxu0 0.0
        %2524 = vmatprep.subr.mxu0 0.0
        %2525 = vmatpush1.msra.mxu0 0.0
        %2526 = vmatprep.mubr.f32.mxu0 0.0
        %2527 = vmatmul.mubr.f32.gmra.mrb[0].mxu0 %v2460
        %v2528 = vpop.f32.mrb[0].mxu0
        %v2529 = vadd.f32 %v2457, %v2528
        %v2530 = vpop.f32.mrb[0].mxu0
        %2531 = vdwg.mxu0
        %v2532 = vld [vmem:[%s1404] sm:$0xff]
        %v2533 = vld [vmem:[%s1404 + $0x8] sm:$0xff]
        %v2534 = vld [vmem:[%s1404 + $0x10] sm:$0xff]
        %v2535 = vld [vmem:[%s1404 + $0x18] sm:$0xff]
        %v2536 = vld [vmem:[%s1407] sm:$0x1]
        %v2538 = vlaneseq
        %v2539 = vshrl.u32 %v2538, 7
        %v2540 = vsub.s32 0, %v2539
        %v2541 = vrot.slane %v2536, %v2540
        %v2544 = vsel %vm1561, %v1545, 0
        %2546 = vmatprep.subr.mxu0 0.0
        %2547 = vmatpush1.msra.mxu0 %v2532
        %2548 = vmatprep.subr.mxu0 0.0
        %2549 = vmatpush1.msra.mxu0 %v2533
        %2550 = vmatprep.subr.mxu0 0.0
        %2551 = vmatpush1.msra.mxu0 %v2534
        %2552 = vmatprep.subr.mxu0 0.0
        %2553 = vmatpush1.msra.mxu0 %v2535
        %2554 = vmatprep.subr.mxu0 0.0
        %2555 = vmatpush1.msra.mxu0 0.0
        %2556 = vmatprep.subr.mxu0 0.0
        %2557 = vmatpush1.msra.mxu0 0.0
        %2558 = vmatprep.subr.mxu0 0.0
        %2559 = vmatpush1.msra.mxu0 0.0
        %2560 = vmatprep.subr.mxu0 0.0
        %2561 = vmatpush1.msra.mxu0 0.0
        %2562 = vmatprep.subr.mxu0 0.0
        %2563 = vmatpush1.msra.mxu0 0.0
        %2564 = vmatprep.subr.mxu0 0.0
        %2565 = vmatpush1.msra.mxu0 0.0
        %2566 = vmatprep.subr.mxu0 0.0
        %2567 = vmatpush1.msra.mxu0 0.0
        %2568 = vmatprep.subr.mxu0 0.0
        %2569 = vmatpush1.msra.mxu0 0.0
        %2570 = vmatprep.subr.mxu0 0.0
        %2571 = vmatpush1.msra.mxu0 0.0
        %2572 = vmatprep.subr.mxu0 0.0
        %2573 = vmatpush1.msra.mxu0 0.0
        %2574 = vmatprep.subr.mxu0 0.0
        %2575 = vmatpush1.msra.mxu0 0.0
        %2576 = vmatprep.subr.mxu0 0.0
        %2577 = vmatpush1.msra.mxu0 0.0
        %2578 = vmatprep.subr.mxu0 0.0
        %2579 = vmatpush1.msra.mxu0 0.0
        %2580 = vmatprep.subr.mxu0 0.0
        %2581 = vmatpush1.msra.mxu0 0.0
        %2582 = vmatprep.subr.mxu0 0.0
        %2583 = vmatpush1.msra.mxu0 0.0
        %2584 = vmatprep.subr.mxu0 0.0
        %2585 = vmatpush1.msra.mxu0 0.0
        %2586 = vmatprep.subr.mxu0 0.0
        %2587 = vmatpush1.msra.mxu0 0.0
        %2588 = vmatprep.subr.mxu0 0.0
        %2589 = vmatpush1.msra.mxu0 0.0
        %2590 = vmatprep.subr.mxu0 0.0
        %2591 = vmatpush1.msra.mxu0 0.0
        %2592 = vmatprep.subr.mxu0 0.0
        %2593 = vmatpush1.msra.mxu0 0.0
        %2594 = vmatprep.subr.mxu0 0.0
        %2595 = vmatpush1.msra.mxu0 0.0
        %2596 = vmatprep.subr.mxu0 0.0
        %2597 = vmatpush1.msra.mxu0 0.0
        %2598 = vmatprep.subr.mxu0 0.0
        %2599 = vmatpush1.msra.mxu0 0.0
        %2600 = vmatprep.subr.mxu0 0.0
        %2601 = vmatpush1.msra.mxu0 0.0
        %2602 = vmatprep.subr.mxu0 0.0
        %2603 = vmatpush1.msra.mxu0 0.0
        %2604 = vmatprep.subr.mxu0 0.0
        %2605 = vmatpush1.msra.mxu0 0.0
        %2606 = vmatprep.subr.mxu0 0.0
        %2607 = vmatpush1.msra.mxu0 0.0
        %2608 = vmatprep.subr.mxu0 0.0
        %2609 = vmatpush1.msra.mxu0 0.0
        %2610 = vmatprep.mubr.f32.mxu0 0.0
        %2611 = vmatmul.mubr.f32.gmra.mrb[0].mxu0 %v2544
        %v2612 = vpop.f32.mrb[0].mxu0
        %v2613 = vadd.f32 %v2541, %v2612
        %v2614 = vpop.f32.mrb[0].mxu0
        %2615 = vdwg.mxu0
        %v2617 = vsel %vm1638, %v2529, 0
        %v2620 = vsel %vm1638, %v2613, 0
        %2622 = vmatprep.subr.mxu0 0.0
        %2623 = vmatpush1.xpose.msra.mxu0 %v2620
        %2624 = vmatprep.subr.mxu0 0.0
        %2625 = vmatpush1.xpose.msra.mxu0 0.0
        %2626 = vmatprep.subr.mxu0 0.0
        %2627 = vmatpush1.xpose.msra.mxu0 0.0
        %2628 = vmatprep.subr.mxu0 0.0
        %2629 = vmatpush1.xpose.msra.mxu0 0.0
        %2630 = vmatprep.subr.mxu0 0.0
        %2631 = vmatpush1.xpose.msra.mxu0 0.0
        %2632 = vmatprep.subr.mxu0 0.0
        %2633 = vmatpush1.xpose.msra.mxu0 0.0
        %2634 = vmatprep.subr.mxu0 0.0
        %2635 = vmatpush1.xpose.msra.mxu0 0.0
        %2636 = vmatprep.subr.mxu0 0.0
        %2637 = vmatpush1.xpose.msra.mxu0 0.0
        %2638 = vmatprep.subr.mxu0 0.0
        %2639 = vmatpush1.xpose.msra.mxu0 0.0
        %2640 = vmatprep.subr.mxu0 0.0
        %2641 = vmatpush1.xpose.msra.mxu0 0.0
        %2642 = vmatprep.subr.mxu0 0.0
        %2643 = vmatpush1.xpose.msra.mxu0 0.0
        %2644 = vmatprep.subr.mxu0 0.0
        %2645 = vmatpush1.xpose.msra.mxu0 0.0
        %2646 = vmatprep.subr.mxu0 0.0
        %2647 = vmatpush1.xpose.msra.mxu0 0.0
        %2648 = vmatprep.subr.mxu0 0.0
        %2649 = vmatpush1.xpose.msra.mxu0 0.0
        %2650 = vmatprep.subr.mxu0 0.0
        %2651 = vmatpush1.xpose.msra.mxu0 0.0
        %2652 = vmatprep.subr.mxu0 0.0
        %2653 = vmatpush1.xpose.msra.mxu0 0.0
        %2654 = vmatprep.subr.mxu0 0.0
        %2655 = vmatpush1.xpose.msra.mxu0 0.0
        %2656 = vmatprep.subr.mxu0 0.0
        %2657 = vmatpush1.xpose.msra.mxu0 0.0
        %2658 = vmatprep.subr.mxu0 0.0
        %2659 = vmatpush1.xpose.msra.mxu0 0.0
        %2660 = vmatprep.subr.mxu0 0.0
        %2661 = vmatpush1.xpose.msra.mxu0 0.0
        %2662 = vmatprep.subr.mxu0 0.0
        %2663 = vmatpush1.xpose.msra.mxu0 0.0
        %2664 = vmatprep.subr.mxu0 0.0
        %2665 = vmatpush1.xpose.msra.mxu0 0.0
        %2666 = vmatprep.subr.mxu0 0.0
        %2667 = vmatpush1.xpose.msra.mxu0 0.0
        %2668 = vmatprep.subr.mxu0 0.0
        %2669 = vmatpush1.xpose.msra.mxu0 0.0
        %2670 = vmatprep.subr.mxu0 0.0
        %2671 = vmatpush1.xpose.msra.mxu0 0.0
        %2672 = vmatprep.subr.mxu0 0.0
        %2673 = vmatpush1.xpose.msra.mxu0 0.0
        %2674 = vmatprep.subr.mxu0 0.0
        %2675 = vmatpush1.xpose.msra.mxu0 0.0
        %2676 = vmatprep.subr.mxu0 0.0
        %2677 = vmatpush1.xpose.msra.mxu0 0.0
        %2678 = vmatprep.subr.mxu0 0.0
        %2679 = vmatpush1.xpose.msra.mxu0 0.0
        %2680 = vmatprep.subr.mxu0 0.0
        %2681 = vmatpush1.xpose.msra.mxu0 0.0
        %2682 = vmatprep.subr.mxu0 0.0
        %2683 = vmatpush1.xpose.msra.mxu0 0.0
        %2684 = vmatprep.subr.mxu0 0.0
        %2685 = vmatpush1.xpose.msra.mxu0 0.0
        %2686 = vmatprep.mubr.f32.mxu0 0.0
        %2687 = vmatmul.mubr.f32.gmra.mrb[0].mxu0 %v2617
        %v2688 = vpop.f32.mrb[0].mxu0
        %v2689 = vadd.f32 0.0, %v2688
        %v2690 = vpop.f32.mrb[0].mxu0
        %2691 = vdwg.mxu0
        %v2692 = vmul.f32 %v2689, 0.35355338
        %v2693 = vsel %vm1549, 1, 0
        %v2694 = vlaneseq
        %v2695 = vshrl.u32 %v2694, 7
        %v2696 = vsub.s32 0, %v2695
        %v2697 = vrot.slane %v2693, %v2696
        %vm2698 = vcmp.eq.s32.totalorder %v2697, 1
        %v2699 = vsel %vm2698, -1e+10, %v2692
        %v2700 = vsel %vm1638, %v2699, -inf
        %2701 = vmax.xlane.f32.xlu0 %v2700
        %v2702 = vpop.xlane.xlu0 %2701
        %v2703 = vsub.f32 %v2699, %v2702
        %v2704 = vmul.f32 %v2703, 1.442695
        %v2705 = vpow.pop %v2704
        %v2706 = vsel %vm1638, %v2705, 0.0
        %2707 = vadd.xlane.f32.xlu0 %v2706
        %v2708 = vpop.xlane.xlu0 %2707
        %v2709 = vrcp.pop %v2708
        %v2710 = vmul.f32 %v2705, %v2709
        %2711 = vrot.lane.b32.xlu0 %v2613, 96
        %v2712 = vpop.permute.xlu0 %2711
        %v2715 = vsel %vm1638, %v2710, 0
        %2717 = vmatprep.subr.mxu0 0.0
        %2718 = vmatpush1.msra.mxu0 %v2712
        %2719 = vmatprep.subr.mxu0 0.0
        %2720 = vmatpush1.msra.mxu0 0.0
        %2721 = vmatprep.subr.mxu0 0.0
        %2722 = vmatpush1.msra.mxu0 0.0
        %2723 = vmatprep.subr.mxu0 0.0
        %2724 = vmatpush1.msra.mxu0 0.0
        %2725 = vmatprep.subr.mxu0 0.0
        %2726 = vmatpush1.msra.mxu0 0.0
        %2727 = vmatprep.subr.mxu0 0.0
        %2728 = vmatpush1.msra.mxu0 0.0
        %2729 = vmatprep.subr.mxu0 0.0
        %2730 = vmatpush1.msra.mxu0 0.0
        %2731 = vmatprep.subr.mxu0 0.0
        %2732 = vmatpush1.msra.mxu0 0.0
        %2733 = vmatprep.subr.mxu0 0.0
        %2734 = vmatpush1.msra.mxu0 0.0
        %2735 = vmatprep.subr.mxu0 0.0
        %2736 = vmatpush1.msra.mxu0 0.0
        %2737 = vmatprep.subr.mxu0 0.0
        %2738 = vmatpush1.msra.mxu0 0.0
        %2739 = vmatprep.subr.mxu0 0.0
        %2740 = vmatpush1.msra.mxu0 0.0
        %2741 = vmatprep.subr.mxu0 0.0
        %2742 = vmatpush1.msra.mxu0 0.0
        %2743 = vmatprep.subr.mxu0 0.0
        %2744 = vmatpush1.msra.mxu0 0.0
        %2745 = vmatprep.subr.mxu0 0.0
        %2746 = vmatpush1.msra.mxu0 0.0
        %2747 = vmatprep.subr.mxu0 0.0
        %2748 = vmatpush1.msra.mxu0 0.0
        %2749 = vmatprep.subr.mxu0 0.0
        %2750 = vmatpush1.msra.mxu0 0.0
        %2751 = vmatprep.subr.mxu0 0.0
        %2752 = vmatpush1.msra.mxu0 0.0
        %2753 = vmatprep.subr.mxu0 0.0
        %2754 = vmatpush1.msra.mxu0 0.0
        %2755 = vmatprep.subr.mxu0 0.0
        %2756 = vmatpush1.msra.mxu0 0.0
        %2757 = vmatprep.subr.mxu0 0.0
        %2758 = vmatpush1.msra.mxu0 0.0
        %2759 = vmatprep.subr.mxu0 0.0
        %2760 = vmatpush1.msra.mxu0 0.0
        %2761 = vmatprep.subr.mxu0 0.0
        %2762 = vmatpush1.msra.mxu0 0.0
        %2763 = vmatprep.subr.mxu0 0.0
        %2764 = vmatpush1.msra.mxu0 0.0
        %2765 = vmatprep.subr.mxu0 0.0
        %2766 = vmatpush1.msra.mxu0 0.0
        %2767 = vmatprep.subr.mxu0 0.0
        %2768 = vmatpush1.msra.mxu0 0.0
        %2769 = vmatprep.subr.mxu0 0.0
        %2770 = vmatpush1.msra.mxu0 0.0
        %2771 = vmatprep.subr.mxu0 0.0
        %2772 = vmatpush1.msra.mxu0 0.0
        %2773 = vmatprep.subr.mxu0 0.0
        %2774 = vmatpush1.msra.mxu0 0.0
        %2775 = vmatprep.subr.mxu0 0.0
        %2776 = vmatpush1.msra.mxu0 0.0
        %2777 = vmatprep.subr.mxu0 0.0
        %2778 = vmatpush1.msra.mxu0 0.0
        %2779 = vmatprep.subr.mxu0 0.0
        %2780 = vmatpush1.msra.mxu0 0.0
        %2781 = vmatprep.mubr.f32.mxu0 0.0
        %2782 = vmatmul.mubr.f32.gmra.mrb[0].mxu0 %v2715
        %v2783 = vpop.f32.mrb[0].mxu0
        %v2784 = vadd.f32 0.0, %v2783
        %v2785 = vpop.f32.mrb[0].mxu0
        %2786 = vdwg.mxu0
        %2787 = vrot.lane.b32.xlu0 %v2529, 120
        %v2788 = vpop.permute.xlu0 %2787
        %2789 = vrot.lane.b32.xlu0 %v2613, 120
        %v2790 = vpop.permute.xlu0 %2789
        %v2791 = vsel %vm1638, %v2788, 0
        %v2793 = vsel %vm1638, %v2790, 0
        %2795 = vmatprep.subr.mxu0 0.0
        %2796 = vmatpush1.xpose.msra.mxu0 %v2793
        %2797 = vmatprep.subr.mxu0 0.0
        %2798 = vmatpush1.xpose.msra.mxu0 0.0
        %2799 = vmatprep.subr.mxu0 0.0
        %2800 = vmatpush1.xpose.msra.mxu0 0.0
        %2801 = vmatprep.subr.mxu0 0.0
        %2802 = vmatpush1.xpose.msra.mxu0 0.0
        %2803 = vmatprep.subr.mxu0 0.0
        %2804 = vmatpush1.xpose.msra.mxu0 0.0
        %2805 = vmatprep.subr.mxu0 0.0
        %2806 = vmatpush1.xpose.msra.mxu0 0.0
        %2807 = vmatprep.subr.mxu0 0.0
        %2808 = vmatpush1.xpose.msra.mxu0 0.0
        %2809 = vmatprep.subr.mxu0 0.0
        %2810 = vmatpush1.xpose.msra.mxu0 0.0
        %2811 = vmatprep.subr.mxu0 0.0
        %2812 = vmatpush1.xpose.msra.mxu0 0.0
        %2813 = vmatprep.subr.mxu0 0.0
        %2814 = vmatpush1.xpose.msra.mxu0 0.0
        %2815 = vmatprep.subr.mxu0 0.0
        %2816 = vmatpush1.xpose.msra.mxu0 0.0
        %2817 = vmatprep.subr.mxu0 0.0
        %2818 = vmatpush1.xpose.msra.mxu0 0.0
        %2819 = vmatprep.subr.mxu0 0.0
        %2820 = vmatpush1.xpose.msra.mxu0 0.0
        %2821 = vmatprep.subr.mxu0 0.0
        %2822 = vmatpush1.xpose.msra.mxu0 0.0
        %2823 = vmatprep.subr.mxu0 0.0
        %2824 = vmatpush1.xpose.msra.mxu0 0.0
        %2825 = vmatprep.subr.mxu0 0.0
        %2826 = vmatpush1.xpose.msra.mxu0 0.0
        %2827 = vmatprep.subr.mxu0 0.0
        %2828 = vmatpush1.xpose.msra.mxu0 0.0
        %2829 = vmatprep.subr.mxu0 0.0
        %2830 = vmatpush1.xpose.msra.mxu0 0.0
        %2831 = vmatprep.subr.mxu0 0.0
        %2832 = vmatpush1.xpose.msra.mxu0 0.0
        %2833 = vmatprep.subr.mxu0 0.0
        %2834 = vmatpush1.xpose.msra.mxu0 0.0
        %2835 = vmatprep.subr.mxu0 0.0
        %2836 = vmatpush1.xpose.msra.mxu0 0.0
        %2837 = vmatprep.subr.mxu0 0.0
        %2838 = vmatpush1.xpose.msra.mxu0 0.0
        %2839 = vmatprep.subr.mxu0 0.0
        %2840 = vmatpush1.xpose.msra.mxu0 0.0
        %2841 = vmatprep.subr.mxu0 0.0
        %2842 = vmatpush1.xpose.msra.mxu0 0.0
        %2843 = vmatprep.subr.mxu0 0.0
        %2844 = vmatpush1.xpose.msra.mxu0 0.0
        %2845 = vmatprep.subr.mxu0 0.0
        %2846 = vmatpush1.xpose.msra.mxu0 0.0
        %2847 = vmatprep.subr.mxu0 0.0
        %2848 = vmatpush1.xpose.msra.mxu0 0.0
        %2849 = vmatprep.subr.mxu0 0.0
        %2850 = vmatpush1.xpose.msra.mxu0 0.0
        %2851 = vmatprep.subr.mxu0 0.0
        %2852 = vmatpush1.xpose.msra.mxu0 0.0
        %2853 = vmatprep.subr.mxu0 0.0
        %2854 = vmatpush1.xpose.msra.mxu0 0.0
        %2855 = vmatprep.subr.mxu0 0.0
        %2856 = vmatpush1.xpose.msra.mxu0 0.0
        %2857 = vmatprep.subr.mxu0 0.0
        %2858 = vmatpush1.xpose.msra.mxu0 0.0
        %2859 = vmatprep.mubr.f32.mxu0 0.0
        %2860 = vmatmul.mubr.f32.gmra.mrb[0].mxu0 %v2791
        %v2861 = vpop.f32.mrb[0].mxu0
        %v2862 = vadd.f32 0.0, %v2861
        %v2863 = vpop.f32.mrb[0].mxu0
        %2864 = vdwg.mxu0
        %v2865 = vmul.f32 %v2862, 0.35355338
        %v2866 = vsel %vm2698, -1e+10, %v2865
        %v2867 = vsel %vm1638, %v2866, -inf
        %2868 = vmax.xlane.f32.xlu0 %v2867
        %v2869 = vpop.xlane.xlu0 %2868
        %v2870 = vsub.f32 %v2866, %v2869
        %v2871 = vmul.f32 %v2870, 1.442695
        %v2872 = vpow.pop %v2871
        %v2873 = vsel %vm1638, %v2872, 0.0
        %2874 = vadd.xlane.f32.xlu0 %v2873
        %v2875 = vpop.xlane.xlu0 %2874
        %v2876 = vrcp.pop %v2875
        %v2877 = vmul.f32 %v2872, %v2876
        %2878 = vrot.lane.b32.xlu0 %v2613, 88
        %v2879 = vpop.permute.xlu0 %2878
        %v2882 = vsel %vm1638, %v2877, 0
        %2884 = vmatprep.subr.mxu0 0.0
        %2885 = vmatpush1.msra.mxu0 %v2879
        %2886 = vmatprep.subr.mxu0 0.0
        %2887 = vmatpush1.msra.mxu0 0.0
        %2888 = vmatprep.subr.mxu0 0.0
        %2889 = vmatpush1.msra.mxu0 0.0
        %2890 = vmatprep.subr.mxu0 0.0
        %2891 = vmatpush1.msra.mxu0 0.0
        %2892 = vmatprep.subr.mxu0 0.0
        %2893 = vmatpush1.msra.mxu0 0.0
        %2894 = vmatprep.subr.mxu0 0.0
        %2895 = vmatpush1.msra.mxu0 0.0
        %2896 = vmatprep.subr.mxu0 0.0
        %2897 = vmatpush1.msra.mxu0 0.0
        %2898 = vmatprep.subr.mxu0 0.0
        %2899 = vmatpush1.msra.mxu0 0.0
        %2900 = vmatprep.subr.mxu0 0.0
        %2901 = vmatpush1.msra.mxu0 0.0
        %2902 = vmatprep.subr.mxu0 0.0
        %2903 = vmatpush1.msra.mxu0 0.0
        %2904 = vmatprep.subr.mxu0 0.0
        %2905 = vmatpush1.msra.mxu0 0.0
        %2906 = vmatprep.subr.mxu0 0.0
        %2907 = vmatpush1.msra.mxu0 0.0
        %2908 = vmatprep.subr.mxu0 0.0
        %2909 = vmatpush1.msra.mxu0 0.0
        %2910 = vmatprep.subr.mxu0 0.0
        %2911 = vmatpush1.msra.mxu0 0.0
        %2912 = vmatprep.subr.mxu0 0.0
        %2913 = vmatpush1.msra.mxu0 0.0
        %2914 = vmatprep.subr.mxu0 0.0
        %2915 = vmatpush1.msra.mxu0 0.0
        %2916 = vmatprep.subr.mxu0 0.0
        %2917 = vmatpush1.msra.mxu0 0.0
        %2918 = vmatprep.subr.mxu0 0.0
        %2919 = vmatpush1.msra.mxu0 0.0
        %2920 = vmatprep.subr.mxu0 0.0
        %2921 = vmatpush1.msra.mxu0 0.0
        %2922 = vmatprep.subr.mxu0 0.0
        %2923 = vmatpush1.msra.mxu0 0.0
        %2924 = vmatprep.subr.mxu0 0.0
        %2925 = vmatpush1.msra.mxu0 0.0
        %2926 = vmatprep.subr.mxu0 0.0
        %2927 = vmatpush1.msra.mxu0 0.0
        %2928 = vmatprep.subr.mxu0 0.0
        %2929 = vmatpush1.msra.mxu0 0.0
        %2930 = vmatprep.subr.mxu0 0.0
        %2931 = vmatpush1.msra.mxu0 0.0
        %2932 = vmatprep.subr.mxu0 0.0
        %2933 = vmatpush1.msra.mxu0 0.0
        %2934 = vmatprep.subr.mxu0 0.0
        %2935 = vmatpush1.msra.mxu0 0.0
        %2936 = vmatprep.subr.mxu0 0.0
        %2937 = vmatpush1.msra.mxu0 0.0
        %2938 = vmatprep.subr.mxu0 0.0
        %2939 = vmatpush1.msra.mxu0 0.0
        %2940 = vmatprep.subr.mxu0 0.0
        %2941 = vmatpush1.msra.mxu0 0.0
        %2942 = vmatprep.subr.mxu0 0.0
        %2943 = vmatpush1.msra.mxu0 0.0
        %2944 = vmatprep.subr.mxu0 0.0
        %2945 = vmatpush1.msra.mxu0 0.0
        %2946 = vmatprep.subr.mxu0 0.0
        %2947 = vmatpush1.msra.mxu0 0.0
        %2948 = vmatprep.mubr.f32.mxu0 0.0
        %2949 = vmatmul.mubr.f32.gmra.mrb[0].mxu0 %v2882
        %v2950 = vpop.f32.mrb[0].mxu0
        %v2951 = vadd.f32 0.0, %v2950
        %v2952 = vpop.f32.mrb[0].mxu0
        %2953 = vdwg.mxu0
        %2954 = vrot.lane.b32.xlu0 %v2529, 112
        %v2955 = vpop.permute.xlu0 %2954
        %2956 = vrot.lane.b32.xlu0 %v2613, 112
        %v2957 = vpop.permute.xlu0 %2956
        %v2958 = vsel %vm1638, %v2955, 0
        %v2960 = vsel %vm1638, %v2957, 0
        %2962 = vmatprep.subr.mxu0 0.0
        %2963 = vmatpush1.xpose.msra.mxu0 %v2960
        %2964 = vmatprep.subr.mxu0 0.0
        %2965 = vmatpush1.xpose.msra.mxu0 0.0
        %2966 = vmatprep.subr.mxu0 0.0
        %2967 = vmatpush1.xpose.msra.mxu0 0.0
        %2968 = vmatprep.subr.mxu0 0.0
        %2969 = vmatpush1.xpose.msra.mxu0 0.0
        %2970 = vmatprep.subr.mxu0 0.0
        %2971 = vmatpush1.xpose.msra.mxu0 0.0
        %2972 = vmatprep.subr.mxu0 0.0
        %2973 = vmatpush1.xpose.msra.mxu0 0.0
        %2974 = vmatprep.subr.mxu0 0.0
        %2975 = vmatpush1.xpose.msra.mxu0 0.0
        %2976 = vmatprep.subr.mxu0 0.0
        %2977 = vmatpush1.xpose.msra.mxu0 0.0
        %2978 = vmatprep.subr.mxu0 0.0
        %2979 = vmatpush1.xpose.msra.mxu0 0.0
        %2980 = vmatprep.subr.mxu0 0.0
        %2981 = vmatpush1.xpose.msra.mxu0 0.0
        %2982 = vmatprep.subr.mxu0 0.0
        %2983 = vmatpush1.xpose.msra.mxu0 0.0
        %2984 = vmatprep.subr.mxu0 0.0
        %2985 = vmatpush1.xpose.msra.mxu0 0.0
        %2986 = vmatprep.subr.mxu0 0.0
        %2987 = vmatpush1.xpose.msra.mxu0 0.0
        %2988 = vmatprep.subr.mxu0 0.0
        %2989 = vmatpush1.xpose.msra.mxu0 0.0
        %2990 = vmatprep.subr.mxu0 0.0
        %2991 = vmatpush1.xpose.msra.mxu0 0.0
        %2992 = vmatprep.subr.mxu0 0.0
        %2993 = vmatpush1.xpose.msra.mxu0 0.0
        %2994 = vmatprep.subr.mxu0 0.0
        %2995 = vmatpush1.xpose.msra.mxu0 0.0
        %2996 = vmatprep.subr.mxu0 0.0
        %2997 = vmatpush1.xpose.msra.mxu0 0.0
        %2998 = vmatprep.subr.mxu0 0.0
        %2999 = vmatpush1.xpose.msra.mxu0 0.0
        %3000 = vmatprep.subr.mxu0 0.0
        %3001 = vmatpush1.xpose.msra.mxu0 0.0
        %3002 = vmatprep.subr.mxu0 0.0
        %3003 = vmatpush1.xpose.msra.mxu0 0.0
        %3004 = vmatprep.subr.mxu0 0.0
        %3005 = vmatpush1.xpose.msra.mxu0 0.0
        %3006 = vmatprep.subr.mxu0 0.0
        %3007 = vmatpush1.xpose.msra.mxu0 0.0
        %3008 = vmatprep.subr.mxu0 0.0
        %3009 = vmatpush1.xpose.msra.mxu0 0.0
        %3010 = vmatprep.subr.mxu0 0.0
        %3011 = vmatpush1.xpose.msra.mxu0 0.0
        %3012 = vmatprep.subr.mxu0 0.0
        %3013 = vmatpush1.xpose.msra.mxu0 0.0
        %3014 = vmatprep.subr.mxu0 0.0
        %3015 = vmatpush1.xpose.msra.mxu0 0.0
        %3016 = vmatprep.subr.mxu0 0.0
        %3017 = vmatpush1.xpose.msra.mxu0 0.0
        %3018 = vmatprep.subr.mxu0 0.0
        %3019 = vmatpush1.xpose.msra.mxu0 0.0
        %3020 = vmatprep.subr.mxu0 0.0
        %3021 = vmatpush1.xpose.msra.mxu0 0.0
        %3022 = vmatprep.subr.mxu0 0.0
        %3023 = vmatpush1.xpose.msra.mxu0 0.0
        %3024 = vmatprep.subr.mxu0 0.0
        %3025 = vmatpush1.xpose.msra.mxu0 0.0
        %3026 = vmatprep.mubr.f32.mxu0 0.0
        %3027 = vmatmul.mubr.f32.gmra.mrb[0].mxu0 %v2958
        %v3028 = vpop.f32.mrb[0].mxu0
        %v3029 = vadd.f32 0.0, %v3028
        %v3030 = vpop.f32.mrb[0].mxu0
        %3031 = vdwg.mxu0
        %v3032 = vmul.f32 %v3029, 0.35355338
        %v3033 = vsel %vm2698, -1e+10, %v3032
        %v3034 = vsel %vm1638, %v3033, -inf
        %3035 = vmax.xlane.f32.xlu0 %v3034
        %v3036 = vpop.xlane.xlu0 %3035
        %v3037 = vsub.f32 %v3033, %v3036
        %v3038 = vmul.f32 %v3037, 1.442695
        %v3039 = vpow.pop %v3038
        %v3040 = vsel %vm1638, %v3039, 0.0
        %3041 = vadd.xlane.f32.xlu0 %v3040
        %v3042 = vpop.xlane.xlu0 %3041
        %v3043 = vrcp.pop %v3042
        %v3044 = vmul.f32 %v3039, %v3043
        %3045 = vrot.lane.b32.xlu0 %v2613, 80
        %v3046 = vpop.permute.xlu0 %3045
        %v3049 = vsel %vm1638, %v3044, 0
        %3051 = vmatprep.subr.mxu0 0.0
        %3052 = vmatpush1.msra.mxu0 %v3046
        %3053 = vmatprep.subr.mxu0 0.0
        %3054 = vmatpush1.msra.mxu0 0.0
        %3055 = vmatprep.subr.mxu0 0.0
        %3056 = vmatpush1.msra.mxu0 0.0
        %3057 = vmatprep.subr.mxu0 0.0
        %3058 = vmatpush1.msra.mxu0 0.0
        %3059 = vmatprep.subr.mxu0 0.0
        %3060 = vmatpush1.msra.mxu0 0.0
        %3061 = vmatprep.subr.mxu0 0.0
        %3062 = vmatpush1.msra.mxu0 0.0
        %3063 = vmatprep.subr.mxu0 0.0
        %3064 = vmatpush1.msra.mxu0 0.0
        %3065 = vmatprep.subr.mxu0 0.0
        %3066 = vmatpush1.msra.mxu0 0.0
        %3067 = vmatprep.subr.mxu0 0.0
        %3068 = vmatpush1.msra.mxu0 0.0
        %3069 = vmatprep.subr.mxu0 0.0
        %3070 = vmatpush1.msra.mxu0 0.0
        %3071 = vmatprep.subr.mxu0 0.0
        %3072 = vmatpush1.msra.mxu0 0.0
        %3073 = vmatprep.subr.mxu0 0.0
        %3074 = vmatpush1.msra.mxu0 0.0
        %3075 = vmatprep.subr.mxu0 0.0
        %3076 = vmatpush1.msra.mxu0 0.0
        %3077 = vmatprep.subr.mxu0 0.0
        %3078 = vmatpush1.msra.mxu0 0.0
        %3079 = vmatprep.subr.mxu0 0.0
        %3080 = vmatpush1.msra.mxu0 0.0
        %3081 = vmatprep.subr.mxu0 0.0
        %3082 = vmatpush1.msra.mxu0 0.0
        %3083 = vmatprep.subr.mxu0 0.0
        %3084 = vmatpush1.msra.mxu0 0.0
        %3085 = vmatprep.subr.mxu0 0.0
        %3086 = vmatpush1.msra.mxu0 0.0
        %3087 = vmatprep.subr.mxu0 0.0
        %3088 = vmatpush1.msra.mxu0 0.0
        %3089 = vmatprep.subr.mxu0 0.0
        %3090 = vmatpush1.msra.mxu0 0.0
        %3091 = vmatprep.subr.mxu0 0.0
        %3092 = vmatpush1.msra.mxu0 0.0
        %3093 = vmatprep.subr.mxu0 0.0
        %3094 = vmatpush1.msra.mxu0 0.0
        %3095 = vmatprep.subr.mxu0 0.0
        %3096 = vmatpush1.msra.mxu0 0.0
        %3097 = vmatprep.subr.mxu0 0.0
        %3098 = vmatpush1.msra.mxu0 0.0
        %3099 = vmatprep.subr.mxu0 0.0
        %3100 = vmatpush1.msra.mxu0 0.0
        %3101 = vmatprep.subr.mxu0 0.0
        %3102 = vmatpush1.msra.mxu0 0.0
        %3103 = vmatprep.subr.mxu0 0.0
        %3104 = vmatpush1.msra.mxu0 0.0
        %3105 = vmatprep.subr.mxu0 0.0
        %3106 = vmatpush1.msra.mxu0 0.0
        %3107 = vmatprep.subr.mxu0 0.0
        %3108 = vmatpush1.msra.mxu0 0.0
        %3109 = vmatprep.subr.mxu0 0.0
        %3110 = vmatpush1.msra.mxu0 0.0
        %3111 = vmatprep.subr.mxu0 0.0
        %3112 = vmatpush1.msra.mxu0 0.0
        %3113 = vmatprep.subr.mxu0 0.0
        %3114 = vmatpush1.msra.mxu0 0.0
        %3115 = vmatprep.mubr.f32.mxu0 0.0
        %3116 = vmatmul.mubr.f32.gmra.mrb[0].mxu0 %v3049
        %v3117 = vpop.f32.mrb[0].mxu0
        %v3118 = vadd.f32 0.0, %v3117
        %v3119 = vpop.f32.mrb[0].mxu0
        %3120 = vdwg.mxu0
        %3121 = vrot.lane.b32.xlu0 %v2529, 104
        %v3122 = vpop.permute.xlu0 %3121
        %3123 = vrot.lane.b32.xlu0 %v2613, 104
        %v3124 = vpop.permute.xlu0 %3123
        %v3125 = vsel %vm1638, %v3122, 0
        %v3127 = vsel %vm1638, %v3124, 0
        %3129 = vmatprep.subr.mxu0 0.0
        %3130 = vmatpush1.xpose.msra.mxu0 %v3127
        %3131 = vmatprep.subr.mxu0 0.0
        %3132 = vmatpush1.xpose.msra.mxu0 0.0
        %3133 = vmatprep.subr.mxu0 0.0
        %3134 = vmatpush1.xpose.msra.mxu0 0.0
        %3135 = vmatprep.subr.mxu0 0.0
        %3136 = vmatpush1.xpose.msra.mxu0 0.0
        %3137 = vmatprep.subr.mxu0 0.0
        %3138 = vmatpush1.xpose.msra.mxu0 0.0
        %3139 = vmatprep.subr.mxu0 0.0
        %3140 = vmatpush1.xpose.msra.mxu0 0.0
        %3141 = vmatprep.subr.mxu0 0.0
        %3142 = vmatpush1.xpose.msra.mxu0 0.0
        %3143 = vmatprep.subr.mxu0 0.0
        %3144 = vmatpush1.xpose.msra.mxu0 0.0
        %3145 = vmatprep.subr.mxu0 0.0
        %3146 = vmatpush1.xpose.msra.mxu0 0.0
        %3147 = vmatprep.subr.mxu0 0.0
        %3148 = vmatpush1.xpose.msra.mxu0 0.0
        %3149 = vmatprep.subr.mxu0 0.0
        %3150 = vmatpush1.xpose.msra.mxu0 0.0
        %3151 = vmatprep.subr.mxu0 0.0
        %3152 = vmatpush1.xpose.msra.mxu0 0.0
        %3153 = vmatprep.subr.mxu0 0.0
        %3154 = vmatpush1.xpose.msra.mxu0 0.0
        %3155 = vmatprep.subr.mxu0 0.0
        %3156 = vmatpush1.xpose.msra.mxu0 0.0
        %3157 = vmatprep.subr.mxu0 0.0
        %3158 = vmatpush1.xpose.msra.mxu0 0.0
        %3159 = vmatprep.subr.mxu0 0.0
        %3160 = vmatpush1.xpose.msra.mxu0 0.0
        %3161 = vmatprep.subr.mxu0 0.0
        %3162 = vmatpush1.xpose.msra.mxu0 0.0
        %3163 = vmatprep.subr.mxu0 0.0
        %3164 = vmatpush1.xpose.msra.mxu0 0.0
        %3165 = vmatprep.subr.mxu0 0.0
        %3166 = vmatpush1.xpose.msra.mxu0 0.0
        %3167 = vmatprep.subr.mxu0 0.0
        %3168 = vmatpush1.xpose.msra.mxu0 0.0
        %3169 = vmatprep.subr.mxu0 0.0
        %3170 = vmatpush1.xpose.msra.mxu0 0.0
        %3171 = vmatprep.subr.mxu0 0.0
        %3172 = vmatpush1.xpose.msra.mxu0 0.0
        %3173 = vmatprep.subr.mxu0 0.0
        %3174 = vmatpush1.xpose.msra.mxu0 0.0
        %3175 = vmatprep.subr.mxu0 0.0
        %3176 = vmatpush1.xpose.msra.mxu0 0.0
        %3177 = vmatprep.subr.mxu0 0.0
        %3178 = vmatpush1.xpose.msra.mxu0 0.0
        %3179 = vmatprep.subr.mxu0 0.0
        %3180 = vmatpush1.xpose.msra.mxu0 0.0
        %3181 = vmatprep.subr.mxu0 0.0
        %3182 = vmatpush1.xpose.msra.mxu0 0.0
        %3183 = vmatprep.subr.mxu0 0.0
        %3184 = vmatpush1.xpose.msra.mxu0 0.0
        %3185 = vmatprep.subr.mxu0 0.0
        %3186 = vmatpush1.xpose.msra.mxu0 0.0
        %3187 = vmatprep.subr.mxu0 0.0
        %3188 = vmatpush1.xpose.msra.mxu0 0.0
        %3189 = vmatprep.subr.mxu0 0.0
        %3190 = vmatpush1.xpose.msra.mxu0 0.0
        %3191 = vmatprep.subr.mxu0 0.0
        %3192 = vmatpush1.xpose.msra.mxu0 0.0
        %3193 = vmatprep.mubr.f32.mxu0 0.0
        %3194 = vmatmul.mubr.f32.gmra.mrb[0].mxu0 %v3125
        %v3195 = vpop.f32.mrb[0].mxu0
        %v3196 = vadd.f32 0.0, %v3195
        %v3197 = vpop.f32.mrb[0].mxu0
        %3198 = vdwg.mxu0
        %v3199 = vmul.f32 %v3196, 0.35355338
        %v3200 = vsel %vm2698, -1e+10, %v3199
        %v3201 = vsel %vm1638, %v3200, -inf
        %3202 = vmax.xlane.f32.xlu0 %v3201
        %v3203 = vpop.xlane.xlu0 %3202
        %v3204 = vsub.f32 %v3200, %v3203
        %v3205 = vmul.f32 %v3204, 1.442695
        %v3206 = vpow.pop %v3205
        %v3207 = vsel %vm1638, %v3206, 0.0
        %3208 = vadd.xlane.f32.xlu0 %v3207
        %v3209 = vpop.xlane.xlu0 %3208
        %v3210 = vrcp.pop %v3209
        %v3211 = vmul.f32 %v3206, %v3210
        %3212 = vrot.lane.b32.xlu0 %v2613, 72
        %v3213 = vpop.permute.xlu0 %3212
        %v3216 = vsel %vm1638, %v3211, 0
        %3218 = vmatprep.subr.mxu0 0.0
        %3219 = vmatpush1.msra.mxu0 %v3213
        %3220 = vmatprep.subr.mxu0 0.0
        %3221 = vmatpush1.msra.mxu0 0.0
        %3222 = vmatprep.subr.mxu0 0.0
        %3223 = vmatpush1.msra.mxu0 0.0
        %3224 = vmatprep.subr.mxu0 0.0
        %3225 = vmatpush1.msra.mxu0 0.0
        %3226 = vmatprep.subr.mxu0 0.0
        %3227 = vmatpush1.msra.mxu0 0.0
        %3228 = vmatprep.subr.mxu0 0.0
        %3229 = vmatpush1.msra.mxu0 0.0
        %3230 = vmatprep.subr.mxu0 0.0
        %3231 = vmatpush1.msra.mxu0 0.0
        %3232 = vmatprep.subr.mxu0 0.0
        %3233 = vmatpush1.msra.mxu0 0.0
        %3234 = vmatprep.subr.mxu0 0.0
        %3235 = vmatpush1.msra.mxu0 0.0
        %3236 = vmatprep.subr.mxu0 0.0
        %3237 = vmatpush1.msra.mxu0 0.0
        %3238 = vmatprep.subr.mxu0 0.0
        %3239 = vmatpush1.msra.mxu0 0.0
        %3240 = vmatprep.subr.mxu0 0.0
        %3241 = vmatpush1.msra.mxu0 0.0
        %3242 = vmatprep.subr.mxu0 0.0
        %3243 = vmatpush1.msra.mxu0 0.0
        %3244 = vmatprep.subr.mxu0 0.0
        %3245 = vmatpush1.msra.mxu0 0.0
        %3246 = vmatprep.subr.mxu0 0.0
        %3247 = vmatpush1.msra.mxu0 0.0
        %3248 = vmatprep.subr.mxu0 0.0
        %3249 = vmatpush1.msra.mxu0 0.0
        %3250 = vmatprep.subr.mxu0 0.0
        %3251 = vmatpush1.msra.mxu0 0.0
        %3252 = vmatprep.subr.mxu0 0.0
        %3253 = vmatpush1.msra.mxu0 0.0
        %3254 = vmatprep.subr.mxu0 0.0
        %3255 = vmatpush1.msra.mxu0 0.0
        %3256 = vmatprep.subr.mxu0 0.0
        %3257 = vmatpush1.msra.mxu0 0.0
        %3258 = vmatprep.subr.mxu0 0.0
        %3259 = vmatpush1.msra.mxu0 0.0
        %3260 = vmatprep.subr.mxu0 0.0
        %3261 = vmatpush1.msra.mxu0 0.0
        %3262 = vmatprep.subr.mxu0 0.0
        %3263 = vmatpush1.msra.mxu0 0.0
        %3264 = vmatprep.subr.mxu0 0.0
        %3265 = vmatpush1.msra.mxu0 0.0
        %3266 = vmatprep.subr.mxu0 0.0
        %3267 = vmatpush1.msra.mxu0 0.0
        %3268 = vmatprep.subr.mxu0 0.0
        %3269 = vmatpush1.msra.mxu0 0.0
        %3270 = vmatprep.subr.mxu0 0.0
        %3271 = vmatpush1.msra.mxu0 0.0
        %3272 = vmatprep.subr.mxu0 0.0
        %3273 = vmatpush1.msra.mxu0 0.0
        %3274 = vmatprep.subr.mxu0 0.0
        %3275 = vmatpush1.msra.mxu0 0.0
        %3276 = vmatprep.subr.mxu0 0.0
        %3277 = vmatpush1.msra.mxu0 0.0
        %3278 = vmatprep.subr.mxu0 0.0
        %3279 = vmatpush1.msra.mxu0 0.0
        %3280 = vmatprep.subr.mxu0 0.0
        %3281 = vmatpush1.msra.mxu0 0.0
        %3282 = vmatprep.mubr.f32.mxu0 0.0
        %3283 = vmatmul.mubr.f32.gmra.mrb[0].mxu0 %v3216
        %v3284 = vpop.f32.mrb[0].mxu0
        %v3285 = vadd.f32 0.0, %v3284
        %v3286 = vpop.f32.mrb[0].mxu0
        %3287 = vdwg.mxu0
        %3289 = vrot.lane.b32.xlu0 %v2951, 8
        %v3290 = vpop.permute.xlu0 %3289
        %3293 = vrot.lane.b32.xlu0 %v3118, 16
        %v3294 = vpop.permute.xlu0 %3293
        %3297 = vrot.lane.b32.xlu0 %v3285, 24
        %v3298 = vpop.permute.xlu0 %3297
        %v3300 = vsel %vm1638, %v2784, %v3290
        %v3301 = vsel %vm2321, %v3300, %v3294
        %v3302 = vsel %vm2323, %v3301, %v3298
        %v3303 = vld [vmem:[%s1412] sm:$0xff]
        %v3304 = vld [vmem:[%s1412 + $0x8] sm:$0xff]
        %v3305 = vld [vmem:[%s1412 + $0x10] sm:$0xff]
        %v3306 = vld [vmem:[%s1412 + $0x18] sm:$0xff]
        %v3307 = vld [vmem:[%s1415] sm:$0x1]
        %v3309 = vlaneseq
        %v3310 = vshrl.u32 %v3309, 7
        %v3311 = vsub.s32 0, %v3310
        %v3312 = vrot.slane %v3307, %v3311
        %v3315 = vsel %vm1561, %v3302, 0
        %3317 = vmatprep.subr.mxu0 0.0
        %3318 = vmatpush1.msra.mxu0 %v3303
        %3319 = vmatprep.subr.mxu0 0.0
        %3320 = vmatpush1.msra.mxu0 %v3304
        %3321 = vmatprep.subr.mxu0 0.0
        %3322 = vmatpush1.msra.mxu0 %v3305
        %3323 = vmatprep.subr.mxu0 0.0
        %3324 = vmatpush1.msra.mxu0 %v3306
        %3325 = vmatprep.subr.mxu0 0.0
        %3326 = vmatpush1.msra.mxu0 0.0
        %3327 = vmatprep.subr.mxu0 0.0
        %3328 = vmatpush1.msra.mxu0 0.0
        %3329 = vmatprep.subr.mxu0 0.0
        %3330 = vmatpush1.msra.mxu0 0.0
        %3331 = vmatprep.subr.mxu0 0.0
        %3332 = vmatpush1.msra.mxu0 0.0
        %3333 = vmatprep.subr.mxu0 0.0
        %3334 = vmatpush1.msra.mxu0 0.0
        %3335 = vmatprep.subr.mxu0 0.0
        %3336 = vmatpush1.msra.mxu0 0.0
        %3337 = vmatprep.subr.mxu0 0.0
        %3338 = vmatpush1.msra.mxu0 0.0
        %3339 = vmatprep.subr.mxu0 0.0
        %3340 = vmatpush1.msra.mxu0 0.0
        %3341 = vmatprep.subr.mxu0 0.0
        %3342 = vmatpush1.msra.mxu0 0.0
        %3343 = vmatprep.subr.mxu0 0.0
        %3344 = vmatpush1.msra.mxu0 0.0
        %3345 = vmatprep.subr.mxu0 0.0
        %3346 = vmatpush1.msra.mxu0 0.0
        %3347 = vmatprep.subr.mxu0 0.0
        %3348 = vmatpush1.msra.mxu0 0.0
        %3349 = vmatprep.subr.mxu0 0.0
        %3350 = vmatpush1.msra.mxu0 0.0
        %3351 = vmatprep.subr.mxu0 0.0
        %3352 = vmatpush1.msra.mxu0 0.0
        %3353 = vmatprep.subr.mxu0 0.0
        %3354 = vmatpush1.msra.mxu0 0.0
        %3355 = vmatprep.subr.mxu0 0.0
        %3356 = vmatpush1.msra.mxu0 0.0
        %3357 = vmatprep.subr.mxu0 0.0
        %3358 = vmatpush1.msra.mxu0 0.0
        %3359 = vmatprep.subr.mxu0 0.0
        %3360 = vmatpush1.msra.mxu0 0.0
        %3361 = vmatprep.subr.mxu0 0.0
        %3362 = vmatpush1.msra.mxu0 0.0
        %3363 = vmatprep.subr.mxu0 0.0
        %3364 = vmatpush1.msra.mxu0 0.0
        %3365 = vmatprep.subr.mxu0 0.0
        %3366 = vmatpush1.msra.mxu0 0.0
        %3367 = vmatprep.subr.mxu0 0.0
        %3368 = vmatpush1.msra.mxu0 0.0
        %3369 = vmatprep.subr.mxu0 0.0
        %3370 = vmatpush1.msra.mxu0 0.0
        %3371 = vmatprep.subr.mxu0 0.0
        %3372 = vmatpush1.msra.mxu0 0.0
        %3373 = vmatprep.subr.mxu0 0.0
        %3374 = vmatpush1.msra.mxu0 0.0
        %3375 = vmatprep.subr.mxu0 0.0
        %3376 = vmatpush1.msra.mxu0 0.0
        %3377 = vmatprep.subr.mxu0 0.0
        %3378 = vmatpush1.msra.mxu0 0.0
        %3379 = vmatprep.subr.mxu0 0.0
        %3380 = vmatpush1.msra.mxu0 0.0
        %3381 = vmatprep.mubr.f32.mxu0 0.0
        %3382 = vmatmul.mubr.f32.gmra.mrb[0].mxu0 %v3315
        %v3383 = vpop.f32.mrb[0].mxu0
        %v3384 = vadd.f32 %v3312, %v3383
        %v3385 = vpop.f32.mrb[0].mxu0
        %3386 = vdwg.mxu0
        %v3387 = vadd.f32 %v2447, %v3384
        %v3388 = vsel %vm1561, %v3387, 0.0
        %3389 = vadd.xlane.f32.xlu0 %v3388
        %v3390 = vpop.xlane.xlu0 %3389
        %v3391 = vmul.f32 %v3390, %v2413
        %v3392 = vsub.f32 %v3387, %v3391
        %v3393 = vmul.f32 %v3392, %v3392
        %v3394 = vsel %vm1561, %v3393, 0.0
        %3395 = vadd.xlane.f32.xlu0 %v3394
        %v3396 = vpop.xlane.xlu0 %3395
        %v3397 = vmul.f32 %v3396, %v2420
        %v3398 = vld [vmem:[%s1424] sm:$0x1]
        %v3399 = vrsqrt.pop %v3397
        %v3400 = vmul.f32 %v3397, %v3399
        %vm3401 = vcmp.eq.f32.partialorder %v3397, inf
        %v3402 = vsel %vm3401, %v3397, %v3400
        %vm3403 = vcmp.eq.f32.partialorder %v3397, 0.0
        %v3404 = vand.u32 %v3397, 2147483648
        %v3405 = vsel %vm3403, %v3404, %v3402
        %v3406 = vadd.f32 %v3405, 1e-12
        %v3407 = vrcp.pop %v3406
        %v3408 = vmul.f32 %v3392, %v3407
        %v3410 = vlaneseq
        %v3411 = vshrl.u32 %v3410, 7
        %v3412 = vsub.s32 0, %v3411
        %v3413 = vrot.slane %v3398, %v3412
        %v3415 = vmul.f32 %v3413, %v3408
        %v3416 = vld [vmem:[%s1427] sm:$0x1]
        %v3418 = vlaneseq
        %v3419 = vshrl.u32 %v3418, 7
        %v3420 = vsub.s32 0, %v3419
        %v3421 = vrot.slane %v3416, %v3420
        %v3423 = vadd.f32 %v3415, %v3421
        %v3424 = vld [vmem:[%s1438] sm:$0xff]
        %v3425 = vld [vmem:[%s1438 + $0x8] sm:$0xff]
        %v3426 = vld [vmem:[%s1438 + $0x10] sm:$0xff]
        %v3427 = vld [vmem:[%s1438 + $0x18] sm:$0xff]
        %v3428 = vld [vmem:[%s1441] sm:$0x1]
        %v3430 = vlaneseq
        %v3431 = vshrl.u32 %v3430, 7
        %v3432 = vsub.s32 0, %v3431
        %v3433 = vrot.slane %v3428, %v3432
        %v3436 = vsel %vm1561, %v3423, 0
        %3438 = vmatprep.subr.mxu0 0.0
        %3439 = vmatpush1.msra.mxu0 %v3424
        %3440 = vmatprep.subr.mxu0 0.0
        %3441 = vmatpush1.msra.mxu0 %v3425
        %3442 = vmatprep.subr.mxu0 0.0
        %3443 = vmatpush1.msra.mxu0 %v3426
        %3444 = vmatprep.subr.mxu0 0.0
        %3445 = vmatpush1.msra.mxu0 %v3427
        %3446 = vmatprep.subr.mxu0 0.0
        %3447 = vmatpush1.msra.mxu0 0.0
        %3448 = vmatprep.subr.mxu0 0.0
        %3449 = vmatpush1.msra.mxu0 0.0
        %3450 = vmatprep.subr.mxu0 0.0
        %3451 = vmatpush1.msra.mxu0 0.0
        %3452 = vmatprep.subr.mxu0 0.0
        %3453 = vmatpush1.msra.mxu0 0.0
        %3454 = vmatprep.subr.mxu0 0.0
        %3455 = vmatpush1.msra.mxu0 0.0
        %3456 = vmatprep.subr.mxu0 0.0
        %3457 = vmatpush1.msra.mxu0 0.0
        %3458 = vmatprep.subr.mxu0 0.0
        %3459 = vmatpush1.msra.mxu0 0.0
        %3460 = vmatprep.subr.mxu0 0.0
        %3461 = vmatpush1.msra.mxu0 0.0
        %3462 = vmatprep.subr.mxu0 0.0
        %3463 = vmatpush1.msra.mxu0 0.0
        %3464 = vmatprep.subr.mxu0 0.0
        %3465 = vmatpush1.msra.mxu0 0.0
        %3466 = vmatprep.subr.mxu0 0.0
        %3467 = vmatpush1.msra.mxu0 0.0
        %3468 = vmatprep.subr.mxu0 0.0
        %3469 = vmatpush1.msra.mxu0 0.0
        %3470 = vmatprep.subr.mxu0 0.0
        %3471 = vmatpush1.msra.mxu0 0.0
        %3472 = vmatprep.subr.mxu0 0.0
        %3473 = vmatpush1.msra.mxu0 0.0
        %3474 = vmatprep.subr.mxu0 0.0
        %3475 = vmatpush1.msra.mxu0 0.0
        %3476 = vmatprep.subr.mxu0 0.0
        %3477 = vmatpush1.msra.mxu0 0.0
        %3478 = vmatprep.subr.mxu0 0.0
        %3479 = vmatpush1.msra.mxu0 0.0
        %3480 = vmatprep.subr.mxu0 0.0
        %3481 = vmatpush1.msra.mxu0 0.0
        %3482 = vmatprep.subr.mxu0 0.0
        %3483 = vmatpush1.msra.mxu0 0.0
        %3484 = vmatprep.subr.mxu0 0.0
        %3485 = vmatpush1.msra.mxu0 0.0
        %3486 = vmatprep.subr.mxu0 0.0
        %3487 = vmatpush1.msra.mxu0 0.0
        %3488 = vmatprep.subr.mxu0 0.0
        %3489 = vmatpush1.msra.mxu0 0.0
        %3490 = vmatprep.subr.mxu0 0.0
        %3491 = vmatpush1.msra.mxu0 0.0
        %3492 = vmatprep.subr.mxu0 0.0
        %3493 = vmatpush1.msra.mxu0 0.0
        %3494 = vmatprep.subr.mxu0 0.0
        %3495 = vmatpush1.msra.mxu0 0.0
        %3496 = vmatprep.subr.mxu0 0.0
        %3497 = vmatpush1.msra.mxu0 0.0
        %3498 = vmatprep.subr.mxu0 0.0
        %3499 = vmatpush1.msra.mxu0 0.0
        %3500 = vmatprep.subr.mxu0 0.0
        %3501 = vmatpush1.msra.mxu0 0.0
        %3502 = vmatprep.mubr.f32.mxu0 0.0
        %3503 = vmatmul.mubr.f32.gmra.mrb[0].mxu0 %v3436
        %v3504 = vpop.f32.mrb[0].mxu0
        %v3505 = vadd.f32 %v3433, %v3504
        %v3506 = vpop.f32.mrb[0].mxu0
        %3507 = vdwg.mxu0
        %v3508 = vmax.f32 %v3505, 0.0
        %v3509 = vld [vmem:[%s1446] sm:$0xff]
        %v3510 = vld [vmem:[%s1446 + $0x8] sm:$0xff]
        %v3511 = vld [vmem:[%s1446 + $0x10] sm:$0xff]
        %v3512 = vld [vmem:[%s1446 + $0x18] sm:$0xff]
        %v3513 = vld [vmem:[%s1446 + $0x20] sm:$0xff]
        %v3514 = vld [vmem:[%s1446 + $0x28] sm:$0xff]
        %v3515 = vld [vmem:[%s1446 + $0x30] sm:$0xff]
        %v3516 = vld [vmem:[%s1446 + $0x38] sm:$0xff]
        %v3517 = vld [vmem:[%s1449] sm:$0x1]
        %v3519 = vlaneseq
        %v3520 = vshrl.u32 %v3519, 7
        %v3521 = vsub.s32 0, %v3520
        %v3522 = vrot.slane %v3517, %v3521
        %vm3524 = vcmask 523264
        %v3526 = vsel %vm3524, %v3508, 0
        %3528 = vmatprep.subr.mxu0 0.0
        %3529 = vmatpush1.msra.mxu0 %v3509
        %3530 = vmatprep.subr.mxu0 0.0
        %3531 = vmatpush1.msra.mxu0 %v3510
        %3532 = vmatprep.subr.mxu0 0.0
        %3533 = vmatpush1.msra.mxu0 %v3511
        %3534 = vmatprep.subr.mxu0 0.0
        %3535 = vmatpush1.msra.mxu0 %v3512
        %3536 = vmatprep.subr.mxu0 0.0
        %3537 = vmatpush1.msra.mxu0 %v3513
        %3538 = vmatprep.subr.mxu0 0.0
        %3539 = vmatpush1.msra.mxu0 %v3514
        %3540 = vmatprep.subr.mxu0 0.0
        %3541 = vmatpush1.msra.mxu0 %v3515
        %3542 = vmatprep.subr.mxu0 0.0
        %3543 = vmatpush1.msra.mxu0 %v3516
        %3544 = vmatprep.subr.mxu0 0.0
        %3545 = vmatpush1.msra.mxu0 0.0
        %3546 = vmatprep.subr.mxu0 0.0
        %3547 = vmatpush1.msra.mxu0 0.0
        %3548 = vmatprep.subr.mxu0 0.0
        %3549 = vmatpush1.msra.mxu0 0.0
        %3550 = vmatprep.subr.mxu0 0.0
        %3551 = vmatpush1.msra.mxu0 0.0
        %3552 = vmatprep.subr.mxu0 0.0
        %3553 = vmatpush1.msra.mxu0 0.0
        %3554 = vmatprep.subr.mxu0 0.0
        %3555 = vmatpush1.msra.mxu0 0.0
        %3556 = vmatprep.subr.mxu0 0.0
        %3557 = vmatpush1.msra.mxu0 0.0
        %3558 = vmatprep.subr.mxu0 0.0
        %3559 = vmatpush1.msra.mxu0 0.0
        %3560 = vmatprep.subr.mxu0 0.0
        %3561 = vmatpush1.msra.mxu0 0.0
        %3562 = vmatprep.subr.mxu0 0.0
        %3563 = vmatpush1.msra.mxu0 0.0
        %3564 = vmatprep.subr.mxu0 0.0
        %3565 = vmatpush1.msra.mxu0 0.0
        %3566 = vmatprep.subr.mxu0 0.0
        %3567 = vmatpush1.msra.mxu0 0.0
        %3568 = vmatprep.subr.mxu0 0.0
        %3569 = vmatpush1.msra.mxu0 0.0
        %3570 = vmatprep.subr.mxu0 0.0
        %3571 = vmatpush1.msra.mxu0 0.0
        %3572 = vmatprep.subr.mxu0 0.0
        %3573 = vmatpush1.msra.mxu0 0.0
        %3574 = vmatprep.subr.mxu0 0.0
        %3575 = vmatpush1.msra.mxu0 0.0
        %3576 = vmatprep.subr.mxu0 0.0
        %3577 = vmatpush1.msra.mxu0 0.0
        %3578 = vmatprep.subr.mxu0 0.0
        %3579 = vmatpush1.msra.mxu0 0.0
        %3580 = vmatprep.subr.mxu0 0.0
        %3581 = vmatpush1.msra.mxu0 0.0
        %3582 = vmatprep.subr.mxu0 0.0
        %3583 = vmatpush1.msra.mxu0 0.0
        %3584 = vmatprep.subr.mxu0 0.0
        %3585 = vmatpush1.msra.mxu0 0.0
        %3586 = vmatprep.subr.mxu0 0.0
        %3587 = vmatpush1.msra.mxu0 0.0
        %3588 = vmatprep.subr.mxu0 0.0
        %3589 = vmatpush1.msra.mxu0 0.0
        %3590 = vmatprep.subr.mxu0 0.0
        %3591 = vmatpush1.msra.mxu0 0.0
        %3592 = vmatprep.mubr.f32.mxu0 0.0
        %3593 = vmatmul.mubr.f32.gmra.mrb[0].mxu0 %v3526
        %v3594 = vpop.f32.mrb[0].mxu0
        %v3595 = vadd.f32 %v3522, %v3594
        %v3596 = vpop.f32.mrb[0].mxu0
        %3597 = vdwg.mxu0
        %v3598 = vadd.f32 %v3423, %v3595
        %v3599 = vsel %vm1561, %v3598, 0.0
        %3600 = vadd.xlane.f32.xlu0 %v3599
        %v3601 = vpop.xlane.xlu0 %3600
        %v3602 = vmul.f32 %v3601, %v2413
        %v3603 = vsub.f32 %v3598, %v3602
        %v3604 = vmul.f32 %v3603, %v3603
        %v3605 = vsel %vm1561, %v3604, 0.0
        %3606 = vadd.xlane.f32.xlu0 %v3605
        %v3607 = vpop.xlane.xlu0 %3606
        %v3608 = vmul.f32 %v3607, %v2420
        %v3609 = vld [vmem:[%s1430] sm:$0x1]
        %v3610 = vrsqrt.pop %v3608
        %v3611 = vmul.f32 %v3608, %v3610
        %vm3612 = vcmp.eq.f32.partialorder %v3608, inf
        %v3613 = vsel %vm3612, %v3608, %v3611
        %vm3614 = vcmp.eq.f32.partialorder %v3608, 0.0
        %v3615 = vand.u32 %v3608, 2147483648
        %v3616 = vsel %vm3614, %v3615, %v3613
        %v3617 = vadd.f32 %v3616, 1e-12
        %v3618 = vrcp.pop %v3617
        %v3619 = vmul.f32 %v3603, %v3618
        %v3621 = vlaneseq
        %v3622 = vshrl.u32 %v3621, 7
        %v3623 = vsub.s32 0, %v3622
        %v3624 = vrot.slane %v3609, %v3623
        %v3626 = vmul.f32 %v3624, %v3619
        %v3627 = vld [vmem:[%s1433] sm:$0x1]
        %v3629 = vlaneseq
        %v3630 = vshrl.u32 %v3629, 7
        %v3631 = vsub.s32 0, %v3630
        %v3632 = vrot.slane %v3627, %v3631
        %v3634 = vadd.f32 %v3626, %v3632
        %3635 = vst.msk [vmem:[#allocation2] sm:$0xff] %vm1561, %v3634
        %p3636 = scmp.eq.s32.totalorder %s91, 1
        // Predicated region
        $region169: #{tpu_custom_call.1} parent=155 // pred_check
          %p3637 = pneg %p3636
        $region170: #{tpu_custom_call.1} parent=155 // pred_check_branch
          %3639 = sbr.rel (%p3637) target = $region172
        $region171: #{tpu_custom_call.1} parent=155 // pred_region
          %3641 = vset.pattern.permute.xlu0 0
          %3642 = vperm.xlu0 %3641, %v1546
          %v3643 = vpop.permute.xlu0 %3642
          %v3645 = vmul.f32 %v3634, %v3643
          %v3646 = vsel %vm1561, %v3645, 0.0
          %v3647 = vrot.slane %v3646, 4
          %v3648 = vadd.f32 %v3646, %v3647
          %v3649 = vrot.slane %v3648, 2
          %v3650 = vadd.f32 %v3648, %v3649
          %v3651 = vrot.slane %v3650, 1
          %v3652 = vadd.f32 %v3650, %v3651
          %vm3653 = vcmask 7168
          %v3654 = vsel %vm3653, %v1546, 0.0
          %v3655 = vrot.slane %v3654, 4
          %v3656 = vadd.f32 %v3654, %v3655
          %v3657 = vrot.slane %v3656, 2
          %v3658 = vadd.f32 %v3656, %v3657
          %v3659 = vrot.slane %v3658, 1
          %v3660 = vadd.f32 %v3658, %v3659
          %3662 = vset.pattern.permute.xlu0 0
          %3663 = vperm.xlu0 %3662, %v3660
          %v3664 = vpop.permute.xlu0 %3663
          %v3666 = vrcp.pop %v3664
          %v3667 = vmul.f32 %v3652, %v3666
          %v3668 = vld [vmem:[%s53] sm:$0xff]
          %v3669 = vld [vmem:[%s53 + $0x8] sm:$0xff]
          %v3670 = vld [vmem:[%s53 + $0x10] sm:$0xff]
          %v3671 = vld [vmem:[%s53 + $0x18] sm:$0xff]
          %v3672 = vld [vmem:[%s53 + $0x20] sm:$0xff]
          %v3673 = vld [vmem:[%s53 + $0x28] sm:$0xff]
          %v3674 = vld [vmem:[%s53 + $0x30] sm:$0xff]
          %v3675 = vld [vmem:[%s53 + $0x38] sm:$0xff]
          %v3676 = vld [vmem:[%s55] sm:$0x3]
          %v3678 = vlaneseq
          %v3679 = vshrl.u32 %v3678, 7
          %v3680 = vsub.s32 0, %v3679
          %v3681 = vrot.slane %v3676, %v3680
          %v3682 = vlaneseq
          %v3683 = vshrl.u32 %v3682, 7
          %v3684 = vsub.s32 1, %v3683
          %v3685 = vrot.slane %v3676, %v3684
          %v3689 = vsel %vm1561, %v3667, 0
          %3691 = vmatprep.subr.mxu0 %v3669
          %3692 = vmatpush1.msra.mxu0 %v3668
          %3693 = vmatprep.subr.mxu0 %v3671
          %3694 = vmatpush1.msra.mxu0 %v3670
          %3695 = vmatprep.subr.mxu0 %v3673
          %3696 = vmatpush1.msra.mxu0 %v3672
          %3697 = vmatprep.subr.mxu0 %v3675
          %3698 = vmatpush1.msra.mxu0 %v3674
          %3699 = vmatprep.subr.mxu0 0.0
          %3700 = vmatpush1.msra.mxu0 0.0
          %3701 = vmatprep.subr.mxu0 0.0
          %3702 = vmatpush1.msra.mxu0 0.0
          %3703 = vmatprep.subr.mxu0 0.0
          %3704 = vmatpush1.msra.mxu0 0.0
          %3705 = vmatprep.subr.mxu0 0.0
          %3706 = vmatpush1.msra.mxu0 0.0
          %3707 = vmatprep.subr.mxu0 0.0
          %3708 = vmatpush1.msra.mxu0 0.0
          %3709 = vmatprep.subr.mxu0 0.0
          %3710 = vmatpush1.msra.mxu0 0.0
          %3711 = vmatprep.subr.mxu0 0.0
          %3712 = vmatpush1.msra.mxu0 0.0
          %3713 = vmatprep.subr.mxu0 0.0
          %3714 = vmatpush1.msra.mxu0 0.0
          %3715 = vmatprep.subr.mxu0 0.0
          %3716 = vmatpush1.msra.mxu0 0.0
          %3717 = vmatprep.subr.mxu0 0.0
          %3718 = vmatpush1.msra.mxu0 0.0
          %3719 = vmatprep.subr.mxu0 0.0
          %3720 = vmatpush1.msra.mxu0 0.0
          %3721 = vmatprep.subr.mxu0 0.0
          %3722 = vmatpush1.msra.mxu0 0.0
          %3723 = vmatprep.subr.mxu0 0.0
          %3724 = vmatpush1.msra.mxu0 0.0
          %3725 = vmatprep.subr.mxu0 0.0
          %3726 = vmatpush1.msra.mxu0 0.0
          %3727 = vmatprep.subr.mxu0 0.0
          %3728 = vmatpush1.msra.mxu0 0.0
          %3729 = vmatprep.subr.mxu0 0.0
          %3730 = vmatpush1.msra.mxu0 0.0
          %3731 = vmatprep.subr.mxu0 0.0
          %3732 = vmatpush1.msra.mxu0 0.0
          %3733 = vmatprep.subr.mxu0 0.0
          %3734 = vmatpush1.msra.mxu0 0.0
          %3735 = vmatprep.subr.mxu0 0.0
          %3736 = vmatpush1.msra.mxu0 0.0
          %3737 = vmatprep.subr.mxu0 0.0
          %3738 = vmatpush1.msra.mxu0 0.0
          %3739 = vmatprep.subr.mxu0 0.0
          %3740 = vmatpush1.msra.mxu0 0.0
          %3741 = vmatprep.subr.mxu0 0.0
          %3742 = vmatpush1.msra.mxu0 0.0
          %3743 = vmatprep.subr.mxu0 0.0
          %3744 = vmatpush1.msra.mxu0 0.0
          %3745 = vmatprep.subr.mxu0 0.0
          %3746 = vmatpush1.msra.mxu0 0.0
          %3747 = vmatprep.subr.mxu0 0.0
          %3748 = vmatpush1.msra.mxu0 0.0
          %3749 = vmatprep.subr.mxu0 0.0
          %3750 = vmatpush1.msra.mxu0 0.0
          %3751 = vmatprep.subr.mxu0 0.0
          %3752 = vmatpush1.msra.mxu0 0.0
          %3753 = vmatprep.subr.mxu0 0.0
          %3754 = vmatpush1.msra.mxu0 0.0
          %3755 = vmatprep.mubr.f32.mxu0 0.0
          %3756 = vmatmul.mubr.f32.gmra.mrb[0].mxu0 %v3689
          %v3757 = vpop.f32.mrb[0].mxu0
          %v3758 = vadd.f32 %v3681, %v3757
          %v3759 = vpop.f32.mrb[0].mxu0
          %v3760 = vadd.f32 %v3685, %v3759
          %3761 = vdwg.mxu0
          %v3762 = vmax.f32 %v3758, 0.0
          %v3763 = vmax.f32 %v3760, 0.0
          %v3764 = vld [vmem:[%s57] sm:$0xff]
          %v3765 = vld [vmem:[%s57 + $0x8] sm:$0xff]
          %v3766 = vld [vmem:[%s57 + $0x10] sm:$0xff]
          %v3767 = vld [vmem:[%s57 + $0x18] sm:$0xff]
          %v3768 = vld [vmem:[%s57 + $0x20] sm:$0xff]
          %v3769 = vld [vmem:[%s57 + $0x28] sm:$0xff]
          %v3770 = vld [vmem:[%s57 + $0x30] sm:$0xff]
          %v3771 = vld [vmem:[%s57 + $0x38] sm:$0xff]
          %v3772 = vld [vmem:[%s57 + $0x40] sm:$0xff]
          %v3773 = vld [vmem:[%s57 + $0x48] sm:$0xff]
          %v3774 = vld [vmem:[%s57 + $0x50] sm:$0xff]
          %v3775 = vld [vmem:[%s57 + $0x58] sm:$0xff]
          %v3776 = vld [vmem:[%s57 + $0x60] sm:$0xff]
          %v3777 = vld [vmem:[%s57 + $0x68] sm:$0xff]
          %v3778 = vld [vmem:[%s57 + $0x70] sm:$0xff]
          %v3779 = vld [vmem:[%s57 + $0x78] sm:$0xff]
          %v3780 = vld [vmem:[%s57 + $0x80] sm:$0xff]
          %v3781 = vld [vmem:[%s57 + $0x88] sm:$0xff]
          %v3782 = vld [vmem:[%s57 + $0x90] sm:$0xff]
          %v3783 = vld [vmem:[%s57 + $0x98] sm:$0xff]
          %v3784 = vld [vmem:[%s57 + $0xa0] sm:$0xff]
          %v3785 = vld [vmem:[%s57 + $0xa8] sm:$0xff]
          %v3786 = vld [vmem:[%s57 + $0xb0] sm:$0xff]
          %v3787 = vld [vmem:[%s57 + $0xb8] sm:$0xff]
          %v3788 = vld [vmem:[%s57 + $0xc0] sm:$0xff]
          %v3789 = vld [vmem:[%s57 + $0xc8] sm:$0xff]
          %v3790 = vld [vmem:[%s57 + $0xd0] sm:$0xff]
          %v3791 = vld [vmem:[%s57 + $0xd8] sm:$0xff]
          %v3792 = vld [vmem:[%s57 + $0xe0] sm:$0xff]
          %v3793 = vld [vmem:[%s57 + $0xe8] sm:$0xff]
          %v3794 = vld [vmem:[%s57 + $0xf0] sm:$0xff]
          %v3795 = vld [vmem:[%s57 + $0xf8] sm:$0xff]
          %v3796 = vld [vmem:[%s59] sm:$0x1]
          %3797 = vmatprep.subr.mxu0 0.0
          %3798 = vmatpush1.msra.mxu0 %v3764
          %3799 = vmatprep.subr.mxu0 0.0
          %3800 = vmatpush1.msra.mxu0 %v3765
          %3801 = vmatprep.subr.mxu0 0.0
          %3802 = vmatpush1.msra.mxu0 %v3766
          %3803 = vmatprep.subr.mxu0 0.0
          %3804 = vmatpush1.msra.mxu0 %v3767
          %3805 = vmatprep.subr.mxu0 0.0
          %3806 = vmatpush1.msra.mxu0 %v3768
          %3807 = vmatprep.subr.mxu0 0.0
          %3808 = vmatpush1.msra.mxu0 %v3769
          %3809 = vmatprep.subr.mxu0 0.0
          %3810 = vmatpush1.msra.mxu0 %v3770
          %3811 = vmatprep.subr.mxu0 0.0
          %3812 = vmatpush1.msra.mxu0 %v3771
          %3813 = vmatprep.subr.mxu0 0.0
          %3814 = vmatpush1.msra.mxu0 %v3772
          %3815 = vmatprep.subr.mxu0 0.0
          %3816 = vmatpush1.msra.mxu0 %v3773
          %3817 = vmatprep.subr.mxu0 0.0
          %3818 = vmatpush1.msra.mxu0 %v3774
          %3819 = vmatprep.subr.mxu0 0.0
          %3820 = vmatpush1.msra.mxu0 %v3775
          %3821 = vmatprep.subr.mxu0 0.0
          %3822 = vmatpush1.msra.mxu0 %v3776
          %3823 = vmatprep.subr.mxu0 0.0
          %3824 = vmatpush1.msra.mxu0 %v3777
          %3825 = vmatprep.subr.mxu0 0.0
          %3826 = vmatpush1.msra.mxu0 %v3778
          %3827 = vmatprep.subr.mxu0 0.0
          %3828 = vmatpush1.msra.mxu0 %v3779
          %3829 = vmatprep.subr.mxu0 0.0
          %3830 = vmatpush1.msra.mxu0 %v3780
          %3831 = vmatprep.subr.mxu0 0.0
          %3832 = vmatpush1.msra.mxu0 %v3781
          %3833 = vmatprep.subr.mxu0 0.0
          %3834 = vmatpush1.msra.mxu0 %v3782
          %3835 = vmatprep.subr.mxu0 0.0
          %3836 = vmatpush1.msra.mxu0 %v3783
          %3837 = vmatprep.subr.mxu0 0.0
          %3838 = vmatpush1.msra.mxu0 %v3784
          %3839 = vmatprep.subr.mxu0 0.0
          %3840 = vmatpush1.msra.mxu0 %v3785
          %3841 = vmatprep.subr.mxu0 0.0
          %3842 = vmatpush1.msra.mxu0 %v3786
          %3843 = vmatprep.subr.mxu0 0.0
          %3844 = vmatpush1.msra.mxu0 %v3787
          %3845 = vmatprep.subr.mxu0 0.0
          %3846 = vmatpush1.msra.mxu0 %v3788
          %3847 = vmatprep.subr.mxu0 0.0
          %3848 = vmatpush1.msra.mxu0 %v3789
          %3849 = vmatprep.subr.mxu0 0.0
          %3850 = vmatpush1.msra.mxu0 %v3790
          %3851 = vmatprep.subr.mxu0 0.0
          %3852 = vmatpush1.msra.mxu0 %v3791
          %3853 = vmatprep.subr.mxu0 0.0
          %3854 = vmatpush1.msra.mxu0 %v3792
          %3855 = vmatprep.subr.mxu0 0.0
          %3856 = vmatpush1.msra.mxu0 %v3793
          %3857 = vmatprep.subr.mxu0 0.0
          %3858 = vmatpush1.msra.mxu0 %v3794
          %3859 = vmatprep.subr.mxu0 0.0
          %3860 = vmatpush1.msra.mxu0 %v3795
          %3861 = vmatprep.mubr.f32.mxu0 %v3763
          %3862 = vmatmul.mubr.f32.gmra.mrb[0].mxu0 %v3762
          %v3863 = vpop.f32.mrb[0].mxu0
          %v3864 = vadd.f32 %v3796, %v3863
          %v3865 = vpop.f32.mrb[0].mxu0
          %3866 = vdwg.mxu0
          %v3867 = vmax.f32 %v3864, 0.0
          %v3868 = vld [vmem:[%s61] sm:$0xff]
          %v3869 = vld [vmem:[%s61 + $0x8] sm:$0xff]
          %v3870 = vld [vmem:[%s61 + $0x10] sm:$0xff]
          %v3871 = vld [vmem:[%s61 + $0x18] sm:$0xff]
          %v3872 = vld [vmem:[%s61 + $0x20] sm:$0xff]
          %v3873 = vld [vmem:[%s61 + $0x28] sm:$0xff]
          %v3874 = vld [vmem:[%s61 + $0x30] sm:$0xff]
          %v3875 = vld [vmem:[%s61 + $0x38] sm:$0xff]
          %v3876 = vld [vmem:[%s63] sm:$0x1]
          %v3878 = vsel %vm3524, %v3867, 0
          %3880 = vmatprep.subr.mxu0 0.0
          %3881 = vmatpush1.msra.mxu0 %v3868
          %3882 = vmatprep.subr.mxu0 0.0
          %3883 = vmatpush1.msra.mxu0 %v3869
          %3884 = vmatprep.subr.mxu0 0.0
          %3885 = vmatpush1.msra.mxu0 %v3870
          %3886 = vmatprep.subr.mxu0 0.0
          %3887 = vmatpush1.msra.mxu0 %v3871
          %3888 = vmatprep.subr.mxu0 0.0
          %3889 = vmatpush1.msra.mxu0 %v3872
          %3890 = vmatprep.subr.mxu0 0.0
          %3891 = vmatpush1.msra.mxu0 %v3873
          %3892 = vmatprep.subr.mxu0 0.0
          %3893 = vmatpush1.msra.mxu0 %v3874
          %3894 = vmatprep.subr.mxu0 0.0
          %3895 = vmatpush1.msra.mxu0 %v3875
          %3896 = vmatprep.subr.mxu0 0.0
          %3897 = vmatpush1.msra.mxu0 0.0
          %3898 = vmatprep.subr.mxu0 0.0
          %3899 = vmatpush1.msra.mxu0 0.0
          %3900 = vmatprep.subr.mxu0 0.0
          %3901 = vmatpush1.msra.mxu0 0.0
          %3902 = vmatprep.subr.mxu0 0.0
          %3903 = vmatpush1.msra.mxu0 0.0
          %3904 = vmatprep.subr.mxu0 0.0
          %3905 = vmatpush1.msra.mxu0 0.0
          %3906 = vmatprep.subr.mxu0 0.0
          %3907 = vmatpush1.msra.mxu0 0.0
          %3908 = vmatprep.subr.mxu0 0.0
          %3909 = vmatpush1.msra.mxu0 0.0
          %3910 = vmatprep.subr.mxu0 0.0
          %3911 = vmatpush1.msra.mxu0 0.0
          %3912 = vmatprep.subr.mxu0 0.0
          %3913 = vmatpush1.msra.mxu0 0.0
          %3914 = vmatprep.subr.mxu0 0.0
          %3915 = vmatpush1.msra.mxu0 0.0
          %3916 = vmatprep.subr.mxu0 0.0
          %3917 = vmatpush1.msra.mxu0 0.0
          %3918 = vmatprep.subr.mxu0 0.0
          %3919 = vmatpush1.msra.mxu0 0.0
          %3920 = vmatprep.subr.mxu0 0.0
          %3921 = vmatpush1.msra.mxu0 0.0
          %3922 = vmatprep.subr.mxu0 0.0
          %3923 = vmatpush1.msra.mxu0 0.0
          %3924 = vmatprep.subr.mxu0 0.0
          %3925 = vmatpush1.msra.mxu0 0.0
          %3926 = vmatprep.subr.mxu0 0.0
          %3927 = vmatpush1.msra.mxu0 0.0
          %3928 = vmatprep.subr.mxu0 0.0
          %3929 = vmatpush1.msra.mxu0 0.0
          %3930 = vmatprep.subr.mxu0 0.0
          %3931 = vmatpush1.msra.mxu0 0.0
          %3932 = vmatprep.subr.mxu0 0.0
          %3933 = vmatpush1.msra.mxu0 0.0
          %3934 = vmatprep.subr.mxu0 0.0
          %3935 = vmatpush1.msra.mxu0 0.0
          %3936 = vmatprep.subr.mxu0 0.0
          %3937 = vmatpush1.msra.mxu0 0.0
          %3938 = vmatprep.subr.mxu0 0.0
          %3939 = vmatpush1.msra.mxu0 0.0
          %3940 = vmatprep.subr.mxu0 0.0
          %3941 = vmatpush1.msra.mxu0 0.0
          %3942 = vmatprep.subr.mxu0 0.0
          %3943 = vmatpush1.msra.mxu0 0.0
          %3944 = vmatprep.mubr.f32.mxu0 0.0
          %3945 = vmatmul.mubr.f32.gmra.mrb[0].mxu0 %v3878
          %v3946 = vpop.f32.mrb[0].mxu0
          %v3947 = vadd.f32 %v3876, %v3946
          %v3948 = vpop.f32.mrb[0].mxu0
          %3949 = vdwg.mxu0
          %v3950 = vmax.f32 %v3947, 0.0
          %v3951 = vld [vmem:[%s65] sm:$0xff]
          %v3952 = vld [vmem:[%s65 + $0x8] sm:$0xff]
          %v3953 = vld [vmem:[%s65 + $0x10] sm:$0xff]
          %v3954 = vld [vmem:[%s65 + $0x18] sm:$0xff]
          %v3955 = vld [vmem:[#allocation3] sm:$0x1]
          %v3957 = vsel %vm1561, %v3950, 0
          %3959 = vmatprep.subr.mxu0 0.0
          %3960 = vmatpush1.msra.mxu0 %v3951
          %3961 = vmatprep.subr.mxu0 0.0
          %3962 = vmatpush1.msra.mxu0 %v3952
          %3963 = vmatprep.subr.mxu0 0.0
          %3964 = vmatpush1.msra.mxu0 %v3953
          %3965 = vmatprep.subr.mxu0 0.0
          %3966 = vmatpush1.msra.mxu0 %v3954
          %3967 = vmatprep.subr.mxu0 0.0
          %3968 = vmatpush1.msra.mxu0 0.0
          %3969 = vmatprep.subr.mxu0 0.0
          %3970 = vmatpush1.msra.mxu0 0.0
          %3971 = vmatprep.subr.mxu0 0.0
          %3972 = vmatpush1.msra.mxu0 0.0
          %3973 = vmatprep.subr.mxu0 0.0
          %3974 = vmatpush1.msra.mxu0 0.0
          %3975 = vmatprep.subr.mxu0 0.0
          %3976 = vmatpush1.msra.mxu0 0.0
          %3977 = vmatprep.subr.mxu0 0.0
          %3978 = vmatpush1.msra.mxu0 0.0
          %3979 = vmatprep.subr.mxu0 0.0
          %3980 = vmatpush1.msra.mxu0 0.0
          %3981 = vmatprep.subr.mxu0 0.0
          %3982 = vmatpush1.msra.mxu0 0.0
          %3983 = vmatprep.subr.mxu0 0.0
          %3984 = vmatpush1.msra.mxu0 0.0
          %3985 = vmatprep.subr.mxu0 0.0
          %3986 = vmatpush1.msra.mxu0 0.0
          %3987 = vmatprep.subr.mxu0 0.0
          %3988 = vmatpush1.msra.mxu0 0.0
          %3989 = vmatprep.subr.mxu0 0.0
          %3990 = vmatpush1.msra.mxu0 0.0
          %3991 = vmatprep.subr.mxu0 0.0
          %3992 = vmatpush1.msra.mxu0 0.0
          %3993 = vmatprep.subr.mxu0 0.0
          %3994 = vmatpush1.msra.mxu0 0.0
          %3995 = vmatprep.subr.mxu0 0.0
          %3996 = vmatpush1.msra.mxu0 0.0
          %3997 = vmatprep.subr.mxu0 0.0
          %3998 = vmatpush1.msra.mxu0 0.0
          %3999 = vmatprep.subr.mxu0 0.0
          %4000 = vmatpush1.msra.mxu0 0.0
          %4001 = vmatprep.subr.mxu0 0.0
          %4002 = vmatpush1.msra.mxu0 0.0
          %4003 = vmatprep.subr.mxu0 0.0
          %4004 = vmatpush1.msra.mxu0 0.0
          %4005 = vmatprep.subr.mxu0 0.0
          %4006 = vmatpush1.msra.mxu0 0.0
          %4007 = vmatprep.subr.mxu0 0.0
          %4008 = vmatpush1.msra.mxu0 0.0
          %4009 = vmatprep.subr.mxu0 0.0
          %4010 = vmatpush1.msra.mxu0 0.0
          %4011 = vmatprep.subr.mxu0 0.0
          %4012 = vmatpush1.msra.mxu0 0.0
          %4013 = vmatprep.subr.mxu0 0.0
          %4014 = vmatpush1.msra.mxu0 0.0
          %4015 = vmatprep.subr.mxu0 0.0
          %4016 = vmatpush1.msra.mxu0 0.0
          %4017 = vmatprep.subr.mxu0 0.0
          %4018 = vmatpush1.msra.mxu0 0.0
          %4019 = vmatprep.subr.mxu0 0.0
          %4020 = vmatpush1.msra.mxu0 0.0
          %4021 = vmatprep.subr.mxu0 0.0
          %4022 = vmatpush1.msra.mxu0 0.0
          %4023 = vmatprep.mubr.f32.mxu0 0.0
          %4024 = vmatmul.mubr.f32.gmra.mrb[0].mxu0 %v3957
          %v4025 = vpop.f32.mrb[0].mxu0
          %v4026 = vadd.f32 %v3955, %v4025
          %v4027 = vpop.f32.mrb[0].mxu0
          %4028 = vdwg.mxu0
          %vm4029 = vcmask 0
          %4030 = vst.msk [vmem:[%s1452] sm:$0x1] %vm4029, %v4026
        $region172: #{tpu_custom_call.1} parent=155 // pred_fallthru
          _
        %p4031 = scmp.lt.s32.totalorder %s90, 1
        %s4032 = scalar_select %p4031, %s90, 1
        %s4033 = scalar_lea.vmem %s69, %s4032
        // Predicated region
        $region173: #{tpu_custom_call.1} parent=155 // pred_check
          %p4034 = pneg %p950
        $region174: #{tpu_custom_call.1} parent=155 // pred_check_branch
          %4036 = sbr.rel (%p4034) target = $region176
        $region175: #{tpu_custom_call.1} parent=155 // pred_region
          _
        $region176: #{tpu_custom_call.1} parent=155 // pred_fallthru
          _
      $region156: #{tpu_custom_call.1} parent=5 // pred_fallthru
        _
      %p4037 = scmp.le.s32.totalorder 2, %s81
      // Predicated region
      $region177: #{tpu_custom_call.1} parent=5 // pred_check
        %p4038 = pneg %p4037
      $region178: #{tpu_custom_call.1} parent=5 // pred_check_branch
        %4040 = sbr.rel (%p4038) target = $region180
      $region179: #{tpu_custom_call.1} parent=5 // pred_region
        %s4041 = ssub.s32 %s81, 2
        // Predicated region
        $region181: #{tpu_custom_call.1} parent=179 // pred_check
          %p4042 = pneg %p956
        $region182: #{tpu_custom_call.1} parent=179 // pred_check_branch
          %4044 = sbr.rel (%p4042) target = $region184
        $region183: #{tpu_custom_call.1} parent=179 // pred_region
          %p4045 = scmp.lt.s32.totalorder %s92, 1
          %s4046 = scalar_select %p4045, %s92, 1
          %s4047 = scalar_lea.vmem %s69, %s4046
        $region184: #{tpu_custom_call.1} parent=179 // pred_fallthru
          _
      $region180: #{tpu_custom_call.1} parent=5 // pred_fallthru
        _
    $region6: #{tpu_custom_call.1} parent=1 // loop_footer
      %s85 = sadd.s32 1, %s81
    $region7: #{tpu_custom_call.1} parent=1 // loop_footer_branch
      %80 = sbr.rel target = $region3
    $region8: #{tpu_custom_call.1} parent=1 // loop_exit
      _
    %4048 = vsyncpa [#allocation5], 1
    %s4049 = scalar_lea.sflag [#allocation5], 1
    %4050 = vsyncpa %s4049, 1
    %4051 = vsyncpa [#allocation7], 1

</llo_original>
